<compile_context>
chip_gen: v7x
topology: tpu7x:2x2x1
jax: 0.10.0
libtpu: 0.0.40
codegen_flags: <defaults>
</compile_context>

<pallas_src>
import functools

import jax
import jax.numpy as jnp
from jax.experimental import pallas as pl
from jax.experimental.pallas import tpu as pltpu

C_FEAT = 512      # resnet18 backbone out_features (get_backbone_out_features)
EMBED = 64        # embedding_size
E_PAD = 128       # embedding padded to a full lane width for unmasked stores


def siamese_head_kernel(x1_ref, x2_ref, w_ref, b_ref, o1_ref, o2_ref, *acc_refs,
                        n_k):
    # x*_ref: (tile_n, tile_k)   w_ref: (tile_k, E_PAD)   b_ref: (1, E_PAD) f32
    # o*_ref: (tile_n, E_PAD)    acc_refs: 2 x (tile_n, E_PAD) f32 (only if n_k > 1)
    #
    # TODO(synk): nn.Dropout(p=0.5) is identity in eval mode; stochastic
    # training-mode dropout (with 1/(1-p) scaling) is intentionally omitted.
    if n_k == 1:
        # Whole contraction in one block: no scratch round-trip, no predication.
        e1 = jnp.dot(x1_ref[...], w_ref[...], preferred_element_type=jnp.float32)
        e2 = jnp.dot(x2_ref[...], w_ref[...], preferred_element_type=jnp.float32)
        o1_ref[...] = jnp.maximum(e1 + b_ref[...], 0.0).astype(o1_ref.dtype)
        o2_ref[...] = jnp.maximum(e2 + b_ref[...], 0.0).astype(o2_ref.dtype)
        return

    acc1, acc2 = acc_refs
    k = pl.program_id(1)

    @pl.when(k == 0)
    def _():
        acc1[...] = jnp.zeros_like(acc1)
        acc2[...] = jnp.zeros_like(acc2)

    acc1[...] += jnp.dot(x1_ref[...], w_ref[...], preferred_element_type=jnp.float32)
    acc2[...] += jnp.dot(x2_ref[...], w_ref[...], preferred_element_type=jnp.float32)

    @pl.when(k == n_k - 1)
    def _():
        o1_ref[...] = jnp.maximum(acc1[...] + b_ref[...], 0.0).astype(o1_ref.dtype)
        o2_ref[...] = jnp.maximum(acc2[...] + b_ref[...], 0.0).astype(o2_ref.dtype)


def _round_up(x, m):
    return ((x + m - 1) // m) * m


def _vmem_budgets():
    """Generation-aware VMEM sizing: (planning budget, compiler limit) in bytes."""
    try:
        cap = pltpu.get_tpu_info().vmem_capacity_bytes   # 64 MiB v7x, 128 MiB v5e/v6e
    except Exception:                                    # non-TPU trace / old runtime
        cap = 64 * 1024 * 1024                           # conservative (v7x-sized)
    # ~45 MiB plan / ~54 MiB limit on v7x; ~90 MiB / ~109 MiB on v5e/v6e.
    return int(cap * 0.70), int(cap * 0.85)


def _choose_tiling(n, k_dim, itemsize, budget):
    """Pick (tile_n, tile_k).

    tile_k divides K exactly (lane-dense multiple of 512; K = 512*H*W so 512
    always divides).  tile_n is a multiple of 8 (or == N for tiny batches),
    capped at round_up(N, 8) so we never compute garbage batch rows beyond one
    partial block, and split into >= 2 blocks for N >= 16 so the "parallel"
    grid axis can shard across v7x's two TensorCores.
    """
    if n <= 8:
        tn_cap = n                                       # full-extent batch block
    else:
        tn_cap = _round_up(n, 8)                         # never exceed the array
        if n >= 16:
            tn_cap = min(tn_cap, _round_up(pl.cdiv(n, 2), 8))   # >= 2 parallel blocks
        tn_cap = min(tn_cap, 256)
    tn_min = min(tn_cap, 8)

    # Largest exact divisor first (single-k fast path), then 8192 .. 512.
    tk_candidates = [k_dim] + [t for t in range(8192, 0, -512)
                               if t < k_dim and k_dim % t == 0]
    for tk in tk_candidates:
        # NOTE: the auto-pipeline statically allocates 2 buffers per input block,
        # including the constant-index weight/bias (DMA'd once but double-
        # allocated), so we budget for 2 copies instead of relying on
        # pipeline_mode=pl.Buffered(1).
        fixed = (2 * tk * E_PAD * itemsize          # weight blocks (2 buffers)
                 + 2 * E_PAD * 4                    # bias blocks
                 + 4 * 256 * E_PAD * 4)             # accumulators + output blocks slack
        avail = budget - fixed
        if avail <= 0:
            continue
        tn_fit = avail // (4 * tk * itemsize)       # 2 towers x 2 pipeline buffers
        if tn_fit >= 8:
            tn_fit = (tn_fit // 8) * 8
        tn = min(tn_cap, tn_fit)
        if tn >= tn_min:
            return int(tn), int(tk)
    return int(tn_min), 512                          # last resort (always compiles)


def siamese_forward(img1_feat, img2_feat, weight, bias):
    """SiameseNetwork_withdropout.forward on backbone feature maps (shared head).

    weight: (EMBED, C_FEAT) — PyTorch nn.Linear layout (out_features, in_features).
    bias:   (EMBED,)
    """
    N, C, H, W = img1_feat.shape
    assert img2_feat.shape == img1_feat.shape and C == C_FEAT
    assert weight.shape == (EMBED, C_FEAT) and bias.shape == (EMBED,)
    HW = H * W
    K = C * HW
    in_dtype = img1_feat.dtype
    in_isz = img1_feat.dtype.itemsize

    # NCHW -> (N, C*H*W): contiguous reshape, no transpose / extra HBM pass.
    x1 = img1_feat.reshape(N, K)
    x2 = img2_feat.reshape(N, K)

    # Fold AdaptiveAvgPool2d((1,1)) + the 1/(H*W) scale into the Linear weight:
    #   w_exp[c*HW + hw, e] = weight[e, c] / HW, zero-padded to 128 output lanes.
    # Weight dtype follows the activations: bf16 feature maps hit the native bf16
    # MXU path on v6e/v7x; f32 stays f32 for exact module parity.
    w_pad = jnp.zeros((C_FEAT, E_PAD), in_dtype).at[:, :EMBED].set(
        (weight.T / HW).astype(in_dtype))
    w_exp = jnp.broadcast_to(w_pad[:, None, :], (C_FEAT, HW, E_PAD)).reshape(K, E_PAD)
    b_pad = jnp.zeros((1, E_PAD), jnp.float32).at[0, :EMBED].set(
        bias.astype(jnp.float32))

    budget, vmem_limit = _vmem_budgets()
    tile_n, tile_k = _choose_tiling(N, K, in_isz, budget)
    n_k = K // tile_k
    grid = (pl.cdiv(N, tile_n), n_k)

    kernel = functools.partial(siamese_head_kernel, n_k=n_k)

    bytes_accessed = (2 * N * K * in_isz                  # both towers' feature maps
                      + K * E_PAD * in_isz + E_PAD * 4    # expanded weight + bias
                      + 2 * N * E_PAD * 4)                # padded outputs

    # Out-of-range batch rows in a partial (or oversized) last block are computed
    # from padded block contents and dropped by the masked partial output store;
    # rows are independent so valid outputs are unaffected.
    out1, out2 = pl.pallas_call(
        kernel,
        out_shape=(jax.ShapeDtypeStruct((N, E_PAD), jnp.float32),
                   jax.ShapeDtypeStruct((N, E_PAD), jnp.float32)),
        grid_spec=pltpu.PrefetchScalarGridSpec(
            num_scalar_prefetch=0,
            grid=grid,
            in_specs=[
                pl.BlockSpec((tile_n, tile_k), lambda i, k: (i, k)),
                pl.BlockSpec((tile_n, tile_k), lambda i, k: (i, k)),
                # Weight block is constant in i: in the single-k fast path it is
                # DMA'd exactly once and stays resident for the whole grid.
                pl.BlockSpec((tile_k, E_PAD), lambda i, k: (k, 0)),
                pl.BlockSpec((1, E_PAD), lambda i, k: (0, 0)),
            ],
            out_specs=(
                pl.BlockSpec((tile_n, E_PAD), lambda i, k: (i, 0)),
                pl.BlockSpec((tile_n, E_PAD), lambda i, k: (i, 0)),
            ),
            scratch_shapes=([] if n_k == 1 else
                            [pltpu.VMEM((tile_n, E_PAD), jnp.float32),
                             pltpu.VMEM((tile_n, E_PAD), jnp.float32)]),
        ),
        compiler_params=pltpu.CompilerParams(
            dimension_semantics=("parallel", "arbitrary"),
            vmem_limit_bytes=vmem_limit,
        ),
        cost_estimate=pl.CostEstimate(
            flops=int(2 * (2 * N) * K * E_PAD),
            transcendentals=0,
            bytes_accessed=int(bytes_accessed),
        ),
    )(x1, x2, w_exp, b_pad)

    # Slice the lane padding away before handing embeddings downstream.
    return out1[:, :EMBED], out2[:, :EMBED]


if __name__ == "__main__":
    key = jax.random.PRNGKey(0)
    k1, k2, kw, kb = jax.random.split(key, 4)

    # Small shapes: batch=2, backbone channels=512, spatial 4x4 (128x128 images / 32).
    N, H, W = 2, 4, 4
    img1_feat = jax.random.normal(k1, (N, C_FEAT, H, W), dtype=jnp.float32)
    img2_feat = jax.random.normal(k2, (N, C_FEAT, H, W), dtype=jnp.float32)

    # Deterministic Linear(512 -> 64) parameters in PyTorch layout (out, in).
    weight = jax.random.normal(kw, (EMBED, C_FEAT), dtype=jnp.float32) * 0.02
    bias = jax.random.normal(kb, (EMBED,), dtype=jnp.float32) * 0.01

    feat1, feat2 = jax.jit(siamese_forward)(img1_feat, img2_feat, weight, bias)
    jax.block_until_ready((feat1, feat2))

    # Plain-JAX reference of the head: pool -> flatten -> linear -> relu
    # (Dropout(p=0.5) is identity in eval mode).
    def ref_head(x):
        pooled = jnp.mean(x, axis=(2, 3))                   # (N, 512)
        return jnp.maximum(pooled @ weight.T + bias, 0.0)   # (N, 64)

    r1, r2 = ref_head(img1_feat), ref_head(img2_feat)
    assert feat1.shape == (N, EMBED) and feat2.shape == (N, EMBED)
    assert jnp.allclose(feat1, r1, atol=1e-3), "tower-1 mismatch vs reference"
    assert jnp.allclose(feat2, r2, atol=1e-3), "tower-2 mismatch vs reference"

    print("KERNEL_OK")
</pallas_src>

<mosaic_0001>
module attributes {stable_mosaic.version = 11 : i64} {
  func.func @siamese_head_kernel(%arg0: i32, %arg1: i32, %arg2: memref<2x8192xf32, #tpu.memory_space<vmem>>, %arg3: memref<2x8192xf32, #tpu.memory_space<vmem>>, %arg4: memref<8192x128xf32, #tpu.memory_space<vmem>>, %arg5: memref<1x128xf32, #tpu.memory_space<vmem>>, %arg6: memref<2x128xf32, #tpu.memory_space<vmem>>, %arg7: memref<2x128xf32, #tpu.memory_space<vmem>>) attributes {dimension_semantics = [#tpu.dimension_semantics<parallel>, #tpu.dimension_semantics<arbitrary>], iteration_bounds = array<i64: 1, 1>, scalar_prefetch = 0 : i64, scratch_operands = 0 : i64, tpu.core_type = #tpu.core_type<tc>, window_params = [{transform_indices = @transform_0, window_bounds = array<i64: 2, 8192>}, {transform_indices = @transform_1, window_bounds = array<i64: 2, 8192>}, {transform_indices = @transform_2, window_bounds = array<i64: 8192, 128>}, {pipeline_mode = #tpu.pipeline_mode<synchronous>, transform_indices = @transform_3, window_bounds = array<i64: 1, 128>}, {transform_indices = @transform_4, window_bounds = array<i64: 2, 128>}, {transform_indices = @transform_5, window_bounds = array<i64: 2, 128>}]} {
    %c0 = arith.constant 0 : index
    %c0_0 = arith.constant 0 : index
    %0 = vector.load %arg2[%c0, %c0_0] : memref<2x8192xf32, #tpu.memory_space<vmem>>, vector<2x8192xf32>
    %c0_1 = arith.constant 0 : index
    %c0_2 = arith.constant 0 : index
    %1 = vector.load %arg4[%c0_1, %c0_2] : memref<8192x128xf32, #tpu.memory_space<vmem>>, vector<8192x128xf32>
    %cst = arith.constant dense<0.000000e+00> : vector<2x128xf32>
    %2 = tpu.matmul %0, %1, %cst {dimension_numbers = #tpu.dot_dimension_numbers<[1], [0], [0], [1], [0, 0, 1, 1], [], []>} : vector<2x8192xf32>, vector<8192x128xf32>, vector<2x128xf32> -> vector<2x128xf32>
    %c0_3 = arith.constant 0 : index
    %c0_4 = arith.constant 0 : index
    %3 = vector.load %arg3[%c0_3, %c0_4] : memref<2x8192xf32, #tpu.memory_space<vmem>>, vector<2x8192xf32>
    %c0_5 = arith.constant 0 : index
    %c0_6 = arith.constant 0 : index
    %4 = vector.load %arg4[%c0_5, %c0_6] : memref<8192x128xf32, #tpu.memory_space<vmem>>, vector<8192x128xf32>
    %cst_7 = arith.constant dense<0.000000e+00> : vector<2x128xf32>
    %5 = tpu.matmul %3, %4, %cst_7 {dimension_numbers = #tpu.dot_dimension_numbers<[1], [0], [0], [1], [0, 0, 1, 1], [], []>} : vector<2x8192xf32>, vector<8192x128xf32>, vector<2x128xf32> -> vector<2x128xf32>
    %c0_8 = arith.constant 0 : index
    %c0_9 = arith.constant 0 : index
    %6 = vector.load %arg5[%c0_8, %c0_9] : memref<1x128xf32, #tpu.memory_space<vmem>>, vector<1x128xf32>
    %7 = vector.broadcast %6 : vector<1x128xf32> to vector<2x128xf32>
    %8 = arith.addf %2, %7 : vector<2x128xf32>
    %cst_10 = arith.constant 0.000000e+00 : f32
    %9 = vector.broadcast %cst_10 : f32 to vector<2x128xf32>
    %10 = arith.maximumf %8, %9 : vector<2x128xf32>
    %c0_11 = arith.constant 0 : index
    %c0_12 = arith.constant 0 : index
    %11 = vector.load %arg6[%c0_11, %c0_12] : memref<2x128xf32, #tpu.memory_space<vmem>>, vector<2x128xf32>
    tpu.vector_store %arg6[%c0_11, %c0_12], %10 {strides = array<i32>} : memref<2x128xf32, #tpu.memory_space<vmem>>, vector<2x128xf32>,
    %c0_13 = arith.constant 0 : index
    %c0_14 = arith.constant 0 : index
    %12 = vector.load %arg5[%c0_13, %c0_14] : memref<1x128xf32, #tpu.memory_space<vmem>>, vector<1x128xf32>
    %13 = vector.broadcast %12 : vector<1x128xf32> to vector<2x128xf32>
    %14 = arith.addf %5, %13 : vector<2x128xf32>
    %cst_15 = arith.constant 0.000000e+00 : f32
    %15 = vector.broadcast %cst_15 : f32 to vector<2x128xf32>
    %16 = arith.maximumf %14, %15 : vector<2x128xf32>
    %c0_16 = arith.constant 0 : index
    %c0_17 = arith.constant 0 : index
    %17 = vector.load %arg7[%c0_16, %c0_17] : memref<2x128xf32, #tpu.memory_space<vmem>>, vector<2x128xf32>
    tpu.vector_store %arg7[%c0_16, %c0_17], %16 {strides = array<i32>} : memref<2x128xf32, #tpu.memory_space<vmem>>, vector<2x128xf32>,
    return
  }
  func.func @transform_0(%arg0: i32, %arg1: i32) -> (i32, i32) {
    %c0_i32 = arith.constant 0 : i32
    return %arg0, %arg1 : i32, i32
  }
  func.func @transform_1(%arg0: i32, %arg1: i32) -> (i32, i32) {
    %c0_i32 = arith.constant 0 : i32
    return %arg0, %arg1 : i32, i32
  }
  func.func @transform_2(%arg0: i32, %arg1: i32) -> (i32, i32) {
    %c0_i32 = arith.constant 0 : i32
    %c0_i32_0 = arith.constant 0 : i32
    return %arg1, %c0_i32 : i32, i32
  }
  func.func @transform_3(%arg0: i32, %arg1: i32) -> (i32, i32) {
    %c0_i32 = arith.constant 0 : i32
    %c0_i32_0 = arith.constant 0 : i32
    %c0_i32_1 = arith.constant 0 : i32
    return %c0_i32, %c0_i32_0 : i32, i32
  }
  func.func @transform_4(%arg0: i32, %arg1: i32) -> (i32, i32) {
    %c0_i32 = arith.constant 0 : i32
    %c0_i32_0 = arith.constant 0 : i32
    return %arg0, %c0_i32 : i32, i32
  }
  func.func @transform_5(%arg0: i32, %arg1: i32) -> (i32, i32) {
    %c0_i32 = arith.constant 0 : i32
    %c0_i32_0 = arith.constant 0 : i32
    return %arg0, %c0_i32 : i32, i32
  }
}

</mosaic_0001>

<llo_original>
// kernel: siamese_forward.1
$region0: #{siamese_forward.1}
  #allocation0 [shape = 'u32[]', space=smem, size = 0x4, offset = 0x4, fixed_abs, tag = 'smem constant byte address 0x4 - core index']
  #allocation1 [shape = 'u32[144,128]{1,0:T(1,128)}', space=vmem, size = 0x12000, scoped, tag = 'internal scratch']
  %s0 = inlined_call_operand.vmem [shape: f32[2,8192], index: 0, kind: input, shape index: {}]
  %s1 = inlined_call_operand.vmem [shape: f32[2,8192], index: 1, kind: input, shape index: {}]
  %s2 = inlined_call_operand.vmem [shape: f32[8192,128], index: 2, kind: input, shape index: {}]
  %s3 = inlined_call_operand.vmem [shape: f32[1,128], index: 3, kind: input, shape index: {}]
  %s4 = inlined_call_operand.hbm [shape: f32[2,128], index: 4, kind: output, shape index: {0}]
  %s5 = inlined_call_operand.hbm [shape: f32[2,128], index: 5, kind: output, shape index: {1}]
  %6 = xla_tuple %s4, %s5
  %s7 = sld [smem:[#allocation0]]
  $region34: #{siamese_forward.1} parent=0
    _
  %s9 = ssub.s32 1, %s7
  %s10 = scalar_select 0, %s9, %s7
  $region1: #{siamese_forward.1} parent=0
    #allocation2 [shape = 'u8[1024]{0}', space=vmem, size = 0x400, scoped, tag = 'output window, operand 0, single buffered']
    #allocation3 [shape = 's32[1]{0}', space=sflag, size = 0x4, scoped, tag = 'scoped memory for siamese_forward.1']
    #allocation4 [shape = 'u8[1024]{0}', space=vmem, size = 0x400, scoped, tag = 'output window, operand 1, single buffered']
    #allocation5 [shape = 's32[1]{0}', space=sflag, size = 0x4, scoped, tag = 'scoped memory for siamese_forward.1']
    %11 = vsyncpa [#allocation3], 0
    %12 = vsyncpa [#allocation5], 0
    // Predicated region
    $region2: #{siamese_forward.1} parent=1 // pred_check
      _
    $region3: #{siamese_forward.1} parent=1 // pred_check_branch
      %14 = sbr.rel (0) target = $region5
    $region4: #{siamese_forward.1} parent=1 // pred_region
      _
    $region5: #{siamese_forward.1} parent=1 // pred_fallthru
      _
    // Predicated region
    $region6: #{siamese_forward.1} parent=1 // pred_check
      _
    $region7: #{siamese_forward.1} parent=1 // pred_check_branch
      %16 = sbr.rel (0) target = $region9
    $region8: #{siamese_forward.1} parent=1 // pred_region
      _
    $region9: #{siamese_forward.1} parent=1 // pred_fallthru
      _
    // Predicated region
    $region10: #{siamese_forward.1} parent=1 // pred_check
      _
    $region11: #{siamese_forward.1} parent=1 // pred_check_branch
      %18 = sbr.rel (0) target = $region13
    $region12: #{siamese_forward.1} parent=1 // pred_region
      _
    $region13: #{siamese_forward.1} parent=1 // pred_fallthru
      _
    // Predicated region
    $region14: #{siamese_forward.1} parent=1 // pred_check
      _
    $region15: #{siamese_forward.1} parent=1 // pred_check_branch
      %20 = sbr.rel (0) target = $region17
    $region16: #{siamese_forward.1} parent=1 // pred_region
      _
    $region17: #{siamese_forward.1} parent=1 // pred_fallthru
      _
    %v21 = vld [vmem:[%s0] sm:$0xff]
    %v22 = vld [vmem:[%s0 + $0x8] sm:$0xff]
    %v23 = vld [vmem:[%s0 + $0x10] sm:$0xff]
    %v24 = vld [vmem:[%s0 + $0x18] sm:$0xff]
    %v25 = vld [vmem:[%s0 + $0x20] sm:$0xff]
    %v26 = vld [vmem:[%s0 + $0x28] sm:$0xff]
    %v27 = vld [vmem:[%s0 + $0x30] sm:$0xff]
    %v28 = vld [vmem:[%s0 + $0x38] sm:$0xff]
    %v29 = vld [vmem:[%s0 + $0x40] sm:$0xff]
    %v30 = vld [vmem:[%s0 + $0x48] sm:$0xff]
    %v31 = vld [vmem:[%s0 + $0x50] sm:$0xff]
    %v32 = vld [vmem:[%s0 + $0x58] sm:$0xff]
    %v33 = vld [vmem:[%s0 + $0x60] sm:$0xff]
    %v34 = vld [vmem:[%s0 + $0x68] sm:$0xff]
    %v35 = vld [vmem:[%s0 + $0x70] sm:$0xff]
    %v36 = vld [vmem:[%s0 + $0x78] sm:$0xff]
    %v37 = vld [vmem:[%s2] sm:$0xff]
    %v38 = vld [vmem:[%s2 + $0x8] sm:$0xff]
    %v39 = vld [vmem:[%s2 + $0x10] sm:$0xff]
    %v40 = vld [vmem:[%s2 + $0x18] sm:$0xff]
    %v41 = vld [vmem:[%s2 + $0x20] sm:$0xff]
    %v42 = vld [vmem:[%s2 + $0x28] sm:$0xff]
    %v43 = vld [vmem:[%s2 + $0x30] sm:$0xff]
    %v44 = vld [vmem:[%s2 + $0x38] sm:$0xff]
    %v45 = vld [vmem:[%s2 + $0x40] sm:$0xff]
    %v46 = vld [vmem:[%s2 + $0x48] sm:$0xff]
    %v47 = vld [vmem:[%s2 + $0x50] sm:$0xff]
    %v48 = vld [vmem:[%s2 + $0x58] sm:$0xff]
    %v49 = vld [vmem:[%s2 + $0x60] sm:$0xff]
    %v50 = vld [vmem:[%s2 + $0x68] sm:$0xff]
    %v51 = vld [vmem:[%s2 + $0x70] sm:$0xff]
    %v52 = vld [vmem:[%s2 + $0x78] sm:$0xff]
    %v53 = vld [vmem:[%s2 + $0x80] sm:$0xff]
    %v54 = vld [vmem:[%s2 + $0x88] sm:$0xff]
    %v55 = vld [vmem:[%s2 + $0x90] sm:$0xff]
    %v56 = vld [vmem:[%s2 + $0x98] sm:$0xff]
    %v57 = vld [vmem:[%s2 + $0xa0] sm:$0xff]
    %v58 = vld [vmem:[%s2 + $0xa8] sm:$0xff]
    %v59 = vld [vmem:[%s2 + $0xb0] sm:$0xff]
    %v60 = vld [vmem:[%s2 + $0xb8] sm:$0xff]
    %v61 = vld [vmem:[%s2 + $0xc0] sm:$0xff]
    %v62 = vld [vmem:[%s2 + $0xc8] sm:$0xff]
    %v63 = vld [vmem:[%s2 + $0xd0] sm:$0xff]
    %v64 = vld [vmem:[%s2 + $0xd8] sm:$0xff]
    %v65 = vld [vmem:[%s2 + $0xe0] sm:$0xff]
    %v66 = vld [vmem:[%s2 + $0xe8] sm:$0xff]
    %v67 = vld [vmem:[%s2 + $0xf0] sm:$0xff]
    %v68 = vld [vmem:[%s2 + $0xf8] sm:$0xff]
    %v69 = vld [vmem:[%s2 + $0x100] sm:$0xff]
    %v70 = vld [vmem:[%s2 + $0x108] sm:$0xff]
    %v71 = vld [vmem:[%s2 + $0x110] sm:$0xff]
    %v72 = vld [vmem:[%s2 + $0x118] sm:$0xff]
    %v73 = vld [vmem:[%s2 + $0x120] sm:$0xff]
    %v74 = vld [vmem:[%s2 + $0x128] sm:$0xff]
    %v75 = vld [vmem:[%s2 + $0x130] sm:$0xff]
    %v76 = vld [vmem:[%s2 + $0x138] sm:$0xff]
    %v77 = vld [vmem:[%s2 + $0x140] sm:$0xff]
    %v78 = vld [vmem:[%s2 + $0x148] sm:$0xff]
    %v79 = vld [vmem:[%s2 + $0x150] sm:$0xff]
    %v80 = vld [vmem:[%s2 + $0x158] sm:$0xff]
    %v81 = vld [vmem:[%s2 + $0x160] sm:$0xff]
    %v82 = vld [vmem:[%s2 + $0x168] sm:$0xff]
    %v83 = vld [vmem:[%s2 + $0x170] sm:$0xff]
    %v84 = vld [vmem:[%s2 + $0x178] sm:$0xff]
    %v85 = vld [vmem:[%s2 + $0x180] sm:$0xff]
    %v86 = vld [vmem:[%s2 + $0x188] sm:$0xff]
    %v87 = vld [vmem:[%s2 + $0x190] sm:$0xff]
    %v88 = vld [vmem:[%s2 + $0x198] sm:$0xff]
    %v89 = vld [vmem:[%s2 + $0x1a0] sm:$0xff]
    %v90 = vld [vmem:[%s2 + $0x1a8] sm:$0xff]
    %v91 = vld [vmem:[%s2 + $0x1b0] sm:$0xff]
    %v92 = vld [vmem:[%s2 + $0x1b8] sm:$0xff]
    %v93 = vld [vmem:[%s2 + $0x1c0] sm:$0xff]
    %v94 = vld [vmem:[%s2 + $0x1c8] sm:$0xff]
    %v95 = vld [vmem:[%s2 + $0x1d0] sm:$0xff]
    %v96 = vld [vmem:[%s2 + $0x1d8] sm:$0xff]
    %v97 = vld [vmem:[%s2 + $0x1e0] sm:$0xff]
    %v98 = vld [vmem:[%s2 + $0x1e8] sm:$0xff]
    %v99 = vld [vmem:[%s2 + $0x1f0] sm:$0xff]
    %v100 = vld [vmem:[%s2 + $0x1f8] sm:$0xff]
    %v101 = vld [vmem:[%s2 + $0x200] sm:$0xff]
    %v102 = vld [vmem:[%s2 + $0x208] sm:$0xff]
    %v103 = vld [vmem:[%s2 + $0x210] sm:$0xff]
    %v104 = vld [vmem:[%s2 + $0x218] sm:$0xff]
    %v105 = vld [vmem:[%s2 + $0x220] sm:$0xff]
    %v106 = vld [vmem:[%s2 + $0x228] sm:$0xff]
    %v107 = vld [vmem:[%s2 + $0x230] sm:$0xff]
    %v108 = vld [vmem:[%s2 + $0x238] sm:$0xff]
    %v109 = vld [vmem:[%s2 + $0x240] sm:$0xff]
    %v110 = vld [vmem:[%s2 + $0x248] sm:$0xff]
    %v111 = vld [vmem:[%s2 + $0x250] sm:$0xff]
    %v112 = vld [vmem:[%s2 + $0x258] sm:$0xff]
    %v113 = vld [vmem:[%s2 + $0x260] sm:$0xff]
    %v114 = vld [vmem:[%s2 + $0x268] sm:$0xff]
    %v115 = vld [vmem:[%s2 + $0x270] sm:$0xff]
    %v116 = vld [vmem:[%s2 + $0x278] sm:$0xff]
    %v117 = vld [vmem:[%s2 + $0x280] sm:$0xff]
    %v118 = vld [vmem:[%s2 + $0x288] sm:$0xff]
    %v119 = vld [vmem:[%s2 + $0x290] sm:$0xff]
    %v120 = vld [vmem:[%s2 + $0x298] sm:$0xff]
    %v121 = vld [vmem:[%s2 + $0x2a0] sm:$0xff]
    %v122 = vld [vmem:[%s2 + $0x2a8] sm:$0xff]
    %v123 = vld [vmem:[%s2 + $0x2b0] sm:$0xff]
    %v124 = vld [vmem:[%s2 + $0x2b8] sm:$0xff]
    %v125 = vld [vmem:[%s2 + $0x2c0] sm:$0xff]
    %v126 = vld [vmem:[%s2 + $0x2c8] sm:$0xff]
    %v127 = vld [vmem:[%s2 + $0x2d0] sm:$0xff]
    %v128 = vld [vmem:[%s2 + $0x2d8] sm:$0xff]
    %v129 = vld [vmem:[%s2 + $0x2e0] sm:$0xff]
    %v130 = vld [vmem:[%s2 + $0x2e8] sm:$0xff]
    %v131 = vld [vmem:[%s2 + $0x2f0] sm:$0xff]
    %v132 = vld [vmem:[%s2 + $0x2f8] sm:$0xff]
    %v133 = vld [vmem:[%s2 + $0x300] sm:$0xff]
    %v134 = vld [vmem:[%s2 + $0x308] sm:$0xff]
    %v135 = vld [vmem:[%s2 + $0x310] sm:$0xff]
    %v136 = vld [vmem:[%s2 + $0x318] sm:$0xff]
    %v137 = vld [vmem:[%s2 + $0x320] sm:$0xff]
    %v138 = vld [vmem:[%s2 + $0x328] sm:$0xff]
    %v139 = vld [vmem:[%s2 + $0x330] sm:$0xff]
    %v140 = vld [vmem:[%s2 + $0x338] sm:$0xff]
    %v141 = vld [vmem:[%s2 + $0x340] sm:$0xff]
    %v142 = vld [vmem:[%s2 + $0x348] sm:$0xff]
    %v143 = vld [vmem:[%s2 + $0x350] sm:$0xff]
    %v144 = vld [vmem:[%s2 + $0x358] sm:$0xff]
    %v145 = vld [vmem:[%s2 + $0x360] sm:$0xff]
    %v146 = vld [vmem:[%s2 + $0x368] sm:$0xff]
    %v147 = vld [vmem:[%s2 + $0x370] sm:$0xff]
    %v148 = vld [vmem:[%s2 + $0x378] sm:$0xff]
    %v149 = vld [vmem:[%s2 + $0x380] sm:$0xff]
    %v150 = vld [vmem:[%s2 + $0x388] sm:$0xff]
    %v151 = vld [vmem:[%s2 + $0x390] sm:$0xff]
    %v152 = vld [vmem:[%s2 + $0x398] sm:$0xff]
    %v153 = vld [vmem:[%s2 + $0x3a0] sm:$0xff]
    %v154 = vld [vmem:[%s2 + $0x3a8] sm:$0xff]
    %v155 = vld [vmem:[%s2 + $0x3b0] sm:$0xff]
    %v156 = vld [vmem:[%s2 + $0x3b8] sm:$0xff]
    %v157 = vld [vmem:[%s2 + $0x3c0] sm:$0xff]
    %v158 = vld [vmem:[%s2 + $0x3c8] sm:$0xff]
    %v159 = vld [vmem:[%s2 + $0x3d0] sm:$0xff]
    %v160 = vld [vmem:[%s2 + $0x3d8] sm:$0xff]
    %v161 = vld [vmem:[%s2 + $0x3e0] sm:$0xff]
    %v162 = vld [vmem:[%s2 + $0x3e8] sm:$0xff]
    %v163 = vld [vmem:[%s2 + $0x3f0] sm:$0xff]
    %v164 = vld [vmem:[%s2 + $0x3f8] sm:$0xff]
    %v165 = vld [vmem:[%s2 + $0x400] sm:$0xff]
    %v166 = vld [vmem:[%s2 + $0x408] sm:$0xff]
    %v167 = vld [vmem:[%s2 + $0x410] sm:$0xff]
    %v168 = vld [vmem:[%s2 + $0x418] sm:$0xff]
    %v169 = vld [vmem:[%s2 + $0x420] sm:$0xff]
    %v170 = vld [vmem:[%s2 + $0x428] sm:$0xff]
    %v171 = vld [vmem:[%s2 + $0x430] sm:$0xff]
    %v172 = vld [vmem:[%s2 + $0x438] sm:$0xff]
    %v173 = vld [vmem:[%s2 + $0x440] sm:$0xff]
    %v174 = vld [vmem:[%s2 + $0x448] sm:$0xff]
    %v175 = vld [vmem:[%s2 + $0x450] sm:$0xff]
    %v176 = vld [vmem:[%s2 + $0x458] sm:$0xff]
    %v177 = vld [vmem:[%s2 + $0x460] sm:$0xff]
    %v178 = vld [vmem:[%s2 + $0x468] sm:$0xff]
    %v179 = vld [vmem:[%s2 + $0x470] sm:$0xff]
    %v180 = vld [vmem:[%s2 + $0x478] sm:$0xff]
    %v181 = vld [vmem:[%s2 + $0x480] sm:$0xff]
    %v182 = vld [vmem:[%s2 + $0x488] sm:$0xff]
    %v183 = vld [vmem:[%s2 + $0x490] sm:$0xff]
    %v184 = vld [vmem:[%s2 + $0x498] sm:$0xff]
    %v185 = vld [vmem:[%s2 + $0x4a0] sm:$0xff]
    %v186 = vld [vmem:[%s2 + $0x4a8] sm:$0xff]
    %v187 = vld [vmem:[%s2 + $0x4b0] sm:$0xff]
    %v188 = vld [vmem:[%s2 + $0x4b8] sm:$0xff]
    %v189 = vld [vmem:[%s2 + $0x4c0] sm:$0xff]
    %v190 = vld [vmem:[%s2 + $0x4c8] sm:$0xff]
    %v191 = vld [vmem:[%s2 + $0x4d0] sm:$0xff]
    %v192 = vld [vmem:[%s2 + $0x4d8] sm:$0xff]
    %v193 = vld [vmem:[%s2 + $0x4e0] sm:$0xff]
    %v194 = vld [vmem:[%s2 + $0x4e8] sm:$0xff]
    %v195 = vld [vmem:[%s2 + $0x4f0] sm:$0xff]
    %v196 = vld [vmem:[%s2 + $0x4f8] sm:$0xff]
    %v197 = vld [vmem:[%s2 + $0x500] sm:$0xff]
    %v198 = vld [vmem:[%s2 + $0x508] sm:$0xff]
    %v199 = vld [vmem:[%s2 + $0x510] sm:$0xff]
    %v200 = vld [vmem:[%s2 + $0x518] sm:$0xff]
    %v201 = vld [vmem:[%s2 + $0x520] sm:$0xff]
    %v202 = vld [vmem:[%s2 + $0x528] sm:$0xff]
    %v203 = vld [vmem:[%s2 + $0x530] sm:$0xff]
    %v204 = vld [vmem:[%s2 + $0x538] sm:$0xff]
    %v205 = vld [vmem:[%s2 + $0x540] sm:$0xff]
    %v206 = vld [vmem:[%s2 + $0x548] sm:$0xff]
    %v207 = vld [vmem:[%s2 + $0x550] sm:$0xff]
    %v208 = vld [vmem:[%s2 + $0x558] sm:$0xff]
    %v209 = vld [vmem:[%s2 + $0x560] sm:$0xff]
    %v210 = vld [vmem:[%s2 + $0x568] sm:$0xff]
    %v211 = vld [vmem:[%s2 + $0x570] sm:$0xff]
    %v212 = vld [vmem:[%s2 + $0x578] sm:$0xff]
    %v213 = vld [vmem:[%s2 + $0x580] sm:$0xff]
    %v214 = vld [vmem:[%s2 + $0x588] sm:$0xff]
    %v215 = vld [vmem:[%s2 + $0x590] sm:$0xff]
    %v216 = vld [vmem:[%s2 + $0x598] sm:$0xff]
    %v217 = vld [vmem:[%s2 + $0x5a0] sm:$0xff]
    %v218 = vld [vmem:[%s2 + $0x5a8] sm:$0xff]
    %v219 = vld [vmem:[%s2 + $0x5b0] sm:$0xff]
    %v220 = vld [vmem:[%s2 + $0x5b8] sm:$0xff]
    %v221 = vld [vmem:[%s2 + $0x5c0] sm:$0xff]
    %v222 = vld [vmem:[%s2 + $0x5c8] sm:$0xff]
    %v223 = vld [vmem:[%s2 + $0x5d0] sm:$0xff]
    %v224 = vld [vmem:[%s2 + $0x5d8] sm:$0xff]
    %v225 = vld [vmem:[%s2 + $0x5e0] sm:$0xff]
    %v226 = vld [vmem:[%s2 + $0x5e8] sm:$0xff]
    %v227 = vld [vmem:[%s2 + $0x5f0] sm:$0xff]
    %v228 = vld [vmem:[%s2 + $0x5f8] sm:$0xff]
    %v229 = vld [vmem:[%s2 + $0x600] sm:$0xff]
    %v230 = vld [vmem:[%s2 + $0x608] sm:$0xff]
    %v231 = vld [vmem:[%s2 + $0x610] sm:$0xff]
    %v232 = vld [vmem:[%s2 + $0x618] sm:$0xff]
    %v233 = vld [vmem:[%s2 + $0x620] sm:$0xff]
    %v234 = vld [vmem:[%s2 + $0x628] sm:$0xff]
    %v235 = vld [vmem:[%s2 + $0x630] sm:$0xff]
    %v236 = vld [vmem:[%s2 + $0x638] sm:$0xff]
    %v237 = vld [vmem:[%s2 + $0x640] sm:$0xff]
    %v238 = vld [vmem:[%s2 + $0x648] sm:$0xff]
    %v239 = vld [vmem:[%s2 + $0x650] sm:$0xff]
    %v240 = vld [vmem:[%s2 + $0x658] sm:$0xff]
    %v241 = vld [vmem:[%s2 + $0x660] sm:$0xff]
    %v242 = vld [vmem:[%s2 + $0x668] sm:$0xff]
    %v243 = vld [vmem:[%s2 + $0x670] sm:$0xff]
    %v244 = vld [vmem:[%s2 + $0x678] sm:$0xff]
    %v245 = vld [vmem:[%s2 + $0x680] sm:$0xff]
    %v246 = vld [vmem:[%s2 + $0x688] sm:$0xff]
    %v247 = vld [vmem:[%s2 + $0x690] sm:$0xff]
    %v248 = vld [vmem:[%s2 + $0x698] sm:$0xff]
    %v249 = vld [vmem:[%s2 + $0x6a0] sm:$0xff]
    %v250 = vld [vmem:[%s2 + $0x6a8] sm:$0xff]
    %v251 = vld [vmem:[%s2 + $0x6b0] sm:$0xff]
    %v252 = vld [vmem:[%s2 + $0x6b8] sm:$0xff]
    %v253 = vld [vmem:[%s2 + $0x6c0] sm:$0xff]
    %v254 = vld [vmem:[%s2 + $0x6c8] sm:$0xff]
    %v255 = vld [vmem:[%s2 + $0x6d0] sm:$0xff]
    %v256 = vld [vmem:[%s2 + $0x6d8] sm:$0xff]
    %v257 = vld [vmem:[%s2 + $0x6e0] sm:$0xff]
    %v258 = vld [vmem:[%s2 + $0x6e8] sm:$0xff]
    %v259 = vld [vmem:[%s2 + $0x6f0] sm:$0xff]
    %v260 = vld [vmem:[%s2 + $0x6f8] sm:$0xff]
    %v261 = vld [vmem:[%s2 + $0x700] sm:$0xff]
    %v262 = vld [vmem:[%s2 + $0x708] sm:$0xff]
    %v263 = vld [vmem:[%s2 + $0x710] sm:$0xff]
    %v264 = vld [vmem:[%s2 + $0x718] sm:$0xff]
    %v265 = vld [vmem:[%s2 + $0x720] sm:$0xff]
    %v266 = vld [vmem:[%s2 + $0x728] sm:$0xff]
    %v267 = vld [vmem:[%s2 + $0x730] sm:$0xff]
    %v268 = vld [vmem:[%s2 + $0x738] sm:$0xff]
    %v269 = vld [vmem:[%s2 + $0x740] sm:$0xff]
    %v270 = vld [vmem:[%s2 + $0x748] sm:$0xff]
    %v271 = vld [vmem:[%s2 + $0x750] sm:$0xff]
    %v272 = vld [vmem:[%s2 + $0x758] sm:$0xff]
    %v273 = vld [vmem:[%s2 + $0x760] sm:$0xff]
    %v274 = vld [vmem:[%s2 + $0x768] sm:$0xff]
    %v275 = vld [vmem:[%s2 + $0x770] sm:$0xff]
    %v276 = vld [vmem:[%s2 + $0x778] sm:$0xff]
    %v277 = vld [vmem:[%s2 + $0x780] sm:$0xff]
    %v278 = vld [vmem:[%s2 + $0x788] sm:$0xff]
    %v279 = vld [vmem:[%s2 + $0x790] sm:$0xff]
    %v280 = vld [vmem:[%s2 + $0x798] sm:$0xff]
    %v281 = vld [vmem:[%s2 + $0x7a0] sm:$0xff]
    %v282 = vld [vmem:[%s2 + $0x7a8] sm:$0xff]
    %v283 = vld [vmem:[%s2 + $0x7b0] sm:$0xff]
    %v284 = vld [vmem:[%s2 + $0x7b8] sm:$0xff]
    %v285 = vld [vmem:[%s2 + $0x7c0] sm:$0xff]
    %v286 = vld [vmem:[%s2 + $0x7c8] sm:$0xff]
    %v287 = vld [vmem:[%s2 + $0x7d0] sm:$0xff]
    %v288 = vld [vmem:[%s2 + $0x7d8] sm:$0xff]
    %v289 = vld [vmem:[%s2 + $0x7e0] sm:$0xff]
    %v290 = vld [vmem:[%s2 + $0x7e8] sm:$0xff]
    %v291 = vld [vmem:[%s2 + $0x7f0] sm:$0xff]
    %v292 = vld [vmem:[%s2 + $0x7f8] sm:$0xff]
    %v293 = vld [vmem:[%s2 + $0x800] sm:$0xff]
    %v294 = vld [vmem:[%s2 + $0x808] sm:$0xff]
    %v295 = vld [vmem:[%s2 + $0x810] sm:$0xff]
    %v296 = vld [vmem:[%s2 + $0x818] sm:$0xff]
    %v297 = vld [vmem:[%s2 + $0x820] sm:$0xff]
    %v298 = vld [vmem:[%s2 + $0x828] sm:$0xff]
    %v299 = vld [vmem:[%s2 + $0x830] sm:$0xff]
    %v300 = vld [vmem:[%s2 + $0x838] sm:$0xff]
    %v301 = vld [vmem:[%s2 + $0x840] sm:$0xff]
    %v302 = vld [vmem:[%s2 + $0x848] sm:$0xff]
    %v303 = vld [vmem:[%s2 + $0x850] sm:$0xff]
    %v304 = vld [vmem:[%s2 + $0x858] sm:$0xff]
    %v305 = vld [vmem:[%s2 + $0x860] sm:$0xff]
    %v306 = vld [vmem:[%s2 + $0x868] sm:$0xff]
    %v307 = vld [vmem:[%s2 + $0x870] sm:$0xff]
    %v308 = vld [vmem:[%s2 + $0x878] sm:$0xff]
    %v309 = vld [vmem:[%s2 + $0x880] sm:$0xff]
    %v310 = vld [vmem:[%s2 + $0x888] sm:$0xff]
    %v311 = vld [vmem:[%s2 + $0x890] sm:$0xff]
    %v312 = vld [vmem:[%s2 + $0x898] sm:$0xff]
    %v313 = vld [vmem:[%s2 + $0x8a0] sm:$0xff]
    %v314 = vld [vmem:[%s2 + $0x8a8] sm:$0xff]
    %v315 = vld [vmem:[%s2 + $0x8b0] sm:$0xff]
    %v316 = vld [vmem:[%s2 + $0x8b8] sm:$0xff]
    %v317 = vld [vmem:[%s2 + $0x8c0] sm:$0xff]
    %v318 = vld [vmem:[%s2 + $0x8c8] sm:$0xff]
    %v319 = vld [vmem:[%s2 + $0x8d0] sm:$0xff]
    %v320 = vld [vmem:[%s2 + $0x8d8] sm:$0xff]
    %v321 = vld [vmem:[%s2 + $0x8e0] sm:$0xff]
    %v322 = vld [vmem:[%s2 + $0x8e8] sm:$0xff]
    %v323 = vld [vmem:[%s2 + $0x8f0] sm:$0xff]
    %v324 = vld [vmem:[%s2 + $0x8f8] sm:$0xff]
    %v325 = vld [vmem:[%s2 + $0x900] sm:$0xff]
    %v326 = vld [vmem:[%s2 + $0x908] sm:$0xff]
    %v327 = vld [vmem:[%s2 + $0x910] sm:$0xff]
    %v328 = vld [vmem:[%s2 + $0x918] sm:$0xff]
    %v329 = vld [vmem:[%s2 + $0x920] sm:$0xff]
    %v330 = vld [vmem:[%s2 + $0x928] sm:$0xff]
    %v331 = vld [vmem:[%s2 + $0x930] sm:$0xff]
    %v332 = vld [vmem:[%s2 + $0x938] sm:$0xff]
    %v333 = vld [vmem:[%s2 + $0x940] sm:$0xff]
    %v334 = vld [vmem:[%s2 + $0x948] sm:$0xff]
    %v335 = vld [vmem:[%s2 + $0x950] sm:$0xff]
    %v336 = vld [vmem:[%s2 + $0x958] sm:$0xff]
    %v337 = vld [vmem:[%s2 + $0x960] sm:$0xff]
    %v338 = vld [vmem:[%s2 + $0x968] sm:$0xff]
    %v339 = vld [vmem:[%s2 + $0x970] sm:$0xff]
    %v340 = vld [vmem:[%s2 + $0x978] sm:$0xff]
    %v341 = vld [vmem:[%s2 + $0x980] sm:$0xff]
    %v342 = vld [vmem:[%s2 + $0x988] sm:$0xff]
    %v343 = vld [vmem:[%s2 + $0x990] sm:$0xff]
    %v344 = vld [vmem:[%s2 + $0x998] sm:$0xff]
    %v345 = vld [vmem:[%s2 + $0x9a0] sm:$0xff]
    %v346 = vld [vmem:[%s2 + $0x9a8] sm:$0xff]
    %v347 = vld [vmem:[%s2 + $0x9b0] sm:$0xff]
    %v348 = vld [vmem:[%s2 + $0x9b8] sm:$0xff]
    %v349 = vld [vmem:[%s2 + $0x9c0] sm:$0xff]
    %v350 = vld [vmem:[%s2 + $0x9c8] sm:$0xff]
    %v351 = vld [vmem:[%s2 + $0x9d0] sm:$0xff]
    %v352 = vld [vmem:[%s2 + $0x9d8] sm:$0xff]
    %v353 = vld [vmem:[%s2 + $0x9e0] sm:$0xff]
    %v354 = vld [vmem:[%s2 + $0x9e8] sm:$0xff]
    %v355 = vld [vmem:[%s2 + $0x9f0] sm:$0xff]
    %v356 = vld [vmem:[%s2 + $0x9f8] sm:$0xff]
    %v357 = vld [vmem:[%s2 + $0xa00] sm:$0xff]
    %v358 = vld [vmem:[%s2 + $0xa08] sm:$0xff]
    %v359 = vld [vmem:[%s2 + $0xa10] sm:$0xff]
    %v360 = vld [vmem:[%s2 + $0xa18] sm:$0xff]
    %v361 = vld [vmem:[%s2 + $0xa20] sm:$0xff]
    %v362 = vld [vmem:[%s2 + $0xa28] sm:$0xff]
    %v363 = vld [vmem:[%s2 + $0xa30] sm:$0xff]
    %v364 = vld [vmem:[%s2 + $0xa38] sm:$0xff]
    %v365 = vld [vmem:[%s2 + $0xa40] sm:$0xff]
    %v366 = vld [vmem:[%s2 + $0xa48] sm:$0xff]
    %v367 = vld [vmem:[%s2 + $0xa50] sm:$0xff]
    %v368 = vld [vmem:[%s2 + $0xa58] sm:$0xff]
    %v369 = vld [vmem:[%s2 + $0xa60] sm:$0xff]
    %v370 = vld [vmem:[%s2 + $0xa68] sm:$0xff]
    %v371 = vld [vmem:[%s2 + $0xa70] sm:$0xff]
    %v372 = vld [vmem:[%s2 + $0xa78] sm:$0xff]
    %v373 = vld [vmem:[%s2 + $0xa80] sm:$0xff]
    %v374 = vld [vmem:[%s2 + $0xa88] sm:$0xff]
    %v375 = vld [vmem:[%s2 + $0xa90] sm:$0xff]
    %v376 = vld [vmem:[%s2 + $0xa98] sm:$0xff]
    %v377 = vld [vmem:[%s2 + $0xaa0] sm:$0xff]
    %v378 = vld [vmem:[%s2 + $0xaa8] sm:$0xff]
    %v379 = vld [vmem:[%s2 + $0xab0] sm:$0xff]
    %v380 = vld [vmem:[%s2 + $0xab8] sm:$0xff]
    %v381 = vld [vmem:[%s2 + $0xac0] sm:$0xff]
    %v382 = vld [vmem:[%s2 + $0xac8] sm:$0xff]
    %v383 = vld [vmem:[%s2 + $0xad0] sm:$0xff]
    %v384 = vld [vmem:[%s2 + $0xad8] sm:$0xff]
    %v385 = vld [vmem:[%s2 + $0xae0] sm:$0xff]
    %v386 = vld [vmem:[%s2 + $0xae8] sm:$0xff]
    %v387 = vld [vmem:[%s2 + $0xaf0] sm:$0xff]
    %v388 = vld [vmem:[%s2 + $0xaf8] sm:$0xff]
    %v389 = vld [vmem:[%s2 + $0xb00] sm:$0xff]
    %v390 = vld [vmem:[%s2 + $0xb08] sm:$0xff]
    %v391 = vld [vmem:[%s2 + $0xb10] sm:$0xff]
    %v392 = vld [vmem:[%s2 + $0xb18] sm:$0xff]
    %v393 = vld [vmem:[%s2 + $0xb20] sm:$0xff]
    %v394 = vld [vmem:[%s2 + $0xb28] sm:$0xff]
    %v395 = vld [vmem:[%s2 + $0xb30] sm:$0xff]
    %v396 = vld [vmem:[%s2 + $0xb38] sm:$0xff]
    %v397 = vld [vmem:[%s2 + $0xb40] sm:$0xff]
    %v398 = vld [vmem:[%s2 + $0xb48] sm:$0xff]
    %v399 = vld [vmem:[%s2 + $0xb50] sm:$0xff]
    %v400 = vld [vmem:[%s2 + $0xb58] sm:$0xff]
    %v401 = vld [vmem:[%s2 + $0xb60] sm:$0xff]
    %v402 = vld [vmem:[%s2 + $0xb68] sm:$0xff]
    %v403 = vld [vmem:[%s2 + $0xb70] sm:$0xff]
    %v404 = vld [vmem:[%s2 + $0xb78] sm:$0xff]
    %v405 = vld [vmem:[%s2 + $0xb80] sm:$0xff]
    %v406 = vld [vmem:[%s2 + $0xb88] sm:$0xff]
    %v407 = vld [vmem:[%s2 + $0xb90] sm:$0xff]
    %v408 = vld [vmem:[%s2 + $0xb98] sm:$0xff]
    %v409 = vld [vmem:[%s2 + $0xba0] sm:$0xff]
    %v410 = vld [vmem:[%s2 + $0xba8] sm:$0xff]
    %v411 = vld [vmem:[%s2 + $0xbb0] sm:$0xff]
    %v412 = vld [vmem:[%s2 + $0xbb8] sm:$0xff]
    %v413 = vld [vmem:[%s2 + $0xbc0] sm:$0xff]
    %v414 = vld [vmem:[%s2 + $0xbc8] sm:$0xff]
    %v415 = vld [vmem:[%s2 + $0xbd0] sm:$0xff]
    %v416 = vld [vmem:[%s2 + $0xbd8] sm:$0xff]
    %v417 = vld [vmem:[%s2 + $0xbe0] sm:$0xff]
    %v418 = vld [vmem:[%s2 + $0xbe8] sm:$0xff]
    %v419 = vld [vmem:[%s2 + $0xbf0] sm:$0xff]
    %v420 = vld [vmem:[%s2 + $0xbf8] sm:$0xff]
    %v421 = vld [vmem:[%s2 + $0xc00] sm:$0xff]
    %v422 = vld [vmem:[%s2 + $0xc08] sm:$0xff]
    %v423 = vld [vmem:[%s2 + $0xc10] sm:$0xff]
    %v424 = vld [vmem:[%s2 + $0xc18] sm:$0xff]
    %v425 = vld [vmem:[%s2 + $0xc20] sm:$0xff]
    %v426 = vld [vmem:[%s2 + $0xc28] sm:$0xff]
    %v427 = vld [vmem:[%s2 + $0xc30] sm:$0xff]
    %v428 = vld [vmem:[%s2 + $0xc38] sm:$0xff]
    %v429 = vld [vmem:[%s2 + $0xc40] sm:$0xff]
    %v430 = vld [vmem:[%s2 + $0xc48] sm:$0xff]
    %v431 = vld [vmem:[%s2 + $0xc50] sm:$0xff]
    %v432 = vld [vmem:[%s2 + $0xc58] sm:$0xff]
    %v433 = vld [vmem:[%s2 + $0xc60] sm:$0xff]
    %v434 = vld [vmem:[%s2 + $0xc68] sm:$0xff]
    %v435 = vld [vmem:[%s2 + $0xc70] sm:$0xff]
    %v436 = vld [vmem:[%s2 + $0xc78] sm:$0xff]
    %v437 = vld [vmem:[%s2 + $0xc80] sm:$0xff]
    %v438 = vld [vmem:[%s2 + $0xc88] sm:$0xff]
    %v439 = vld [vmem:[%s2 + $0xc90] sm:$0xff]
    %v440 = vld [vmem:[%s2 + $0xc98] sm:$0xff]
    %v441 = vld [vmem:[%s2 + $0xca0] sm:$0xff]
    %v442 = vld [vmem:[%s2 + $0xca8] sm:$0xff]
    %v443 = vld [vmem:[%s2 + $0xcb0] sm:$0xff]
    %v444 = vld [vmem:[%s2 + $0xcb8] sm:$0xff]
    %v445 = vld [vmem:[%s2 + $0xcc0] sm:$0xff]
    %v446 = vld [vmem:[%s2 + $0xcc8] sm:$0xff]
    %v447 = vld [vmem:[%s2 + $0xcd0] sm:$0xff]
    %v448 = vld [vmem:[%s2 + $0xcd8] sm:$0xff]
    %v449 = vld [vmem:[%s2 + $0xce0] sm:$0xff]
    %v450 = vld [vmem:[%s2 + $0xce8] sm:$0xff]
    %v451 = vld [vmem:[%s2 + $0xcf0] sm:$0xff]
    %v452 = vld [vmem:[%s2 + $0xcf8] sm:$0xff]
    %v453 = vld [vmem:[%s2 + $0xd00] sm:$0xff]
    %v454 = vld [vmem:[%s2 + $0xd08] sm:$0xff]
    %v455 = vld [vmem:[%s2 + $0xd10] sm:$0xff]
    %v456 = vld [vmem:[%s2 + $0xd18] sm:$0xff]
    %v457 = vld [vmem:[%s2 + $0xd20] sm:$0xff]
    %v458 = vld [vmem:[%s2 + $0xd28] sm:$0xff]
    %v459 = vld [vmem:[%s2 + $0xd30] sm:$0xff]
    %v460 = vld [vmem:[%s2 + $0xd38] sm:$0xff]
    %v461 = vld [vmem:[%s2 + $0xd40] sm:$0xff]
    %v462 = vld [vmem:[%s2 + $0xd48] sm:$0xff]
    %v463 = vld [vmem:[%s2 + $0xd50] sm:$0xff]
    %v464 = vld [vmem:[%s2 + $0xd58] sm:$0xff]
    %v465 = vld [vmem:[%s2 + $0xd60] sm:$0xff]
    %v466 = vld [vmem:[%s2 + $0xd68] sm:$0xff]
    %v467 = vld [vmem:[%s2 + $0xd70] sm:$0xff]
    %v468 = vld [vmem:[%s2 + $0xd78] sm:$0xff]
    %v469 = vld [vmem:[%s2 + $0xd80] sm:$0xff]
    %v470 = vld [vmem:[%s2 + $0xd88] sm:$0xff]
    %v471 = vld [vmem:[%s2 + $0xd90] sm:$0xff]
    %v472 = vld [vmem:[%s2 + $0xd98] sm:$0xff]
    %v473 = vld [vmem:[%s2 + $0xda0] sm:$0xff]
    %v474 = vld [vmem:[%s2 + $0xda8] sm:$0xff]
    %v475 = vld [vmem:[%s2 + $0xdb0] sm:$0xff]
    %v476 = vld [vmem:[%s2 + $0xdb8] sm:$0xff]
    %v477 = vld [vmem:[%s2 + $0xdc0] sm:$0xff]
    %v478 = vld [vmem:[%s2 + $0xdc8] sm:$0xff]
    %v479 = vld [vmem:[%s2 + $0xdd0] sm:$0xff]
    %v480 = vld [vmem:[%s2 + $0xdd8] sm:$0xff]
    %v481 = vld [vmem:[%s2 + $0xde0] sm:$0xff]
    %v482 = vld [vmem:[%s2 + $0xde8] sm:$0xff]
    %v483 = vld [vmem:[%s2 + $0xdf0] sm:$0xff]
    %v484 = vld [vmem:[%s2 + $0xdf8] sm:$0xff]
    %v485 = vld [vmem:[%s2 + $0xe00] sm:$0xff]
    %v486 = vld [vmem:[%s2 + $0xe08] sm:$0xff]
    %v487 = vld [vmem:[%s2 + $0xe10] sm:$0xff]
    %v488 = vld [vmem:[%s2 + $0xe18] sm:$0xff]
    %v489 = vld [vmem:[%s2 + $0xe20] sm:$0xff]
    %v490 = vld [vmem:[%s2 + $0xe28] sm:$0xff]
    %v491 = vld [vmem:[%s2 + $0xe30] sm:$0xff]
    %v492 = vld [vmem:[%s2 + $0xe38] sm:$0xff]
    %v493 = vld [vmem:[%s2 + $0xe40] sm:$0xff]
    %v494 = vld [vmem:[%s2 + $0xe48] sm:$0xff]
    %v495 = vld [vmem:[%s2 + $0xe50] sm:$0xff]
    %v496 = vld [vmem:[%s2 + $0xe58] sm:$0xff]
    %v497 = vld [vmem:[%s2 + $0xe60] sm:$0xff]
    %v498 = vld [vmem:[%s2 + $0xe68] sm:$0xff]
    %v499 = vld [vmem:[%s2 + $0xe70] sm:$0xff]
    %v500 = vld [vmem:[%s2 + $0xe78] sm:$0xff]
    %v501 = vld [vmem:[%s2 + $0xe80] sm:$0xff]
    %v502 = vld [vmem:[%s2 + $0xe88] sm:$0xff]
    %v503 = vld [vmem:[%s2 + $0xe90] sm:$0xff]
    %v504 = vld [vmem:[%s2 + $0xe98] sm:$0xff]
    %v505 = vld [vmem:[%s2 + $0xea0] sm:$0xff]
    %v506 = vld [vmem:[%s2 + $0xea8] sm:$0xff]
    %v507 = vld [vmem:[%s2 + $0xeb0] sm:$0xff]
    %v508 = vld [vmem:[%s2 + $0xeb8] sm:$0xff]
    %v509 = vld [vmem:[%s2 + $0xec0] sm:$0xff]
    %v510 = vld [vmem:[%s2 + $0xec8] sm:$0xff]
    %v511 = vld [vmem:[%s2 + $0xed0] sm:$0xff]
    %v512 = vld [vmem:[%s2 + $0xed8] sm:$0xff]
    %v513 = vld [vmem:[%s2 + $0xee0] sm:$0xff]
    %v514 = vld [vmem:[%s2 + $0xee8] sm:$0xff]
    %v515 = vld [vmem:[%s2 + $0xef0] sm:$0xff]
    %v516 = vld [vmem:[%s2 + $0xef8] sm:$0xff]
    %v517 = vld [vmem:[%s2 + $0xf00] sm:$0xff]
    %v518 = vld [vmem:[%s2 + $0xf08] sm:$0xff]
    %v519 = vld [vmem:[%s2 + $0xf10] sm:$0xff]
    %v520 = vld [vmem:[%s2 + $0xf18] sm:$0xff]
    %v521 = vld [vmem:[%s2 + $0xf20] sm:$0xff]
    %v522 = vld [vmem:[%s2 + $0xf28] sm:$0xff]
    %v523 = vld [vmem:[%s2 + $0xf30] sm:$0xff]
    %v524 = vld [vmem:[%s2 + $0xf38] sm:$0xff]
    %v525 = vld [vmem:[%s2 + $0xf40] sm:$0xff]
    %v526 = vld [vmem:[%s2 + $0xf48] sm:$0xff]
    %v527 = vld [vmem:[%s2 + $0xf50] sm:$0xff]
    %v528 = vld [vmem:[%s2 + $0xf58] sm:$0xff]
    %v529 = vld [vmem:[%s2 + $0xf60] sm:$0xff]
    %v530 = vld [vmem:[%s2 + $0xf68] sm:$0xff]
    %v531 = vld [vmem:[%s2 + $0xf70] sm:$0xff]
    %v532 = vld [vmem:[%s2 + $0xf78] sm:$0xff]
    %v533 = vld [vmem:[%s2 + $0xf80] sm:$0xff]
    %v534 = vld [vmem:[%s2 + $0xf88] sm:$0xff]
    %v535 = vld [vmem:[%s2 + $0xf90] sm:$0xff]
    %v536 = vld [vmem:[%s2 + $0xf98] sm:$0xff]
    %v537 = vld [vmem:[%s2 + $0xfa0] sm:$0xff]
    %v538 = vld [vmem:[%s2 + $0xfa8] sm:$0xff]
    %v539 = vld [vmem:[%s2 + $0xfb0] sm:$0xff]
    %v540 = vld [vmem:[%s2 + $0xfb8] sm:$0xff]
    %v541 = vld [vmem:[%s2 + $0xfc0] sm:$0xff]
    %v542 = vld [vmem:[%s2 + $0xfc8] sm:$0xff]
    %v543 = vld [vmem:[%s2 + $0xfd0] sm:$0xff]
    %v544 = vld [vmem:[%s2 + $0xfd8] sm:$0xff]
    %v545 = vld [vmem:[%s2 + $0xfe0] sm:$0xff]
    %v546 = vld [vmem:[%s2 + $0xfe8] sm:$0xff]
    %v547 = vld [vmem:[%s2 + $0xff0] sm:$0xff]
    %v548 = vld [vmem:[%s2 + $0xff8] sm:$0xff]
    %v549 = vld [vmem:[%s2 + $0x1000] sm:$0xff]
    %v550 = vld [vmem:[%s2 + $0x1008] sm:$0xff]
    %v551 = vld [vmem:[%s2 + $0x1010] sm:$0xff]
    %v552 = vld [vmem:[%s2 + $0x1018] sm:$0xff]
    %v553 = vld [vmem:[%s2 + $0x1020] sm:$0xff]
    %v554 = vld [vmem:[%s2 + $0x1028] sm:$0xff]
    %v555 = vld [vmem:[%s2 + $0x1030] sm:$0xff]
    %v556 = vld [vmem:[%s2 + $0x1038] sm:$0xff]
    %v557 = vld [vmem:[%s2 + $0x1040] sm:$0xff]
    %v558 = vld [vmem:[%s2 + $0x1048] sm:$0xff]
    %v559 = vld [vmem:[%s2 + $0x1050] sm:$0xff]
    %v560 = vld [vmem:[%s2 + $0x1058] sm:$0xff]
    %v561 = vld [vmem:[%s2 + $0x1060] sm:$0xff]
    %v562 = vld [vmem:[%s2 + $0x1068] sm:$0xff]
    %v563 = vld [vmem:[%s2 + $0x1070] sm:$0xff]
    %v564 = vld [vmem:[%s2 + $0x1078] sm:$0xff]
    %v565 = vld [vmem:[%s2 + $0x1080] sm:$0xff]
    %v566 = vld [vmem:[%s2 + $0x1088] sm:$0xff]
    %v567 = vld [vmem:[%s2 + $0x1090] sm:$0xff]
    %v568 = vld [vmem:[%s2 + $0x1098] sm:$0xff]
    %v569 = vld [vmem:[%s2 + $0x10a0] sm:$0xff]
    %v570 = vld [vmem:[%s2 + $0x10a8] sm:$0xff]
    %v571 = vld [vmem:[%s2 + $0x10b0] sm:$0xff]
    %v572 = vld [vmem:[%s2 + $0x10b8] sm:$0xff]
    %v573 = vld [vmem:[%s2 + $0x10c0] sm:$0xff]
    %v574 = vld [vmem:[%s2 + $0x10c8] sm:$0xff]
    %v575 = vld [vmem:[%s2 + $0x10d0] sm:$0xff]
    %v576 = vld [vmem:[%s2 + $0x10d8] sm:$0xff]
    %v577 = vld [vmem:[%s2 + $0x10e0] sm:$0xff]
    %v578 = vld [vmem:[%s2 + $0x10e8] sm:$0xff]
    %v579 = vld [vmem:[%s2 + $0x10f0] sm:$0xff]
    %v580 = vld [vmem:[%s2 + $0x10f8] sm:$0xff]
    %v581 = vld [vmem:[%s2 + $0x1100] sm:$0xff]
    %v582 = vld [vmem:[%s2 + $0x1108] sm:$0xff]
    %v583 = vld [vmem:[%s2 + $0x1110] sm:$0xff]
    %v584 = vld [vmem:[%s2 + $0x1118] sm:$0xff]
    %v585 = vld [vmem:[%s2 + $0x1120] sm:$0xff]
    %v586 = vld [vmem:[%s2 + $0x1128] sm:$0xff]
    %v587 = vld [vmem:[%s2 + $0x1130] sm:$0xff]
    %v588 = vld [vmem:[%s2 + $0x1138] sm:$0xff]
    %v589 = vld [vmem:[%s2 + $0x1140] sm:$0xff]
    %v590 = vld [vmem:[%s2 + $0x1148] sm:$0xff]
    %v591 = vld [vmem:[%s2 + $0x1150] sm:$0xff]
    %v592 = vld [vmem:[%s2 + $0x1158] sm:$0xff]
    %v593 = vld [vmem:[%s2 + $0x1160] sm:$0xff]
    %v594 = vld [vmem:[%s2 + $0x1168] sm:$0xff]
    %v595 = vld [vmem:[%s2 + $0x1170] sm:$0xff]
    %v596 = vld [vmem:[%s2 + $0x1178] sm:$0xff]
    %v597 = vld [vmem:[%s2 + $0x1180] sm:$0xff]
    %v598 = vld [vmem:[%s2 + $0x1188] sm:$0xff]
    %v599 = vld [vmem:[%s2 + $0x1190] sm:$0xff]
    %v600 = vld [vmem:[%s2 + $0x1198] sm:$0xff]
    %v601 = vld [vmem:[%s2 + $0x11a0] sm:$0xff]
    %v602 = vld [vmem:[%s2 + $0x11a8] sm:$0xff]
    %v603 = vld [vmem:[%s2 + $0x11b0] sm:$0xff]
    %v604 = vld [vmem:[%s2 + $0x11b8] sm:$0xff]
    %v605 = vld [vmem:[%s2 + $0x11c0] sm:$0xff]
    %v606 = vld [vmem:[%s2 + $0x11c8] sm:$0xff]
    %v607 = vld [vmem:[%s2 + $0x11d0] sm:$0xff]
    %v608 = vld [vmem:[%s2 + $0x11d8] sm:$0xff]
    %v609 = vld [vmem:[%s2 + $0x11e0] sm:$0xff]
    %v610 = vld [vmem:[%s2 + $0x11e8] sm:$0xff]
    %v611 = vld [vmem:[%s2 + $0x11f0] sm:$0xff]
    %v612 = vld [vmem:[%s2 + $0x11f8] sm:$0xff]
    %v613 = vld [vmem:[%s2 + $0x1200] sm:$0xff]
    %v614 = vld [vmem:[%s2 + $0x1208] sm:$0xff]
    %v615 = vld [vmem:[%s2 + $0x1210] sm:$0xff]
    %v616 = vld [vmem:[%s2 + $0x1218] sm:$0xff]
    %v617 = vld [vmem:[%s2 + $0x1220] sm:$0xff]
    %v618 = vld [vmem:[%s2 + $0x1228] sm:$0xff]
    %v619 = vld [vmem:[%s2 + $0x1230] sm:$0xff]
    %v620 = vld [vmem:[%s2 + $0x1238] sm:$0xff]
    %v621 = vld [vmem:[%s2 + $0x1240] sm:$0xff]
    %v622 = vld [vmem:[%s2 + $0x1248] sm:$0xff]
    %v623 = vld [vmem:[%s2 + $0x1250] sm:$0xff]
    %v624 = vld [vmem:[%s2 + $0x1258] sm:$0xff]
    %v625 = vld [vmem:[%s2 + $0x1260] sm:$0xff]
    %v626 = vld [vmem:[%s2 + $0x1268] sm:$0xff]
    %v627 = vld [vmem:[%s2 + $0x1270] sm:$0xff]
    %v628 = vld [vmem:[%s2 + $0x1278] sm:$0xff]
    %v629 = vld [vmem:[%s2 + $0x1280] sm:$0xff]
    %v630 = vld [vmem:[%s2 + $0x1288] sm:$0xff]
    %v631 = vld [vmem:[%s2 + $0x1290] sm:$0xff]
    %v632 = vld [vmem:[%s2 + $0x1298] sm:$0xff]
    %v633 = vld [vmem:[%s2 + $0x12a0] sm:$0xff]
    %v634 = vld [vmem:[%s2 + $0x12a8] sm:$0xff]
    %v635 = vld [vmem:[%s2 + $0x12b0] sm:$0xff]
    %v636 = vld [vmem:[%s2 + $0x12b8] sm:$0xff]
    %v637 = vld [vmem:[%s2 + $0x12c0] sm:$0xff]
    %v638 = vld [vmem:[%s2 + $0x12c8] sm:$0xff]
    %v639 = vld [vmem:[%s2 + $0x12d0] sm:$0xff]
    %v640 = vld [vmem:[%s2 + $0x12d8] sm:$0xff]
    %v641 = vld [vmem:[%s2 + $0x12e0] sm:$0xff]
    %v642 = vld [vmem:[%s2 + $0x12e8] sm:$0xff]
    %v643 = vld [vmem:[%s2 + $0x12f0] sm:$0xff]
    %v644 = vld [vmem:[%s2 + $0x12f8] sm:$0xff]
    %v645 = vld [vmem:[%s2 + $0x1300] sm:$0xff]
    %v646 = vld [vmem:[%s2 + $0x1308] sm:$0xff]
    %v647 = vld [vmem:[%s2 + $0x1310] sm:$0xff]
    %v648 = vld [vmem:[%s2 + $0x1318] sm:$0xff]
    %v649 = vld [vmem:[%s2 + $0x1320] sm:$0xff]
    %v650 = vld [vmem:[%s2 + $0x1328] sm:$0xff]
    %v651 = vld [vmem:[%s2 + $0x1330] sm:$0xff]
    %v652 = vld [vmem:[%s2 + $0x1338] sm:$0xff]
    %v653 = vld [vmem:[%s2 + $0x1340] sm:$0xff]
    %v654 = vld [vmem:[%s2 + $0x1348] sm:$0xff]
    %v655 = vld [vmem:[%s2 + $0x1350] sm:$0xff]
    %v656 = vld [vmem:[%s2 + $0x1358] sm:$0xff]
    %v657 = vld [vmem:[%s2 + $0x1360] sm:$0xff]
    %v658 = vld [vmem:[%s2 + $0x1368] sm:$0xff]
    %v659 = vld [vmem:[%s2 + $0x1370] sm:$0xff]
    %v660 = vld [vmem:[%s2 + $0x1378] sm:$0xff]
    %v661 = vld [vmem:[%s2 + $0x1380] sm:$0xff]
    %v662 = vld [vmem:[%s2 + $0x1388] sm:$0xff]
    %v663 = vld [vmem:[%s2 + $0x1390] sm:$0xff]
    %v664 = vld [vmem:[%s2 + $0x1398] sm:$0xff]
    %v665 = vld [vmem:[%s2 + $0x13a0] sm:$0xff]
    %v666 = vld [vmem:[%s2 + $0x13a8] sm:$0xff]
    %v667 = vld [vmem:[%s2 + $0x13b0] sm:$0xff]
    %v668 = vld [vmem:[%s2 + $0x13b8] sm:$0xff]
    %v669 = vld [vmem:[%s2 + $0x13c0] sm:$0xff]
    %v670 = vld [vmem:[%s2 + $0x13c8] sm:$0xff]
    %v671 = vld [vmem:[%s2 + $0x13d0] sm:$0xff]
    %v672 = vld [vmem:[%s2 + $0x13d8] sm:$0xff]
    %v673 = vld [vmem:[%s2 + $0x13e0] sm:$0xff]
    %v674 = vld [vmem:[%s2 + $0x13e8] sm:$0xff]
    %v675 = vld [vmem:[%s2 + $0x13f0] sm:$0xff]
    %v676 = vld [vmem:[%s2 + $0x13f8] sm:$0xff]
    %v677 = vld [vmem:[%s2 + $0x1400] sm:$0xff]
    %v678 = vld [vmem:[%s2 + $0x1408] sm:$0xff]
    %v679 = vld [vmem:[%s2 + $0x1410] sm:$0xff]
    %v680 = vld [vmem:[%s2 + $0x1418] sm:$0xff]
    %v681 = vld [vmem:[%s2 + $0x1420] sm:$0xff]
    %v682 = vld [vmem:[%s2 + $0x1428] sm:$0xff]
    %v683 = vld [vmem:[%s2 + $0x1430] sm:$0xff]
    %v684 = vld [vmem:[%s2 + $0x1438] sm:$0xff]
    %v685 = vld [vmem:[%s2 + $0x1440] sm:$0xff]
    %v686 = vld [vmem:[%s2 + $0x1448] sm:$0xff]
    %v687 = vld [vmem:[%s2 + $0x1450] sm:$0xff]
    %v688 = vld [vmem:[%s2 + $0x1458] sm:$0xff]
    %v689 = vld [vmem:[%s2 + $0x1460] sm:$0xff]
    %v690 = vld [vmem:[%s2 + $0x1468] sm:$0xff]
    %v691 = vld [vmem:[%s2 + $0x1470] sm:$0xff]
    %v692 = vld [vmem:[%s2 + $0x1478] sm:$0xff]
    %v693 = vld [vmem:[%s2 + $0x1480] sm:$0xff]
    %v694 = vld [vmem:[%s2 + $0x1488] sm:$0xff]
    %v695 = vld [vmem:[%s2 + $0x1490] sm:$0xff]
    %v696 = vld [vmem:[%s2 + $0x1498] sm:$0xff]
    %v697 = vld [vmem:[%s2 + $0x14a0] sm:$0xff]
    %v698 = vld [vmem:[%s2 + $0x14a8] sm:$0xff]
    %v699 = vld [vmem:[%s2 + $0x14b0] sm:$0xff]
    %v700 = vld [vmem:[%s2 + $0x14b8] sm:$0xff]
    %v701 = vld [vmem:[%s2 + $0x14c0] sm:$0xff]
    %v702 = vld [vmem:[%s2 + $0x14c8] sm:$0xff]
    %v703 = vld [vmem:[%s2 + $0x14d0] sm:$0xff]
    %v704 = vld [vmem:[%s2 + $0x14d8] sm:$0xff]
    %v705 = vld [vmem:[%s2 + $0x14e0] sm:$0xff]
    %v706 = vld [vmem:[%s2 + $0x14e8] sm:$0xff]
    %v707 = vld [vmem:[%s2 + $0x14f0] sm:$0xff]
    %v708 = vld [vmem:[%s2 + $0x14f8] sm:$0xff]
    %v709 = vld [vmem:[%s2 + $0x1500] sm:$0xff]
    %v710 = vld [vmem:[%s2 + $0x1508] sm:$0xff]
    %v711 = vld [vmem:[%s2 + $0x1510] sm:$0xff]
    %v712 = vld [vmem:[%s2 + $0x1518] sm:$0xff]
    %v713 = vld [vmem:[%s2 + $0x1520] sm:$0xff]
    %v714 = vld [vmem:[%s2 + $0x1528] sm:$0xff]
    %v715 = vld [vmem:[%s2 + $0x1530] sm:$0xff]
    %v716 = vld [vmem:[%s2 + $0x1538] sm:$0xff]
    %v717 = vld [vmem:[%s2 + $0x1540] sm:$0xff]
    %v718 = vld [vmem:[%s2 + $0x1548] sm:$0xff]
    %v719 = vld [vmem:[%s2 + $0x1550] sm:$0xff]
    %v720 = vld [vmem:[%s2 + $0x1558] sm:$0xff]
    %v721 = vld [vmem:[%s2 + $0x1560] sm:$0xff]
    %v722 = vld [vmem:[%s2 + $0x1568] sm:$0xff]
    %v723 = vld [vmem:[%s2 + $0x1570] sm:$0xff]
    %v724 = vld [vmem:[%s2 + $0x1578] sm:$0xff]
    %v725 = vld [vmem:[%s2 + $0x1580] sm:$0xff]
    %v726 = vld [vmem:[%s2 + $0x1588] sm:$0xff]
    %v727 = vld [vmem:[%s2 + $0x1590] sm:$0xff]
    %v728 = vld [vmem:[%s2 + $0x1598] sm:$0xff]
    %v729 = vld [vmem:[%s2 + $0x15a0] sm:$0xff]
    %v730 = vld [vmem:[%s2 + $0x15a8] sm:$0xff]
    %v731 = vld [vmem:[%s2 + $0x15b0] sm:$0xff]
    %v732 = vld [vmem:[%s2 + $0x15b8] sm:$0xff]
    %v733 = vld [vmem:[%s2 + $0x15c0] sm:$0xff]
    %v734 = vld [vmem:[%s2 + $0x15c8] sm:$0xff]
    %v735 = vld [vmem:[%s2 + $0x15d0] sm:$0xff]
    %v736 = vld [vmem:[%s2 + $0x15d8] sm:$0xff]
    %v737 = vld [vmem:[%s2 + $0x15e0] sm:$0xff]
    %v738 = vld [vmem:[%s2 + $0x15e8] sm:$0xff]
    %v739 = vld [vmem:[%s2 + $0x15f0] sm:$0xff]
    %v740 = vld [vmem:[%s2 + $0x15f8] sm:$0xff]
    %v741 = vld [vmem:[%s2 + $0x1600] sm:$0xff]
    %v742 = vld [vmem:[%s2 + $0x1608] sm:$0xff]
    %v743 = vld [vmem:[%s2 + $0x1610] sm:$0xff]
    %v744 = vld [vmem:[%s2 + $0x1618] sm:$0xff]
    %v745 = vld [vmem:[%s2 + $0x1620] sm:$0xff]
    %v746 = vld [vmem:[%s2 + $0x1628] sm:$0xff]
    %v747 = vld [vmem:[%s2 + $0x1630] sm:$0xff]
    %v748 = vld [vmem:[%s2 + $0x1638] sm:$0xff]
    %v749 = vld [vmem:[%s2 + $0x1640] sm:$0xff]
    %v750 = vld [vmem:[%s2 + $0x1648] sm:$0xff]
    %v751 = vld [vmem:[%s2 + $0x1650] sm:$0xff]
    %v752 = vld [vmem:[%s2 + $0x1658] sm:$0xff]
    %v753 = vld [vmem:[%s2 + $0x1660] sm:$0xff]
    %v754 = vld [vmem:[%s2 + $0x1668] sm:$0xff]
    %v755 = vld [vmem:[%s2 + $0x1670] sm:$0xff]
    %v756 = vld [vmem:[%s2 + $0x1678] sm:$0xff]
    %v757 = vld [vmem:[%s2 + $0x1680] sm:$0xff]
    %v758 = vld [vmem:[%s2 + $0x1688] sm:$0xff]
    %v759 = vld [vmem:[%s2 + $0x1690] sm:$0xff]
    %v760 = vld [vmem:[%s2 + $0x1698] sm:$0xff]
    %v761 = vld [vmem:[%s2 + $0x16a0] sm:$0xff]
    %v762 = vld [vmem:[%s2 + $0x16a8] sm:$0xff]
    %v763 = vld [vmem:[%s2 + $0x16b0] sm:$0xff]
    %v764 = vld [vmem:[%s2 + $0x16b8] sm:$0xff]
    %v765 = vld [vmem:[%s2 + $0x16c0] sm:$0xff]
    %v766 = vld [vmem:[%s2 + $0x16c8] sm:$0xff]
    %v767 = vld [vmem:[%s2 + $0x16d0] sm:$0xff]
    %v768 = vld [vmem:[%s2 + $0x16d8] sm:$0xff]
    %v769 = vld [vmem:[%s2 + $0x16e0] sm:$0xff]
    %v770 = vld [vmem:[%s2 + $0x16e8] sm:$0xff]
    %v771 = vld [vmem:[%s2 + $0x16f0] sm:$0xff]
    %v772 = vld [vmem:[%s2 + $0x16f8] sm:$0xff]
    %v773 = vld [vmem:[%s2 + $0x1700] sm:$0xff]
    %v774 = vld [vmem:[%s2 + $0x1708] sm:$0xff]
    %v775 = vld [vmem:[%s2 + $0x1710] sm:$0xff]
    %v776 = vld [vmem:[%s2 + $0x1718] sm:$0xff]
    %v777 = vld [vmem:[%s2 + $0x1720] sm:$0xff]
    %v778 = vld [vmem:[%s2 + $0x1728] sm:$0xff]
    %v779 = vld [vmem:[%s2 + $0x1730] sm:$0xff]
    %v780 = vld [vmem:[%s2 + $0x1738] sm:$0xff]
    %v781 = vld [vmem:[%s2 + $0x1740] sm:$0xff]
    %v782 = vld [vmem:[%s2 + $0x1748] sm:$0xff]
    %v783 = vld [vmem:[%s2 + $0x1750] sm:$0xff]
    %v784 = vld [vmem:[%s2 + $0x1758] sm:$0xff]
    %v785 = vld [vmem:[%s2 + $0x1760] sm:$0xff]
    %v786 = vld [vmem:[%s2 + $0x1768] sm:$0xff]
    %v787 = vld [vmem:[%s2 + $0x1770] sm:$0xff]
    %v788 = vld [vmem:[%s2 + $0x1778] sm:$0xff]
    %v789 = vld [vmem:[%s2 + $0x1780] sm:$0xff]
    %v790 = vld [vmem:[%s2 + $0x1788] sm:$0xff]
    %v791 = vld [vmem:[%s2 + $0x1790] sm:$0xff]
    %v792 = vld [vmem:[%s2 + $0x1798] sm:$0xff]
    %v793 = vld [vmem:[%s2 + $0x17a0] sm:$0xff]
    %v794 = vld [vmem:[%s2 + $0x17a8] sm:$0xff]
    %v795 = vld [vmem:[%s2 + $0x17b0] sm:$0xff]
    %v796 = vld [vmem:[%s2 + $0x17b8] sm:$0xff]
    %v797 = vld [vmem:[%s2 + $0x17c0] sm:$0xff]
    %v798 = vld [vmem:[%s2 + $0x17c8] sm:$0xff]
    %v799 = vld [vmem:[%s2 + $0x17d0] sm:$0xff]
    %v800 = vld [vmem:[%s2 + $0x17d8] sm:$0xff]
    %v801 = vld [vmem:[%s2 + $0x17e0] sm:$0xff]
    %v802 = vld [vmem:[%s2 + $0x17e8] sm:$0xff]
    %v803 = vld [vmem:[%s2 + $0x17f0] sm:$0xff]
    %v804 = vld [vmem:[%s2 + $0x17f8] sm:$0xff]
    %v805 = vld [vmem:[%s2 + $0x1800] sm:$0xff]
    %v806 = vld [vmem:[%s2 + $0x1808] sm:$0xff]
    %v807 = vld [vmem:[%s2 + $0x1810] sm:$0xff]
    %v808 = vld [vmem:[%s2 + $0x1818] sm:$0xff]
    %v809 = vld [vmem:[%s2 + $0x1820] sm:$0xff]
    %v810 = vld [vmem:[%s2 + $0x1828] sm:$0xff]
    %v811 = vld [vmem:[%s2 + $0x1830] sm:$0xff]
    %v812 = vld [vmem:[%s2 + $0x1838] sm:$0xff]
    %v813 = vld [vmem:[%s2 + $0x1840] sm:$0xff]
    %v814 = vld [vmem:[%s2 + $0x1848] sm:$0xff]
    %v815 = vld [vmem:[%s2 + $0x1850] sm:$0xff]
    %v816 = vld [vmem:[%s2 + $0x1858] sm:$0xff]
    %v817 = vld [vmem:[%s2 + $0x1860] sm:$0xff]
    %v818 = vld [vmem:[%s2 + $0x1868] sm:$0xff]
    %v819 = vld [vmem:[%s2 + $0x1870] sm:$0xff]
    %v820 = vld [vmem:[%s2 + $0x1878] sm:$0xff]
    %v821 = vld [vmem:[%s2 + $0x1880] sm:$0xff]
    %v822 = vld [vmem:[%s2 + $0x1888] sm:$0xff]
    %v823 = vld [vmem:[%s2 + $0x1890] sm:$0xff]
    %v824 = vld [vmem:[%s2 + $0x1898] sm:$0xff]
    %v825 = vld [vmem:[%s2 + $0x18a0] sm:$0xff]
    %v826 = vld [vmem:[%s2 + $0x18a8] sm:$0xff]
    %v827 = vld [vmem:[%s2 + $0x18b0] sm:$0xff]
    %v828 = vld [vmem:[%s2 + $0x18b8] sm:$0xff]
    %v829 = vld [vmem:[%s2 + $0x18c0] sm:$0xff]
    %v830 = vld [vmem:[%s2 + $0x18c8] sm:$0xff]
    %v831 = vld [vmem:[%s2 + $0x18d0] sm:$0xff]
    %v832 = vld [vmem:[%s2 + $0x18d8] sm:$0xff]
    %v833 = vld [vmem:[%s2 + $0x18e0] sm:$0xff]
    %v834 = vld [vmem:[%s2 + $0x18e8] sm:$0xff]
    %v835 = vld [vmem:[%s2 + $0x18f0] sm:$0xff]
    %v836 = vld [vmem:[%s2 + $0x18f8] sm:$0xff]
    %v837 = vld [vmem:[%s2 + $0x1900] sm:$0xff]
    %v838 = vld [vmem:[%s2 + $0x1908] sm:$0xff]
    %v839 = vld [vmem:[%s2 + $0x1910] sm:$0xff]
    %v840 = vld [vmem:[%s2 + $0x1918] sm:$0xff]
    %v841 = vld [vmem:[%s2 + $0x1920] sm:$0xff]
    %v842 = vld [vmem:[%s2 + $0x1928] sm:$0xff]
    %v843 = vld [vmem:[%s2 + $0x1930] sm:$0xff]
    %v844 = vld [vmem:[%s2 + $0x1938] sm:$0xff]
    %v845 = vld [vmem:[%s2 + $0x1940] sm:$0xff]
    %v846 = vld [vmem:[%s2 + $0x1948] sm:$0xff]
    %v847 = vld [vmem:[%s2 + $0x1950] sm:$0xff]
    %v848 = vld [vmem:[%s2 + $0x1958] sm:$0xff]
    %v849 = vld [vmem:[%s2 + $0x1960] sm:$0xff]
    %v850 = vld [vmem:[%s2 + $0x1968] sm:$0xff]
    %v851 = vld [vmem:[%s2 + $0x1970] sm:$0xff]
    %v852 = vld [vmem:[%s2 + $0x1978] sm:$0xff]
    %v853 = vld [vmem:[%s2 + $0x1980] sm:$0xff]
    %v854 = vld [vmem:[%s2 + $0x1988] sm:$0xff]
    %v855 = vld [vmem:[%s2 + $0x1990] sm:$0xff]
    %v856 = vld [vmem:[%s2 + $0x1998] sm:$0xff]
    %v857 = vld [vmem:[%s2 + $0x19a0] sm:$0xff]
    %v858 = vld [vmem:[%s2 + $0x19a8] sm:$0xff]
    %v859 = vld [vmem:[%s2 + $0x19b0] sm:$0xff]
    %v860 = vld [vmem:[%s2 + $0x19b8] sm:$0xff]
    %v861 = vld [vmem:[%s2 + $0x19c0] sm:$0xff]
    %v862 = vld [vmem:[%s2 + $0x19c8] sm:$0xff]
    %v863 = vld [vmem:[%s2 + $0x19d0] sm:$0xff]
    %v864 = vld [vmem:[%s2 + $0x19d8] sm:$0xff]
    %v865 = vld [vmem:[%s2 + $0x19e0] sm:$0xff]
    %v866 = vld [vmem:[%s2 + $0x19e8] sm:$0xff]
    %v867 = vld [vmem:[%s2 + $0x19f0] sm:$0xff]
    %v868 = vld [vmem:[%s2 + $0x19f8] sm:$0xff]
    %v869 = vld [vmem:[%s2 + $0x1a00] sm:$0xff]
    %v870 = vld [vmem:[%s2 + $0x1a08] sm:$0xff]
    %v871 = vld [vmem:[%s2 + $0x1a10] sm:$0xff]
    %v872 = vld [vmem:[%s2 + $0x1a18] sm:$0xff]
    %v873 = vld [vmem:[%s2 + $0x1a20] sm:$0xff]
    %v874 = vld [vmem:[%s2 + $0x1a28] sm:$0xff]
    %v875 = vld [vmem:[%s2 + $0x1a30] sm:$0xff]
    %v876 = vld [vmem:[%s2 + $0x1a38] sm:$0xff]
    %v877 = vld [vmem:[%s2 + $0x1a40] sm:$0xff]
    %v878 = vld [vmem:[%s2 + $0x1a48] sm:$0xff]
    %v879 = vld [vmem:[%s2 + $0x1a50] sm:$0xff]
    %v880 = vld [vmem:[%s2 + $0x1a58] sm:$0xff]
    %v881 = vld [vmem:[%s2 + $0x1a60] sm:$0xff]
    %v882 = vld [vmem:[%s2 + $0x1a68] sm:$0xff]
    %v883 = vld [vmem:[%s2 + $0x1a70] sm:$0xff]
    %v884 = vld [vmem:[%s2 + $0x1a78] sm:$0xff]
    %v885 = vld [vmem:[%s2 + $0x1a80] sm:$0xff]
    %v886 = vld [vmem:[%s2 + $0x1a88] sm:$0xff]
    %v887 = vld [vmem:[%s2 + $0x1a90] sm:$0xff]
    %v888 = vld [vmem:[%s2 + $0x1a98] sm:$0xff]
    %v889 = vld [vmem:[%s2 + $0x1aa0] sm:$0xff]
    %v890 = vld [vmem:[%s2 + $0x1aa8] sm:$0xff]
    %v891 = vld [vmem:[%s2 + $0x1ab0] sm:$0xff]
    %v892 = vld [vmem:[%s2 + $0x1ab8] sm:$0xff]
    %v893 = vld [vmem:[%s2 + $0x1ac0] sm:$0xff]
    %v894 = vld [vmem:[%s2 + $0x1ac8] sm:$0xff]
    %v895 = vld [vmem:[%s2 + $0x1ad0] sm:$0xff]
    %v896 = vld [vmem:[%s2 + $0x1ad8] sm:$0xff]
    %v897 = vld [vmem:[%s2 + $0x1ae0] sm:$0xff]
    %v898 = vld [vmem:[%s2 + $0x1ae8] sm:$0xff]
    %v899 = vld [vmem:[%s2 + $0x1af0] sm:$0xff]
    %v900 = vld [vmem:[%s2 + $0x1af8] sm:$0xff]
    %v901 = vld [vmem:[%s2 + $0x1b00] sm:$0xff]
    %v902 = vld [vmem:[%s2 + $0x1b08] sm:$0xff]
    %v903 = vld [vmem:[%s2 + $0x1b10] sm:$0xff]
    %v904 = vld [vmem:[%s2 + $0x1b18] sm:$0xff]
    %v905 = vld [vmem:[%s2 + $0x1b20] sm:$0xff]
    %v906 = vld [vmem:[%s2 + $0x1b28] sm:$0xff]
    %v907 = vld [vmem:[%s2 + $0x1b30] sm:$0xff]
    %v908 = vld [vmem:[%s2 + $0x1b38] sm:$0xff]
    %v909 = vld [vmem:[%s2 + $0x1b40] sm:$0xff]
    %v910 = vld [vmem:[%s2 + $0x1b48] sm:$0xff]
    %v911 = vld [vmem:[%s2 + $0x1b50] sm:$0xff]
    %v912 = vld [vmem:[%s2 + $0x1b58] sm:$0xff]
    %v913 = vld [vmem:[%s2 + $0x1b60] sm:$0xff]
    %v914 = vld [vmem:[%s2 + $0x1b68] sm:$0xff]
    %v915 = vld [vmem:[%s2 + $0x1b70] sm:$0xff]
    %v916 = vld [vmem:[%s2 + $0x1b78] sm:$0xff]
    %v917 = vld [vmem:[%s2 + $0x1b80] sm:$0xff]
    %v918 = vld [vmem:[%s2 + $0x1b88] sm:$0xff]
    %v919 = vld [vmem:[%s2 + $0x1b90] sm:$0xff]
    %v920 = vld [vmem:[%s2 + $0x1b98] sm:$0xff]
    %v921 = vld [vmem:[%s2 + $0x1ba0] sm:$0xff]
    %v922 = vld [vmem:[%s2 + $0x1ba8] sm:$0xff]
    %v923 = vld [vmem:[%s2 + $0x1bb0] sm:$0xff]
    %v924 = vld [vmem:[%s2 + $0x1bb8] sm:$0xff]
    %v925 = vld [vmem:[%s2 + $0x1bc0] sm:$0xff]
    %v926 = vld [vmem:[%s2 + $0x1bc8] sm:$0xff]
    %v927 = vld [vmem:[%s2 + $0x1bd0] sm:$0xff]
    %v928 = vld [vmem:[%s2 + $0x1bd8] sm:$0xff]
    %v929 = vld [vmem:[%s2 + $0x1be0] sm:$0xff]
    %v930 = vld [vmem:[%s2 + $0x1be8] sm:$0xff]
    %v931 = vld [vmem:[%s2 + $0x1bf0] sm:$0xff]
    %v932 = vld [vmem:[%s2 + $0x1bf8] sm:$0xff]
    %v933 = vld [vmem:[%s2 + $0x1c00] sm:$0xff]
    %v934 = vld [vmem:[%s2 + $0x1c08] sm:$0xff]
    %v935 = vld [vmem:[%s2 + $0x1c10] sm:$0xff]
    %v936 = vld [vmem:[%s2 + $0x1c18] sm:$0xff]
    %v937 = vld [vmem:[%s2 + $0x1c20] sm:$0xff]
    %v938 = vld [vmem:[%s2 + $0x1c28] sm:$0xff]
    %v939 = vld [vmem:[%s2 + $0x1c30] sm:$0xff]
    %v940 = vld [vmem:[%s2 + $0x1c38] sm:$0xff]
    %v941 = vld [vmem:[%s2 + $0x1c40] sm:$0xff]
    %v942 = vld [vmem:[%s2 + $0x1c48] sm:$0xff]
    %v943 = vld [vmem:[%s2 + $0x1c50] sm:$0xff]
    %v944 = vld [vmem:[%s2 + $0x1c58] sm:$0xff]
    %v945 = vld [vmem:[%s2 + $0x1c60] sm:$0xff]
    %v946 = vld [vmem:[%s2 + $0x1c68] sm:$0xff]
    %v947 = vld [vmem:[%s2 + $0x1c70] sm:$0xff]
    %v948 = vld [vmem:[%s2 + $0x1c78] sm:$0xff]
    %v949 = vld [vmem:[%s2 + $0x1c80] sm:$0xff]
    %v950 = vld [vmem:[%s2 + $0x1c88] sm:$0xff]
    %v951 = vld [vmem:[%s2 + $0x1c90] sm:$0xff]
    %v952 = vld [vmem:[%s2 + $0x1c98] sm:$0xff]
    %v953 = vld [vmem:[%s2 + $0x1ca0] sm:$0xff]
    %v954 = vld [vmem:[%s2 + $0x1ca8] sm:$0xff]
    %v955 = vld [vmem:[%s2 + $0x1cb0] sm:$0xff]
    %v956 = vld [vmem:[%s2 + $0x1cb8] sm:$0xff]
    %v957 = vld [vmem:[%s2 + $0x1cc0] sm:$0xff]
    %v958 = vld [vmem:[%s2 + $0x1cc8] sm:$0xff]
    %v959 = vld [vmem:[%s2 + $0x1cd0] sm:$0xff]
    %v960 = vld [vmem:[%s2 + $0x1cd8] sm:$0xff]
    %v961 = vld [vmem:[%s2 + $0x1ce0] sm:$0xff]
    %v962 = vld [vmem:[%s2 + $0x1ce8] sm:$0xff]
    %v963 = vld [vmem:[%s2 + $0x1cf0] sm:$0xff]
    %v964 = vld [vmem:[%s2 + $0x1cf8] sm:$0xff]
    %v965 = vld [vmem:[%s2 + $0x1d00] sm:$0xff]
    %v966 = vld [vmem:[%s2 + $0x1d08] sm:$0xff]
    %v967 = vld [vmem:[%s2 + $0x1d10] sm:$0xff]
    %v968 = vld [vmem:[%s2 + $0x1d18] sm:$0xff]
    %v969 = vld [vmem:[%s2 + $0x1d20] sm:$0xff]
    %v970 = vld [vmem:[%s2 + $0x1d28] sm:$0xff]
    %v971 = vld [vmem:[%s2 + $0x1d30] sm:$0xff]
    %v972 = vld [vmem:[%s2 + $0x1d38] sm:$0xff]
    %v973 = vld [vmem:[%s2 + $0x1d40] sm:$0xff]
    %v974 = vld [vmem:[%s2 + $0x1d48] sm:$0xff]
    %v975 = vld [vmem:[%s2 + $0x1d50] sm:$0xff]
    %v976 = vld [vmem:[%s2 + $0x1d58] sm:$0xff]
    %v977 = vld [vmem:[%s2 + $0x1d60] sm:$0xff]
    %v978 = vld [vmem:[%s2 + $0x1d68] sm:$0xff]
    %v979 = vld [vmem:[%s2 + $0x1d70] sm:$0xff]
    %v980 = vld [vmem:[%s2 + $0x1d78] sm:$0xff]
    %v981 = vld [vmem:[%s2 + $0x1d80] sm:$0xff]
    %v982 = vld [vmem:[%s2 + $0x1d88] sm:$0xff]
    %v983 = vld [vmem:[%s2 + $0x1d90] sm:$0xff]
    %v984 = vld [vmem:[%s2 + $0x1d98] sm:$0xff]
    %v985 = vld [vmem:[%s2 + $0x1da0] sm:$0xff]
    %v986 = vld [vmem:[%s2 + $0x1da8] sm:$0xff]
    %v987 = vld [vmem:[%s2 + $0x1db0] sm:$0xff]
    %v988 = vld [vmem:[%s2 + $0x1db8] sm:$0xff]
    %v989 = vld [vmem:[%s2 + $0x1dc0] sm:$0xff]
    %v990 = vld [vmem:[%s2 + $0x1dc8] sm:$0xff]
    %v991 = vld [vmem:[%s2 + $0x1dd0] sm:$0xff]
    %v992 = vld [vmem:[%s2 + $0x1dd8] sm:$0xff]
    %v993 = vld [vmem:[%s2 + $0x1de0] sm:$0xff]
    %v994 = vld [vmem:[%s2 + $0x1de8] sm:$0xff]
    %v995 = vld [vmem:[%s2 + $0x1df0] sm:$0xff]
    %v996 = vld [vmem:[%s2 + $0x1df8] sm:$0xff]
    %v997 = vld [vmem:[%s2 + $0x1e00] sm:$0xff]
    %v998 = vld [vmem:[%s2 + $0x1e08] sm:$0xff]
    %v999 = vld [vmem:[%s2 + $0x1e10] sm:$0xff]
    %v1000 = vld [vmem:[%s2 + $0x1e18] sm:$0xff]
    %v1001 = vld [vmem:[%s2 + $0x1e20] sm:$0xff]
    %v1002 = vld [vmem:[%s2 + $0x1e28] sm:$0xff]
    %v1003 = vld [vmem:[%s2 + $0x1e30] sm:$0xff]
    %v1004 = vld [vmem:[%s2 + $0x1e38] sm:$0xff]
    %v1005 = vld [vmem:[%s2 + $0x1e40] sm:$0xff]
    %v1006 = vld [vmem:[%s2 + $0x1e48] sm:$0xff]
    %v1007 = vld [vmem:[%s2 + $0x1e50] sm:$0xff]
    %v1008 = vld [vmem:[%s2 + $0x1e58] sm:$0xff]
    %v1009 = vld [vmem:[%s2 + $0x1e60] sm:$0xff]
    %v1010 = vld [vmem:[%s2 + $0x1e68] sm:$0xff]
    %v1011 = vld [vmem:[%s2 + $0x1e70] sm:$0xff]
    %v1012 = vld [vmem:[%s2 + $0x1e78] sm:$0xff]
    %v1013 = vld [vmem:[%s2 + $0x1e80] sm:$0xff]
    %v1014 = vld [vmem:[%s2 + $0x1e88] sm:$0xff]
    %v1015 = vld [vmem:[%s2 + $0x1e90] sm:$0xff]
    %v1016 = vld [vmem:[%s2 + $0x1e98] sm:$0xff]
    %v1017 = vld [vmem:[%s2 + $0x1ea0] sm:$0xff]
    %v1018 = vld [vmem:[%s2 + $0x1ea8] sm:$0xff]
    %v1019 = vld [vmem:[%s2 + $0x1eb0] sm:$0xff]
    %v1020 = vld [vmem:[%s2 + $0x1eb8] sm:$0xff]
    %v1021 = vld [vmem:[%s2 + $0x1ec0] sm:$0xff]
    %v1022 = vld [vmem:[%s2 + $0x1ec8] sm:$0xff]
    %v1023 = vld [vmem:[%s2 + $0x1ed0] sm:$0xff]
    %v1024 = vld [vmem:[%s2 + $0x1ed8] sm:$0xff]
    %v1025 = vld [vmem:[%s2 + $0x1ee0] sm:$0xff]
    %v1026 = vld [vmem:[%s2 + $0x1ee8] sm:$0xff]
    %v1027 = vld [vmem:[%s2 + $0x1ef0] sm:$0xff]
    %v1028 = vld [vmem:[%s2 + $0x1ef8] sm:$0xff]
    %v1029 = vld [vmem:[%s2 + $0x1f00] sm:$0xff]
    %v1030 = vld [vmem:[%s2 + $0x1f08] sm:$0xff]
    %v1031 = vld [vmem:[%s2 + $0x1f10] sm:$0xff]
    %v1032 = vld [vmem:[%s2 + $0x1f18] sm:$0xff]
    %v1033 = vld [vmem:[%s2 + $0x1f20] sm:$0xff]
    %v1034 = vld [vmem:[%s2 + $0x1f28] sm:$0xff]
    %v1035 = vld [vmem:[%s2 + $0x1f30] sm:$0xff]
    %v1036 = vld [vmem:[%s2 + $0x1f38] sm:$0xff]
    %v1037 = vld [vmem:[%s2 + $0x1f40] sm:$0xff]
    %v1038 = vld [vmem:[%s2 + $0x1f48] sm:$0xff]
    %v1039 = vld [vmem:[%s2 + $0x1f50] sm:$0xff]
    %v1040 = vld [vmem:[%s2 + $0x1f58] sm:$0xff]
    %v1041 = vld [vmem:[%s2 + $0x1f60] sm:$0xff]
    %v1042 = vld [vmem:[%s2 + $0x1f68] sm:$0xff]
    %v1043 = vld [vmem:[%s2 + $0x1f70] sm:$0xff]
    %v1044 = vld [vmem:[%s2 + $0x1f78] sm:$0xff]
    %v1045 = vld [vmem:[%s2 + $0x1f80] sm:$0xff]
    %v1046 = vld [vmem:[%s2 + $0x1f88] sm:$0xff]
    %v1047 = vld [vmem:[%s2 + $0x1f90] sm:$0xff]
    %v1048 = vld [vmem:[%s2 + $0x1f98] sm:$0xff]
    %v1049 = vld [vmem:[%s2 + $0x1fa0] sm:$0xff]
    %v1050 = vld [vmem:[%s2 + $0x1fa8] sm:$0xff]
    %v1051 = vld [vmem:[%s2 + $0x1fb0] sm:$0xff]
    %v1052 = vld [vmem:[%s2 + $0x1fb8] sm:$0xff]
    %v1053 = vld [vmem:[%s2 + $0x1fc0] sm:$0xff]
    %v1054 = vld [vmem:[%s2 + $0x1fc8] sm:$0xff]
    %v1055 = vld [vmem:[%s2 + $0x1fd0] sm:$0xff]
    %v1056 = vld [vmem:[%s2 + $0x1fd8] sm:$0xff]
    %v1057 = vld [vmem:[%s2 + $0x1fe0] sm:$0xff]
    %v1058 = vld [vmem:[%s2 + $0x1fe8] sm:$0xff]
    %v1059 = vld [vmem:[%s2 + $0x1ff0] sm:$0xff]
    %v1060 = vld [vmem:[%s2 + $0x1ff8] sm:$0xff]
    %v1061 = vld [vmem:[%s1] sm:$0xff]
    %v1062 = vld [vmem:[%s1 + $0x8] sm:$0xff]
    %v1063 = vld [vmem:[%s1 + $0x10] sm:$0xff]
    %v1064 = vld [vmem:[%s1 + $0x18] sm:$0xff]
    %v1065 = vld [vmem:[%s1 + $0x20] sm:$0xff]
    %v1066 = vld [vmem:[%s1 + $0x28] sm:$0xff]
    %v1067 = vld [vmem:[%s1 + $0x30] sm:$0xff]
    %v1068 = vld [vmem:[%s1 + $0x38] sm:$0xff]
    %v1069 = vld [vmem:[%s1 + $0x40] sm:$0xff]
    %v1070 = vld [vmem:[%s1 + $0x48] sm:$0xff]
    %v1071 = vld [vmem:[%s1 + $0x50] sm:$0xff]
    %v1072 = vld [vmem:[%s1 + $0x58] sm:$0xff]
    %v1073 = vld [vmem:[%s1 + $0x60] sm:$0xff]
    %v1074 = vld [vmem:[%s1 + $0x68] sm:$0xff]
    %v1075 = vld [vmem:[%s1 + $0x70] sm:$0xff]
    %v1076 = vld [vmem:[%s1 + $0x78] sm:$0xff]
    %v1077 = vld [vmem:[%s3] sm:$0x1]
    %v1079 = vlaneseq
    %v1080 = vshrl.u32 %v1079, 7
    %v1081 = vsub.s32 0, %v1080
    %v1082 = vrot.slane %v1077, %v1081
    %v1100 = vcombine.high %v21, %v21
    %v1102 = vunpack.c.l.s4 1983009808
    %v1103 = vunpack.c.0.s8 %v1102
    %v1104 = vlaneseq
    %v1105 = vshrl.u32 %v1104, 7
    %v1106 = vsub.s32 %v1103, %v1105
    %v1107 = vrot.slane %v21, %v1106
    %v1109 = vunpack.c.l.s4 1983009808
    %v1110 = vunpack.c.0.s8 %v1109
    %v1111 = vlaneseq
    %v1112 = vshrl.u32 %v1111, 7
    %v1113 = vsub.s32 %v1110, %v1112
    %v1114 = vrot.slane %v1100, %v1113
    %v1115 = vcombine.high %v1107, %v1107
    %v1116 = vcombine.high %v1114, %v1114
    %v1117 = vcombine.high %v22, %v22
    %v1119 = vunpack.c.l.s4 1983009808
    %v1120 = vunpack.c.0.s8 %v1119
    %v1121 = vlaneseq
    %v1122 = vshrl.u32 %v1121, 7
    %v1123 = vsub.s32 %v1120, %v1122
    %v1124 = vrot.slane %v22, %v1123
    %v1126 = vunpack.c.l.s4 1983009808
    %v1127 = vunpack.c.0.s8 %v1126
    %v1128 = vlaneseq
    %v1129 = vshrl.u32 %v1128, 7
    %v1130 = vsub.s32 %v1127, %v1129
    %v1131 = vrot.slane %v1117, %v1130
    %v1132 = vcombine.high %v1124, %v1124
    %v1133 = vcombine.high %v1131, %v1131
    %v1134 = vcombine.high %v23, %v23
    %v1136 = vunpack.c.l.s4 1983009808
    %v1137 = vunpack.c.0.s8 %v1136
    %v1138 = vlaneseq
    %v1139 = vshrl.u32 %v1138, 7
    %v1140 = vsub.s32 %v1137, %v1139
    %v1141 = vrot.slane %v23, %v1140
    %v1143 = vunpack.c.l.s4 1983009808
    %v1144 = vunpack.c.0.s8 %v1143
    %v1145 = vlaneseq
    %v1146 = vshrl.u32 %v1145, 7
    %v1147 = vsub.s32 %v1144, %v1146
    %v1148 = vrot.slane %v1134, %v1147
    %v1149 = vcombine.high %v1141, %v1141
    %v1150 = vcombine.high %v1148, %v1148
    %v1151 = vcombine.high %v24, %v24
    %v1153 = vunpack.c.l.s4 1983009808
    %v1154 = vunpack.c.0.s8 %v1153
    %v1155 = vlaneseq
    %v1156 = vshrl.u32 %v1155, 7
    %v1157 = vsub.s32 %v1154, %v1156
    %v1158 = vrot.slane %v24, %v1157
    %v1160 = vunpack.c.l.s4 1983009808
    %v1161 = vunpack.c.0.s8 %v1160
    %v1162 = vlaneseq
    %v1163 = vshrl.u32 %v1162, 7
    %v1164 = vsub.s32 %v1161, %v1163
    %v1165 = vrot.slane %v1151, %v1164
    %v1166 = vcombine.high %v1158, %v1158
    %v1167 = vcombine.high %v1165, %v1165
    %v1168 = vcombine.high %v25, %v25
    %v1170 = vunpack.c.l.s4 1983009808
    %v1171 = vunpack.c.0.s8 %v1170
    %v1172 = vlaneseq
    %v1173 = vshrl.u32 %v1172, 7
    %v1174 = vsub.s32 %v1171, %v1173
    %v1175 = vrot.slane %v25, %v1174
    %v1177 = vunpack.c.l.s4 1983009808
    %v1178 = vunpack.c.0.s8 %v1177
    %v1179 = vlaneseq
    %v1180 = vshrl.u32 %v1179, 7
    %v1181 = vsub.s32 %v1178, %v1180
    %v1182 = vrot.slane %v1168, %v1181
    %v1183 = vcombine.high %v1175, %v1175
    %v1184 = vcombine.high %v1182, %v1182
    %v1185 = vcombine.high %v26, %v26
    %v1187 = vunpack.c.l.s4 1983009808
    %v1188 = vunpack.c.0.s8 %v1187
    %v1189 = vlaneseq
    %v1190 = vshrl.u32 %v1189, 7
    %v1191 = vsub.s32 %v1188, %v1190
    %v1192 = vrot.slane %v26, %v1191
    %v1194 = vunpack.c.l.s4 1983009808
    %v1195 = vunpack.c.0.s8 %v1194
    %v1196 = vlaneseq
    %v1197 = vshrl.u32 %v1196, 7
    %v1198 = vsub.s32 %v1195, %v1197
    %v1199 = vrot.slane %v1185, %v1198
    %v1200 = vcombine.high %v1192, %v1192
    %v1201 = vcombine.high %v1199, %v1199
    %v1202 = vcombine.high %v27, %v27
    %v1204 = vunpack.c.l.s4 1983009808
    %v1205 = vunpack.c.0.s8 %v1204
    %v1206 = vlaneseq
    %v1207 = vshrl.u32 %v1206, 7
    %v1208 = vsub.s32 %v1205, %v1207
    %v1209 = vrot.slane %v27, %v1208
    %v1211 = vunpack.c.l.s4 1983009808
    %v1212 = vunpack.c.0.s8 %v1211
    %v1213 = vlaneseq
    %v1214 = vshrl.u32 %v1213, 7
    %v1215 = vsub.s32 %v1212, %v1214
    %v1216 = vrot.slane %v1202, %v1215
    %v1217 = vcombine.high %v1209, %v1209
    %v1218 = vcombine.high %v1216, %v1216
    %v1219 = vcombine.high %v28, %v28
    %v1221 = vunpack.c.l.s4 1983009808
    %v1222 = vunpack.c.0.s8 %v1221
    %v1223 = vlaneseq
    %v1224 = vshrl.u32 %v1223, 7
    %v1225 = vsub.s32 %v1222, %v1224
    %v1226 = vrot.slane %v28, %v1225
    %v1228 = vunpack.c.l.s4 1983009808
    %v1229 = vunpack.c.0.s8 %v1228
    %v1230 = vlaneseq
    %v1231 = vshrl.u32 %v1230, 7
    %v1232 = vsub.s32 %v1229, %v1231
    %v1233 = vrot.slane %v1219, %v1232
    %v1234 = vcombine.high %v1226, %v1226
    %v1235 = vcombine.high %v1233, %v1233
    %v1236 = vcombine.high %v29, %v29
    %v1238 = vunpack.c.l.s4 1983009808
    %v1239 = vunpack.c.0.s8 %v1238
    %v1240 = vlaneseq
    %v1241 = vshrl.u32 %v1240, 7
    %v1242 = vsub.s32 %v1239, %v1241
    %v1243 = vrot.slane %v29, %v1242
    %v1245 = vunpack.c.l.s4 1983009808
    %v1246 = vunpack.c.0.s8 %v1245
    %v1247 = vlaneseq
    %v1248 = vshrl.u32 %v1247, 7
    %v1249 = vsub.s32 %v1246, %v1248
    %v1250 = vrot.slane %v1236, %v1249
    %v1251 = vcombine.high %v1243, %v1243
    %v1252 = vcombine.high %v1250, %v1250
    %v1253 = vcombine.high %v30, %v30
    %v1255 = vunpack.c.l.s4 1983009808
    %v1256 = vunpack.c.0.s8 %v1255
    %v1257 = vlaneseq
    %v1258 = vshrl.u32 %v1257, 7
    %v1259 = vsub.s32 %v1256, %v1258
    %v1260 = vrot.slane %v30, %v1259
    %v1262 = vunpack.c.l.s4 1983009808
    %v1263 = vunpack.c.0.s8 %v1262
    %v1264 = vlaneseq
    %v1265 = vshrl.u32 %v1264, 7
    %v1266 = vsub.s32 %v1263, %v1265
    %v1267 = vrot.slane %v1253, %v1266
    %v1268 = vcombine.high %v1260, %v1260
    %v1269 = vcombine.high %v1267, %v1267
    %v1270 = vcombine.high %v31, %v31
    %v1272 = vunpack.c.l.s4 1983009808
    %v1273 = vunpack.c.0.s8 %v1272
    %v1274 = vlaneseq
    %v1275 = vshrl.u32 %v1274, 7
    %v1276 = vsub.s32 %v1273, %v1275
    %v1277 = vrot.slane %v31, %v1276
    %v1279 = vunpack.c.l.s4 1983009808
    %v1280 = vunpack.c.0.s8 %v1279
    %v1281 = vlaneseq
    %v1282 = vshrl.u32 %v1281, 7
    %v1283 = vsub.s32 %v1280, %v1282
    %v1284 = vrot.slane %v1270, %v1283
    %v1285 = vcombine.high %v1277, %v1277
    %v1286 = vcombine.high %v1284, %v1284
    %v1287 = vcombine.high %v32, %v32
    %v1289 = vunpack.c.l.s4 1983009808
    %v1290 = vunpack.c.0.s8 %v1289
    %v1291 = vlaneseq
    %v1292 = vshrl.u32 %v1291, 7
    %v1293 = vsub.s32 %v1290, %v1292
    %v1294 = vrot.slane %v32, %v1293
    %v1296 = vunpack.c.l.s4 1983009808
    %v1297 = vunpack.c.0.s8 %v1296
    %v1298 = vlaneseq
    %v1299 = vshrl.u32 %v1298, 7
    %v1300 = vsub.s32 %v1297, %v1299
    %v1301 = vrot.slane %v1287, %v1300
    %v1302 = vcombine.high %v1294, %v1294
    %v1303 = vcombine.high %v1301, %v1301
    %v1304 = vcombine.high %v33, %v33
    %v1306 = vunpack.c.l.s4 1983009808
    %v1307 = vunpack.c.0.s8 %v1306
    %v1308 = vlaneseq
    %v1309 = vshrl.u32 %v1308, 7
    %v1310 = vsub.s32 %v1307, %v1309
    %v1311 = vrot.slane %v33, %v1310
    %v1313 = vunpack.c.l.s4 1983009808
    %v1314 = vunpack.c.0.s8 %v1313
    %v1315 = vlaneseq
    %v1316 = vshrl.u32 %v1315, 7
    %v1317 = vsub.s32 %v1314, %v1316
    %v1318 = vrot.slane %v1304, %v1317
    %v1319 = vcombine.high %v1311, %v1311
    %v1320 = vcombine.high %v1318, %v1318
    %v1321 = vcombine.high %v34, %v34
    %v1323 = vunpack.c.l.s4 1983009808
    %v1324 = vunpack.c.0.s8 %v1323
    %v1325 = vlaneseq
    %v1326 = vshrl.u32 %v1325, 7
    %v1327 = vsub.s32 %v1324, %v1326
    %v1328 = vrot.slane %v34, %v1327
    %v1330 = vunpack.c.l.s4 1983009808
    %v1331 = vunpack.c.0.s8 %v1330
    %v1332 = vlaneseq
    %v1333 = vshrl.u32 %v1332, 7
    %v1334 = vsub.s32 %v1331, %v1333
    %v1335 = vrot.slane %v1321, %v1334
    %v1336 = vcombine.high %v1328, %v1328
    %v1337 = vcombine.high %v1335, %v1335
    %v1338 = vcombine.high %v35, %v35
    %v1340 = vunpack.c.l.s4 1983009808
    %v1341 = vunpack.c.0.s8 %v1340
    %v1342 = vlaneseq
    %v1343 = vshrl.u32 %v1342, 7
    %v1344 = vsub.s32 %v1341, %v1343
    %v1345 = vrot.slane %v35, %v1344
    %v1347 = vunpack.c.l.s4 1983009808
    %v1348 = vunpack.c.0.s8 %v1347
    %v1349 = vlaneseq
    %v1350 = vshrl.u32 %v1349, 7
    %v1351 = vsub.s32 %v1348, %v1350
    %v1352 = vrot.slane %v1338, %v1351
    %v1353 = vcombine.high %v1345, %v1345
    %v1354 = vcombine.high %v1352, %v1352
    %v1355 = vcombine.high %v36, %v36
    %v1357 = vunpack.c.l.s4 1983009808
    %v1358 = vunpack.c.0.s8 %v1357
    %v1359 = vlaneseq
    %v1360 = vshrl.u32 %v1359, 7
    %v1361 = vsub.s32 %v1358, %v1360
    %v1362 = vrot.slane %v36, %v1361
    %v1364 = vunpack.c.l.s4 1983009808
    %v1365 = vunpack.c.0.s8 %v1364
    %v1366 = vlaneseq
    %v1367 = vshrl.u32 %v1366, 7
    %v1368 = vsub.s32 %v1365, %v1367
    %v1369 = vrot.slane %v1355, %v1368
    %v1370 = vcombine.high %v1362, %v1362
    %v1371 = vcombine.high %v1369, %v1369
    %1436 = vmatprep.subr.mxu0 0.0
    %1437 = vmatpush1.msra.mxu0 %v37
    %1438 = vmatprep.subr.mxu0 0.0
    %1439 = vmatpush1.msra.mxu0 %v38
    %1440 = vmatprep.subr.mxu0 0.0
    %1441 = vmatpush1.msra.mxu0 %v39
    %1442 = vmatprep.subr.mxu0 0.0
    %1443 = vmatpush1.msra.mxu0 %v40
    %1444 = vmatprep.subr.mxu0 0.0
    %1445 = vmatpush1.msra.mxu0 %v41
    %1446 = vmatprep.subr.mxu0 0.0
    %1447 = vmatpush1.msra.mxu0 %v42
    %1448 = vmatprep.subr.mxu0 0.0
    %1449 = vmatpush1.msra.mxu0 %v43
    %1450 = vmatprep.subr.mxu0 0.0
    %1451 = vmatpush1.msra.mxu0 %v44
    %1452 = vmatprep.subr.mxu0 0.0
    %1453 = vmatpush1.msra.mxu0 %v45
    %1454 = vmatprep.subr.mxu0 0.0
    %1455 = vmatpush1.msra.mxu0 %v46
    %1456 = vmatprep.subr.mxu0 0.0
    %1457 = vmatpush1.msra.mxu0 %v47
    %1458 = vmatprep.subr.mxu0 0.0
    %1459 = vmatpush1.msra.mxu0 %v48
    %1460 = vmatprep.subr.mxu0 0.0
    %1461 = vmatpush1.msra.mxu0 %v49
    %1462 = vmatprep.subr.mxu0 0.0
    %1463 = vmatpush1.msra.mxu0 %v50
    %1464 = vmatprep.subr.mxu0 0.0
    %1465 = vmatpush1.msra.mxu0 %v51
    %1466 = vmatprep.subr.mxu0 0.0
    %1467 = vmatpush1.msra.mxu0 %v52
    %1468 = vmatprep.subr.mxu0 0.0
    %1469 = vmatpush1.msra.mxu0 %v53
    %1470 = vmatprep.subr.mxu0 0.0
    %1471 = vmatpush1.msra.mxu0 %v54
    %1472 = vmatprep.subr.mxu0 0.0
    %1473 = vmatpush1.msra.mxu0 %v55
    %1474 = vmatprep.subr.mxu0 0.0
    %1475 = vmatpush1.msra.mxu0 %v56
    %1476 = vmatprep.subr.mxu0 0.0
    %1477 = vmatpush1.msra.mxu0 %v57
    %1478 = vmatprep.subr.mxu0 0.0
    %1479 = vmatpush1.msra.mxu0 %v58
    %1480 = vmatprep.subr.mxu0 0.0
    %1481 = vmatpush1.msra.mxu0 %v59
    %1482 = vmatprep.subr.mxu0 0.0
    %1483 = vmatpush1.msra.mxu0 %v60
    %1484 = vmatprep.subr.mxu0 0.0
    %1485 = vmatpush1.msra.mxu0 %v61
    %1486 = vmatprep.subr.mxu0 0.0
    %1487 = vmatpush1.msra.mxu0 %v62
    %1488 = vmatprep.subr.mxu0 0.0
    %1489 = vmatpush1.msra.mxu0 %v63
    %1490 = vmatprep.subr.mxu0 0.0
    %1491 = vmatpush1.msra.mxu0 %v64
    %1492 = vmatprep.subr.mxu0 0.0
    %1493 = vmatpush1.msra.mxu0 %v65
    %1494 = vmatprep.subr.mxu0 0.0
    %1495 = vmatpush1.msra.mxu0 %v66
    %1496 = vmatprep.subr.mxu0 0.0
    %1497 = vmatpush1.msra.mxu0 %v67
    %1498 = vmatprep.subr.mxu0 0.0
    %1499 = vmatpush1.msra.mxu0 %v68
    %1500 = vmatprep.mubr.f32.mxu0 %v1115
    %1501 = vmatmul.mubr.f32.gmra.mrb[0].mxu0 %v1107
    %v1502 = vpop.f32.mrb[0].mxu0
    %v1503 = vadd.f32 %v1082, %v1502
    %v1504 = vpop.f32.mrb[0].mxu0
    %1505 = vdwg.mxu0
    %1506 = vmatprep.subr.mxu0 0.0
    %1507 = vmatpush1.msra.mxu0 %v69
    %1508 = vmatprep.subr.mxu0 0.0
    %1509 = vmatpush1.msra.mxu0 %v70
    %1510 = vmatprep.subr.mxu0 0.0
    %1511 = vmatpush1.msra.mxu0 %v71
    %1512 = vmatprep.subr.mxu0 0.0
    %1513 = vmatpush1.msra.mxu0 %v72
    %1514 = vmatprep.subr.mxu0 0.0
    %1515 = vmatpush1.msra.mxu0 %v73
    %1516 = vmatprep.subr.mxu0 0.0
    %1517 = vmatpush1.msra.mxu0 %v74
    %1518 = vmatprep.subr.mxu0 0.0
    %1519 = vmatpush1.msra.mxu0 %v75
    %1520 = vmatprep.subr.mxu0 0.0
    %1521 = vmatpush1.msra.mxu0 %v76
    %1522 = vmatprep.subr.mxu0 0.0
    %1523 = vmatpush1.msra.mxu0 %v77
    %1524 = vmatprep.subr.mxu0 0.0
    %1525 = vmatpush1.msra.mxu0 %v78
    %1526 = vmatprep.subr.mxu0 0.0
    %1527 = vmatpush1.msra.mxu0 %v79
    %1528 = vmatprep.subr.mxu0 0.0
    %1529 = vmatpush1.msra.mxu0 %v80
    %1530 = vmatprep.subr.mxu0 0.0
    %1531 = vmatpush1.msra.mxu0 %v81
    %1532 = vmatprep.subr.mxu0 0.0
    %1533 = vmatpush1.msra.mxu0 %v82
    %1534 = vmatprep.subr.mxu0 0.0
    %1535 = vmatpush1.msra.mxu0 %v83
    %1536 = vmatprep.subr.mxu0 0.0
    %1537 = vmatpush1.msra.mxu0 %v84
    %1538 = vmatprep.subr.mxu0 0.0
    %1539 = vmatpush1.msra.mxu0 %v85
    %1540 = vmatprep.subr.mxu0 0.0
    %1541 = vmatpush1.msra.mxu0 %v86
    %1542 = vmatprep.subr.mxu0 0.0
    %1543 = vmatpush1.msra.mxu0 %v87
    %1544 = vmatprep.subr.mxu0 0.0
    %1545 = vmatpush1.msra.mxu0 %v88
    %1546 = vmatprep.subr.mxu0 0.0
    %1547 = vmatpush1.msra.mxu0 %v89
    %1548 = vmatprep.subr.mxu0 0.0
    %1549 = vmatpush1.msra.mxu0 %v90
    %1550 = vmatprep.subr.mxu0 0.0
    %1551 = vmatpush1.msra.mxu0 %v91
    %1552 = vmatprep.subr.mxu0 0.0
    %1553 = vmatpush1.msra.mxu0 %v92
    %1554 = vmatprep.subr.mxu0 0.0
    %1555 = vmatpush1.msra.mxu0 %v93
    %1556 = vmatprep.subr.mxu0 0.0
    %1557 = vmatpush1.msra.mxu0 %v94
    %1558 = vmatprep.subr.mxu0 0.0
    %1559 = vmatpush1.msra.mxu0 %v95
    %1560 = vmatprep.subr.mxu0 0.0
    %1561 = vmatpush1.msra.mxu0 %v96
    %1562 = vmatprep.subr.mxu0 0.0
    %1563 = vmatpush1.msra.mxu0 %v97
    %1564 = vmatprep.subr.mxu0 0.0
    %1565 = vmatpush1.msra.mxu0 %v98
    %1566 = vmatprep.subr.mxu0 0.0
    %1567 = vmatpush1.msra.mxu0 %v99
    %1568 = vmatprep.subr.mxu0 0.0
    %1569 = vmatpush1.msra.mxu0 %v100
    %1570 = vmatprep.mubr.f32.mxu0 %v1116
    %1571 = vmatmul.mubr.f32.gmra.mrb[0].mxu0 %v1114
    %v1572 = vpop.f32.mrb[0].mxu0
    %v1573 = vadd.f32 %v1503, %v1572
    %v1574 = vpop.f32.mrb[0].mxu0
    %1575 = vdwg.mxu0
    %1576 = vmatprep.subr.mxu0 0.0
    %1577 = vmatpush1.msra.mxu0 %v101
    %1578 = vmatprep.subr.mxu0 0.0
    %1579 = vmatpush1.msra.mxu0 %v102
    %1580 = vmatprep.subr.mxu0 0.0
    %1581 = vmatpush1.msra.mxu0 %v103
    %1582 = vmatprep.subr.mxu0 0.0
    %1583 = vmatpush1.msra.mxu0 %v104
    %1584 = vmatprep.subr.mxu0 0.0
    %1585 = vmatpush1.msra.mxu0 %v105
    %1586 = vmatprep.subr.mxu0 0.0
    %1587 = vmatpush1.msra.mxu0 %v106
    %1588 = vmatprep.subr.mxu0 0.0
    %1589 = vmatpush1.msra.mxu0 %v107
    %1590 = vmatprep.subr.mxu0 0.0
    %1591 = vmatpush1.msra.mxu0 %v108
    %1592 = vmatprep.subr.mxu0 0.0
    %1593 = vmatpush1.msra.mxu0 %v109
    %1594 = vmatprep.subr.mxu0 0.0
    %1595 = vmatpush1.msra.mxu0 %v110
    %1596 = vmatprep.subr.mxu0 0.0
    %1597 = vmatpush1.msra.mxu0 %v111
    %1598 = vmatprep.subr.mxu0 0.0
    %1599 = vmatpush1.msra.mxu0 %v112
    %1600 = vmatprep.subr.mxu0 0.0
    %1601 = vmatpush1.msra.mxu0 %v113
    %1602 = vmatprep.subr.mxu0 0.0
    %1603 = vmatpush1.msra.mxu0 %v114
    %1604 = vmatprep.subr.mxu0 0.0
    %1605 = vmatpush1.msra.mxu0 %v115
    %1606 = vmatprep.subr.mxu0 0.0
    %1607 = vmatpush1.msra.mxu0 %v116
    %1608 = vmatprep.subr.mxu0 0.0
    %1609 = vmatpush1.msra.mxu0 %v117
    %1610 = vmatprep.subr.mxu0 0.0
    %1611 = vmatpush1.msra.mxu0 %v118
    %1612 = vmatprep.subr.mxu0 0.0
    %1613 = vmatpush1.msra.mxu0 %v119
    %1614 = vmatprep.subr.mxu0 0.0
    %1615 = vmatpush1.msra.mxu0 %v120
    %1616 = vmatprep.subr.mxu0 0.0
    %1617 = vmatpush1.msra.mxu0 %v121
    %1618 = vmatprep.subr.mxu0 0.0
    %1619 = vmatpush1.msra.mxu0 %v122
    %1620 = vmatprep.subr.mxu0 0.0
    %1621 = vmatpush1.msra.mxu0 %v123
    %1622 = vmatprep.subr.mxu0 0.0
    %1623 = vmatpush1.msra.mxu0 %v124
    %1624 = vmatprep.subr.mxu0 0.0
    %1625 = vmatpush1.msra.mxu0 %v125
    %1626 = vmatprep.subr.mxu0 0.0
    %1627 = vmatpush1.msra.mxu0 %v126
    %1628 = vmatprep.subr.mxu0 0.0
    %1629 = vmatpush1.msra.mxu0 %v127
    %1630 = vmatprep.subr.mxu0 0.0
    %1631 = vmatpush1.msra.mxu0 %v128
    %1632 = vmatprep.subr.mxu0 0.0
    %1633 = vmatpush1.msra.mxu0 %v129
    %1634 = vmatprep.subr.mxu0 0.0
    %1635 = vmatpush1.msra.mxu0 %v130
    %1636 = vmatprep.subr.mxu0 0.0
    %1637 = vmatpush1.msra.mxu0 %v131
    %1638 = vmatprep.subr.mxu0 0.0
    %1639 = vmatpush1.msra.mxu0 %v132
    %1640 = vmatprep.mubr.f32.mxu0 %v1132
    %1641 = vmatmul.mubr.f32.gmra.mrb[0].mxu0 %v1124
    %v1642 = vpop.f32.mrb[0].mxu0
    %v1643 = vadd.f32 %v1573, %v1642
    %v1644 = vpop.f32.mrb[0].mxu0
    %1645 = vdwg.mxu0
    %1646 = vmatprep.subr.mxu0 0.0
    %1647 = vmatpush1.msra.mxu0 %v133
    %1648 = vmatprep.subr.mxu0 0.0
    %1649 = vmatpush1.msra.mxu0 %v134
    %1650 = vmatprep.subr.mxu0 0.0
    %1651 = vmatpush1.msra.mxu0 %v135
    %1652 = vmatprep.subr.mxu0 0.0
    %1653 = vmatpush1.msra.mxu0 %v136
    %1654 = vmatprep.subr.mxu0 0.0
    %1655 = vmatpush1.msra.mxu0 %v137
    %1656 = vmatprep.subr.mxu0 0.0
    %1657 = vmatpush1.msra.mxu0 %v138
    %1658 = vmatprep.subr.mxu0 0.0
    %1659 = vmatpush1.msra.mxu0 %v139
    %1660 = vmatprep.subr.mxu0 0.0
    %1661 = vmatpush1.msra.mxu0 %v140
    %1662 = vmatprep.subr.mxu0 0.0
    %1663 = vmatpush1.msra.mxu0 %v141
    %1664 = vmatprep.subr.mxu0 0.0
    %1665 = vmatpush1.msra.mxu0 %v142
    %1666 = vmatprep.subr.mxu0 0.0
    %1667 = vmatpush1.msra.mxu0 %v143
    %1668 = vmatprep.subr.mxu0 0.0
    %1669 = vmatpush1.msra.mxu0 %v144
    %1670 = vmatprep.subr.mxu0 0.0
    %1671 = vmatpush1.msra.mxu0 %v145
    %1672 = vmatprep.subr.mxu0 0.0
    %1673 = vmatpush1.msra.mxu0 %v146
    %1674 = vmatprep.subr.mxu0 0.0
    %1675 = vmatpush1.msra.mxu0 %v147
    %1676 = vmatprep.subr.mxu0 0.0
    %1677 = vmatpush1.msra.mxu0 %v148
    %1678 = vmatprep.subr.mxu0 0.0
    %1679 = vmatpush1.msra.mxu0 %v149
    %1680 = vmatprep.subr.mxu0 0.0
    %1681 = vmatpush1.msra.mxu0 %v150
    %1682 = vmatprep.subr.mxu0 0.0
    %1683 = vmatpush1.msra.mxu0 %v151
    %1684 = vmatprep.subr.mxu0 0.0
    %1685 = vmatpush1.msra.mxu0 %v152
    %1686 = vmatprep.subr.mxu0 0.0
    %1687 = vmatpush1.msra.mxu0 %v153
    %1688 = vmatprep.subr.mxu0 0.0
    %1689 = vmatpush1.msra.mxu0 %v154
    %1690 = vmatprep.subr.mxu0 0.0
    %1691 = vmatpush1.msra.mxu0 %v155
    %1692 = vmatprep.subr.mxu0 0.0
    %1693 = vmatpush1.msra.mxu0 %v156
    %1694 = vmatprep.subr.mxu0 0.0
    %1695 = vmatpush1.msra.mxu0 %v157
    %1696 = vmatprep.subr.mxu0 0.0
    %1697 = vmatpush1.msra.mxu0 %v158
    %1698 = vmatprep.subr.mxu0 0.0
    %1699 = vmatpush1.msra.mxu0 %v159
    %1700 = vmatprep.subr.mxu0 0.0
    %1701 = vmatpush1.msra.mxu0 %v160
    %1702 = vmatprep.subr.mxu0 0.0
    %1703 = vmatpush1.msra.mxu0 %v161
    %1704 = vmatprep.subr.mxu0 0.0
    %1705 = vmatpush1.msra.mxu0 %v162
    %1706 = vmatprep.subr.mxu0 0.0
    %1707 = vmatpush1.msra.mxu0 %v163
    %1708 = vmatprep.subr.mxu0 0.0
    %1709 = vmatpush1.msra.mxu0 %v164
    %1710 = vmatprep.mubr.f32.mxu0 %v1133
    %1711 = vmatmul.mubr.f32.gmra.mrb[0].mxu0 %v1131
    %v1712 = vpop.f32.mrb[0].mxu0
    %v1713 = vadd.f32 %v1643, %v1712
    %v1714 = vpop.f32.mrb[0].mxu0
    %1715 = vdwg.mxu0
    %1716 = vmatprep.subr.mxu0 0.0
    %1717 = vmatpush1.msra.mxu0 %v165
    %1718 = vmatprep.subr.mxu0 0.0
    %1719 = vmatpush1.msra.mxu0 %v166
    %1720 = vmatprep.subr.mxu0 0.0
    %1721 = vmatpush1.msra.mxu0 %v167
    %1722 = vmatprep.subr.mxu0 0.0
    %1723 = vmatpush1.msra.mxu0 %v168
    %1724 = vmatprep.subr.mxu0 0.0
    %1725 = vmatpush1.msra.mxu0 %v169
    %1726 = vmatprep.subr.mxu0 0.0
    %1727 = vmatpush1.msra.mxu0 %v170
    %1728 = vmatprep.subr.mxu0 0.0
    %1729 = vmatpush1.msra.mxu0 %v171
    %1730 = vmatprep.subr.mxu0 0.0
    %1731 = vmatpush1.msra.mxu0 %v172
    %1732 = vmatprep.subr.mxu0 0.0
    %1733 = vmatpush1.msra.mxu0 %v173
    %1734 = vmatprep.subr.mxu0 0.0
    %1735 = vmatpush1.msra.mxu0 %v174
    %1736 = vmatprep.subr.mxu0 0.0
    %1737 = vmatpush1.msra.mxu0 %v175
    %1738 = vmatprep.subr.mxu0 0.0
    %1739 = vmatpush1.msra.mxu0 %v176
    %1740 = vmatprep.subr.mxu0 0.0
    %1741 = vmatpush1.msra.mxu0 %v177
    %1742 = vmatprep.subr.mxu0 0.0
    %1743 = vmatpush1.msra.mxu0 %v178
    %1744 = vmatprep.subr.mxu0 0.0
    %1745 = vmatpush1.msra.mxu0 %v179
    %1746 = vmatprep.subr.mxu0 0.0
    %1747 = vmatpush1.msra.mxu0 %v180
    %1748 = vmatprep.subr.mxu0 0.0
    %1749 = vmatpush1.msra.mxu0 %v181
    %1750 = vmatprep.subr.mxu0 0.0
    %1751 = vmatpush1.msra.mxu0 %v182
    %1752 = vmatprep.subr.mxu0 0.0
    %1753 = vmatpush1.msra.mxu0 %v183
    %1754 = vmatprep.subr.mxu0 0.0
    %1755 = vmatpush1.msra.mxu0 %v184
    %1756 = vmatprep.subr.mxu0 0.0
    %1757 = vmatpush1.msra.mxu0 %v185
    %1758 = vmatprep.subr.mxu0 0.0
    %1759 = vmatpush1.msra.mxu0 %v186
    %1760 = vmatprep.subr.mxu0 0.0
    %1761 = vmatpush1.msra.mxu0 %v187
    %1762 = vmatprep.subr.mxu0 0.0
    %1763 = vmatpush1.msra.mxu0 %v188
    %1764 = vmatprep.subr.mxu0 0.0
    %1765 = vmatpush1.msra.mxu0 %v189
    %1766 = vmatprep.subr.mxu0 0.0
    %1767 = vmatpush1.msra.mxu0 %v190
    %1768 = vmatprep.subr.mxu0 0.0
    %1769 = vmatpush1.msra.mxu0 %v191
    %1770 = vmatprep.subr.mxu0 0.0
    %1771 = vmatpush1.msra.mxu0 %v192
    %1772 = vmatprep.subr.mxu0 0.0
    %1773 = vmatpush1.msra.mxu0 %v193
    %1774 = vmatprep.subr.mxu0 0.0
    %1775 = vmatpush1.msra.mxu0 %v194
    %1776 = vmatprep.subr.mxu0 0.0
    %1777 = vmatpush1.msra.mxu0 %v195
    %1778 = vmatprep.subr.mxu0 0.0
    %1779 = vmatpush1.msra.mxu0 %v196
    %1780 = vmatprep.mubr.f32.mxu0 %v1149
    %1781 = vmatmul.mubr.f32.gmra.mrb[0].mxu0 %v1141
    %v1782 = vpop.f32.mrb[0].mxu0
    %v1783 = vadd.f32 %v1713, %v1782
    %v1784 = vpop.f32.mrb[0].mxu0
    %1785 = vdwg.mxu0
    %1786 = vmatprep.subr.mxu0 0.0
    %1787 = vmatpush1.msra.mxu0 %v197
    %1788 = vmatprep.subr.mxu0 0.0
    %1789 = vmatpush1.msra.mxu0 %v198
    %1790 = vmatprep.subr.mxu0 0.0
    %1791 = vmatpush1.msra.mxu0 %v199
    %1792 = vmatprep.subr.mxu0 0.0
    %1793 = vmatpush1.msra.mxu0 %v200
    %1794 = vmatprep.subr.mxu0 0.0
    %1795 = vmatpush1.msra.mxu0 %v201
    %1796 = vmatprep.subr.mxu0 0.0
    %1797 = vmatpush1.msra.mxu0 %v202
    %1798 = vmatprep.subr.mxu0 0.0
    %1799 = vmatpush1.msra.mxu0 %v203
    %1800 = vmatprep.subr.mxu0 0.0
    %1801 = vmatpush1.msra.mxu0 %v204
    %1802 = vmatprep.subr.mxu0 0.0
    %1803 = vmatpush1.msra.mxu0 %v205
    %1804 = vmatprep.subr.mxu0 0.0
    %1805 = vmatpush1.msra.mxu0 %v206
    %1806 = vmatprep.subr.mxu0 0.0
    %1807 = vmatpush1.msra.mxu0 %v207
    %1808 = vmatprep.subr.mxu0 0.0
    %1809 = vmatpush1.msra.mxu0 %v208
    %1810 = vmatprep.subr.mxu0 0.0
    %1811 = vmatpush1.msra.mxu0 %v209
    %1812 = vmatprep.subr.mxu0 0.0
    %1813 = vmatpush1.msra.mxu0 %v210
    %1814 = vmatprep.subr.mxu0 0.0
    %1815 = vmatpush1.msra.mxu0 %v211
    %1816 = vmatprep.subr.mxu0 0.0
    %1817 = vmatpush1.msra.mxu0 %v212
    %1818 = vmatprep.subr.mxu0 0.0
    %1819 = vmatpush1.msra.mxu0 %v213
    %1820 = vmatprep.subr.mxu0 0.0
    %1821 = vmatpush1.msra.mxu0 %v214
    %1822 = vmatprep.subr.mxu0 0.0
    %1823 = vmatpush1.msra.mxu0 %v215
    %1824 = vmatprep.subr.mxu0 0.0
    %1825 = vmatpush1.msra.mxu0 %v216
    %1826 = vmatprep.subr.mxu0 0.0
    %1827 = vmatpush1.msra.mxu0 %v217
    %1828 = vmatprep.subr.mxu0 0.0
    %1829 = vmatpush1.msra.mxu0 %v218
    %1830 = vmatprep.subr.mxu0 0.0
    %1831 = vmatpush1.msra.mxu0 %v219
    %1832 = vmatprep.subr.mxu0 0.0
    %1833 = vmatpush1.msra.mxu0 %v220
    %1834 = vmatprep.subr.mxu0 0.0
    %1835 = vmatpush1.msra.mxu0 %v221
    %1836 = vmatprep.subr.mxu0 0.0
    %1837 = vmatpush1.msra.mxu0 %v222
    %1838 = vmatprep.subr.mxu0 0.0
    %1839 = vmatpush1.msra.mxu0 %v223
    %1840 = vmatprep.subr.mxu0 0.0
    %1841 = vmatpush1.msra.mxu0 %v224
    %1842 = vmatprep.subr.mxu0 0.0
    %1843 = vmatpush1.msra.mxu0 %v225
    %1844 = vmatprep.subr.mxu0 0.0
    %1845 = vmatpush1.msra.mxu0 %v226
    %1846 = vmatprep.subr.mxu0 0.0
    %1847 = vmatpush1.msra.mxu0 %v227
    %1848 = vmatprep.subr.mxu0 0.0
    %1849 = vmatpush1.msra.mxu0 %v228
    %1850 = vmatprep.mubr.f32.mxu0 %v1150
    %1851 = vmatmul.mubr.f32.gmra.mrb[0].mxu0 %v1148
    %v1852 = vpop.f32.mrb[0].mxu0
    %v1853 = vadd.f32 %v1783, %v1852
    %v1854 = vpop.f32.mrb[0].mxu0
    %1855 = vdwg.mxu0
    %1856 = vmatprep.subr.mxu0 0.0
    %1857 = vmatpush1.msra.mxu0 %v229
    %1858 = vmatprep.subr.mxu0 0.0
    %1859 = vmatpush1.msra.mxu0 %v230
    %1860 = vmatprep.subr.mxu0 0.0
    %1861 = vmatpush1.msra.mxu0 %v231
    %1862 = vmatprep.subr.mxu0 0.0
    %1863 = vmatpush1.msra.mxu0 %v232
    %1864 = vmatprep.subr.mxu0 0.0
    %1865 = vmatpush1.msra.mxu0 %v233
    %1866 = vmatprep.subr.mxu0 0.0
    %1867 = vmatpush1.msra.mxu0 %v234
    %1868 = vmatprep.subr.mxu0 0.0
    %1869 = vmatpush1.msra.mxu0 %v235
    %1870 = vmatprep.subr.mxu0 0.0
    %1871 = vmatpush1.msra.mxu0 %v236
    %1872 = vmatprep.subr.mxu0 0.0
    %1873 = vmatpush1.msra.mxu0 %v237
    %1874 = vmatprep.subr.mxu0 0.0
    %1875 = vmatpush1.msra.mxu0 %v238
    %1876 = vmatprep.subr.mxu0 0.0
    %1877 = vmatpush1.msra.mxu0 %v239
    %1878 = vmatprep.subr.mxu0 0.0
    %1879 = vmatpush1.msra.mxu0 %v240
    %1880 = vmatprep.subr.mxu0 0.0
    %1881 = vmatpush1.msra.mxu0 %v241
    %1882 = vmatprep.subr.mxu0 0.0
    %1883 = vmatpush1.msra.mxu0 %v242
    %1884 = vmatprep.subr.mxu0 0.0
    %1885 = vmatpush1.msra.mxu0 %v243
    %1886 = vmatprep.subr.mxu0 0.0
    %1887 = vmatpush1.msra.mxu0 %v244
    %1888 = vmatprep.subr.mxu0 0.0
    %1889 = vmatpush1.msra.mxu0 %v245
    %1890 = vmatprep.subr.mxu0 0.0
    %1891 = vmatpush1.msra.mxu0 %v246
    %1892 = vmatprep.subr.mxu0 0.0
    %1893 = vmatpush1.msra.mxu0 %v247
    %1894 = vmatprep.subr.mxu0 0.0
    %1895 = vmatpush1.msra.mxu0 %v248
    %1896 = vmatprep.subr.mxu0 0.0
    %1897 = vmatpush1.msra.mxu0 %v249
    %1898 = vmatprep.subr.mxu0 0.0
    %1899 = vmatpush1.msra.mxu0 %v250
    %1900 = vmatprep.subr.mxu0 0.0
    %1901 = vmatpush1.msra.mxu0 %v251
    %1902 = vmatprep.subr.mxu0 0.0
    %1903 = vmatpush1.msra.mxu0 %v252
    %1904 = vmatprep.subr.mxu0 0.0
    %1905 = vmatpush1.msra.mxu0 %v253
    %1906 = vmatprep.subr.mxu0 0.0
    %1907 = vmatpush1.msra.mxu0 %v254
    %1908 = vmatprep.subr.mxu0 0.0
    %1909 = vmatpush1.msra.mxu0 %v255
    %1910 = vmatprep.subr.mxu0 0.0
    %1911 = vmatpush1.msra.mxu0 %v256
    %1912 = vmatprep.subr.mxu0 0.0
    %1913 = vmatpush1.msra.mxu0 %v257
    %1914 = vmatprep.subr.mxu0 0.0
    %1915 = vmatpush1.msra.mxu0 %v258
    %1916 = vmatprep.subr.mxu0 0.0
    %1917 = vmatpush1.msra.mxu0 %v259
    %1918 = vmatprep.subr.mxu0 0.0
    %1919 = vmatpush1.msra.mxu0 %v260
    %1920 = vmatprep.mubr.f32.mxu0 %v1166
    %1921 = vmatmul.mubr.f32.gmra.mrb[0].mxu0 %v1158
    %v1922 = vpop.f32.mrb[0].mxu0
    %v1923 = vadd.f32 %v1853, %v1922
    %v1924 = vpop.f32.mrb[0].mxu0
    %1925 = vdwg.mxu0
    %1926 = vmatprep.subr.mxu0 0.0
    %1927 = vmatpush1.msra.mxu0 %v261
    %1928 = vmatprep.subr.mxu0 0.0
    %1929 = vmatpush1.msra.mxu0 %v262
    %1930 = vmatprep.subr.mxu0 0.0
    %1931 = vmatpush1.msra.mxu0 %v263
    %1932 = vmatprep.subr.mxu0 0.0
    %1933 = vmatpush1.msra.mxu0 %v264
    %1934 = vmatprep.subr.mxu0 0.0
    %1935 = vmatpush1.msra.mxu0 %v265
    %1936 = vmatprep.subr.mxu0 0.0
    %1937 = vmatpush1.msra.mxu0 %v266
    %1938 = vmatprep.subr.mxu0 0.0
    %1939 = vmatpush1.msra.mxu0 %v267
    %1940 = vmatprep.subr.mxu0 0.0
    %1941 = vmatpush1.msra.mxu0 %v268
    %1942 = vmatprep.subr.mxu0 0.0
    %1943 = vmatpush1.msra.mxu0 %v269
    %1944 = vmatprep.subr.mxu0 0.0
    %1945 = vmatpush1.msra.mxu0 %v270
    %1946 = vmatprep.subr.mxu0 0.0
    %1947 = vmatpush1.msra.mxu0 %v271
    %1948 = vmatprep.subr.mxu0 0.0
    %1949 = vmatpush1.msra.mxu0 %v272
    %1950 = vmatprep.subr.mxu0 0.0
    %1951 = vmatpush1.msra.mxu0 %v273
    %1952 = vmatprep.subr.mxu0 0.0
    %1953 = vmatpush1.msra.mxu0 %v274
    %1954 = vmatprep.subr.mxu0 0.0
    %1955 = vmatpush1.msra.mxu0 %v275
    %1956 = vmatprep.subr.mxu0 0.0
    %1957 = vmatpush1.msra.mxu0 %v276
    %1958 = vmatprep.subr.mxu0 0.0
    %1959 = vmatpush1.msra.mxu0 %v277
    %1960 = vmatprep.subr.mxu0 0.0
    %1961 = vmatpush1.msra.mxu0 %v278
    %1962 = vmatprep.subr.mxu0 0.0
    %1963 = vmatpush1.msra.mxu0 %v279
    %1964 = vmatprep.subr.mxu0 0.0
    %1965 = vmatpush1.msra.mxu0 %v280
    %1966 = vmatprep.subr.mxu0 0.0
    %1967 = vmatpush1.msra.mxu0 %v281
    %1968 = vmatprep.subr.mxu0 0.0
    %1969 = vmatpush1.msra.mxu0 %v282
    %1970 = vmatprep.subr.mxu0 0.0
    %1971 = vmatpush1.msra.mxu0 %v283
    %1972 = vmatprep.subr.mxu0 0.0
    %1973 = vmatpush1.msra.mxu0 %v284
    %1974 = vmatprep.subr.mxu0 0.0
    %1975 = vmatpush1.msra.mxu0 %v285
    %1976 = vmatprep.subr.mxu0 0.0
    %1977 = vmatpush1.msra.mxu0 %v286
    %1978 = vmatprep.subr.mxu0 0.0
    %1979 = vmatpush1.msra.mxu0 %v287
    %1980 = vmatprep.subr.mxu0 0.0
    %1981 = vmatpush1.msra.mxu0 %v288
    %1982 = vmatprep.subr.mxu0 0.0
    %1983 = vmatpush1.msra.mxu0 %v289
    %1984 = vmatprep.subr.mxu0 0.0
    %1985 = vmatpush1.msra.mxu0 %v290
    %1986 = vmatprep.subr.mxu0 0.0
    %1987 = vmatpush1.msra.mxu0 %v291
    %1988 = vmatprep.subr.mxu0 0.0
    %1989 = vmatpush1.msra.mxu0 %v292
    %1990 = vmatprep.mubr.f32.mxu0 %v1167
    %1991 = vmatmul.mubr.f32.gmra.mrb[0].mxu0 %v1165
    %v1992 = vpop.f32.mrb[0].mxu0
    %v1993 = vadd.f32 %v1923, %v1992
    %v1994 = vpop.f32.mrb[0].mxu0
    %1995 = vdwg.mxu0
    %1996 = vmatprep.subr.mxu0 0.0
    %1997 = vmatpush1.msra.mxu0 %v293
    %1998 = vmatprep.subr.mxu0 0.0
    %1999 = vmatpush1.msra.mxu0 %v294
    %2000 = vmatprep.subr.mxu0 0.0
    %2001 = vmatpush1.msra.mxu0 %v295
    %2002 = vmatprep.subr.mxu0 0.0
    %2003 = vmatpush1.msra.mxu0 %v296
    %2004 = vmatprep.subr.mxu0 0.0
    %2005 = vmatpush1.msra.mxu0 %v297
    %2006 = vmatprep.subr.mxu0 0.0
    %2007 = vmatpush1.msra.mxu0 %v298
    %2008 = vmatprep.subr.mxu0 0.0
    %2009 = vmatpush1.msra.mxu0 %v299
    %2010 = vmatprep.subr.mxu0 0.0
    %2011 = vmatpush1.msra.mxu0 %v300
    %2012 = vmatprep.subr.mxu0 0.0
    %2013 = vmatpush1.msra.mxu0 %v301
    %2014 = vmatprep.subr.mxu0 0.0
    %2015 = vmatpush1.msra.mxu0 %v302
    %2016 = vmatprep.subr.mxu0 0.0
    %2017 = vmatpush1.msra.mxu0 %v303
    %2018 = vmatprep.subr.mxu0 0.0
    %2019 = vmatpush1.msra.mxu0 %v304
    %2020 = vmatprep.subr.mxu0 0.0
    %2021 = vmatpush1.msra.mxu0 %v305
    %2022 = vmatprep.subr.mxu0 0.0
    %2023 = vmatpush1.msra.mxu0 %v306
    %2024 = vmatprep.subr.mxu0 0.0
    %2025 = vmatpush1.msra.mxu0 %v307
    %2026 = vmatprep.subr.mxu0 0.0
    %2027 = vmatpush1.msra.mxu0 %v308
    %2028 = vmatprep.subr.mxu0 0.0
    %2029 = vmatpush1.msra.mxu0 %v309
    %2030 = vmatprep.subr.mxu0 0.0
    %2031 = vmatpush1.msra.mxu0 %v310
    %2032 = vmatprep.subr.mxu0 0.0
    %2033 = vmatpush1.msra.mxu0 %v311
    %2034 = vmatprep.subr.mxu0 0.0
    %2035 = vmatpush1.msra.mxu0 %v312
    %2036 = vmatprep.subr.mxu0 0.0
    %2037 = vmatpush1.msra.mxu0 %v313
    %2038 = vmatprep.subr.mxu0 0.0
    %2039 = vmatpush1.msra.mxu0 %v314
    %2040 = vmatprep.subr.mxu0 0.0
    %2041 = vmatpush1.msra.mxu0 %v315
    %2042 = vmatprep.subr.mxu0 0.0
    %2043 = vmatpush1.msra.mxu0 %v316
    %2044 = vmatprep.subr.mxu0 0.0
    %2045 = vmatpush1.msra.mxu0 %v317
    %2046 = vmatprep.subr.mxu0 0.0
    %2047 = vmatpush1.msra.mxu0 %v318
    %2048 = vmatprep.subr.mxu0 0.0
    %2049 = vmatpush1.msra.mxu0 %v319
    %2050 = vmatprep.subr.mxu0 0.0
    %2051 = vmatpush1.msra.mxu0 %v320
    %2052 = vmatprep.subr.mxu0 0.0
    %2053 = vmatpush1.msra.mxu0 %v321
    %2054 = vmatprep.subr.mxu0 0.0
    %2055 = vmatpush1.msra.mxu0 %v322
    %2056 = vmatprep.subr.mxu0 0.0
    %2057 = vmatpush1.msra.mxu0 %v323
    %2058 = vmatprep.subr.mxu0 0.0
    %2059 = vmatpush1.msra.mxu0 %v324
    %2060 = vmatprep.mubr.f32.mxu0 %v1183
    %2061 = vmatmul.mubr.f32.gmra.mrb[0].mxu0 %v1175
    %v2062 = vpop.f32.mrb[0].mxu0
    %v2063 = vadd.f32 %v1993, %v2062
    %v2064 = vpop.f32.mrb[0].mxu0
    %2065 = vdwg.mxu0
    %2066 = vmatprep.subr.mxu0 0.0
    %2067 = vmatpush1.msra.mxu0 %v325
    %2068 = vmatprep.subr.mxu0 0.0
    %2069 = vmatpush1.msra.mxu0 %v326
    %2070 = vmatprep.subr.mxu0 0.0
    %2071 = vmatpush1.msra.mxu0 %v327
    %2072 = vmatprep.subr.mxu0 0.0
    %2073 = vmatpush1.msra.mxu0 %v328
    %2074 = vmatprep.subr.mxu0 0.0
    %2075 = vmatpush1.msra.mxu0 %v329
    %2076 = vmatprep.subr.mxu0 0.0
    %2077 = vmatpush1.msra.mxu0 %v330
    %2078 = vmatprep.subr.mxu0 0.0
    %2079 = vmatpush1.msra.mxu0 %v331
    %2080 = vmatprep.subr.mxu0 0.0
    %2081 = vmatpush1.msra.mxu0 %v332
    %2082 = vmatprep.subr.mxu0 0.0
    %2083 = vmatpush1.msra.mxu0 %v333
    %2084 = vmatprep.subr.mxu0 0.0
    %2085 = vmatpush1.msra.mxu0 %v334
    %2086 = vmatprep.subr.mxu0 0.0
    %2087 = vmatpush1.msra.mxu0 %v335
    %2088 = vmatprep.subr.mxu0 0.0
    %2089 = vmatpush1.msra.mxu0 %v336
    %2090 = vmatprep.subr.mxu0 0.0
    %2091 = vmatpush1.msra.mxu0 %v337
    %2092 = vmatprep.subr.mxu0 0.0
    %2093 = vmatpush1.msra.mxu0 %v338
    %2094 = vmatprep.subr.mxu0 0.0
    %2095 = vmatpush1.msra.mxu0 %v339
    %2096 = vmatprep.subr.mxu0 0.0
    %2097 = vmatpush1.msra.mxu0 %v340
    %2098 = vmatprep.subr.mxu0 0.0
    %2099 = vmatpush1.msra.mxu0 %v341
    %2100 = vmatprep.subr.mxu0 0.0
    %2101 = vmatpush1.msra.mxu0 %v342
    %2102 = vmatprep.subr.mxu0 0.0
    %2103 = vmatpush1.msra.mxu0 %v343
    %2104 = vmatprep.subr.mxu0 0.0
    %2105 = vmatpush1.msra.mxu0 %v344
    %2106 = vmatprep.subr.mxu0 0.0
    %2107 = vmatpush1.msra.mxu0 %v345
    %2108 = vmatprep.subr.mxu0 0.0
    %2109 = vmatpush1.msra.mxu0 %v346
    %2110 = vmatprep.subr.mxu0 0.0
    %2111 = vmatpush1.msra.mxu0 %v347
    %2112 = vmatprep.subr.mxu0 0.0
    %2113 = vmatpush1.msra.mxu0 %v348
    %2114 = vmatprep.subr.mxu0 0.0
    %2115 = vmatpush1.msra.mxu0 %v349
    %2116 = vmatprep.subr.mxu0 0.0
    %2117 = vmatpush1.msra.mxu0 %v350
    %2118 = vmatprep.subr.mxu0 0.0
    %2119 = vmatpush1.msra.mxu0 %v351
    %2120 = vmatprep.subr.mxu0 0.0
    %2121 = vmatpush1.msra.mxu0 %v352
    %2122 = vmatprep.subr.mxu0 0.0
    %2123 = vmatpush1.msra.mxu0 %v353
    %2124 = vmatprep.subr.mxu0 0.0
    %2125 = vmatpush1.msra.mxu0 %v354
    %2126 = vmatprep.subr.mxu0 0.0
    %2127 = vmatpush1.msra.mxu0 %v355
    %2128 = vmatprep.subr.mxu0 0.0
    %2129 = vmatpush1.msra.mxu0 %v356
    %2130 = vmatprep.mubr.f32.mxu0 %v1184
    %2131 = vmatmul.mubr.f32.gmra.mrb[0].mxu0 %v1182
    %v2132 = vpop.f32.mrb[0].mxu0
    %v2133 = vadd.f32 %v2063, %v2132
    %v2134 = vpop.f32.mrb[0].mxu0
    %2135 = vdwg.mxu0
    %2136 = vmatprep.subr.mxu0 0.0
    %2137 = vmatpush1.msra.mxu0 %v357
    %2138 = vmatprep.subr.mxu0 0.0
    %2139 = vmatpush1.msra.mxu0 %v358
    %2140 = vmatprep.subr.mxu0 0.0
    %2141 = vmatpush1.msra.mxu0 %v359
    %2142 = vmatprep.subr.mxu0 0.0
    %2143 = vmatpush1.msra.mxu0 %v360
    %2144 = vmatprep.subr.mxu0 0.0
    %2145 = vmatpush1.msra.mxu0 %v361
    %2146 = vmatprep.subr.mxu0 0.0
    %2147 = vmatpush1.msra.mxu0 %v362
    %2148 = vmatprep.subr.mxu0 0.0
    %2149 = vmatpush1.msra.mxu0 %v363
    %2150 = vmatprep.subr.mxu0 0.0
    %2151 = vmatpush1.msra.mxu0 %v364
    %2152 = vmatprep.subr.mxu0 0.0
    %2153 = vmatpush1.msra.mxu0 %v365
    %2154 = vmatprep.subr.mxu0 0.0
    %2155 = vmatpush1.msra.mxu0 %v366
    %2156 = vmatprep.subr.mxu0 0.0
    %2157 = vmatpush1.msra.mxu0 %v367
    %2158 = vmatprep.subr.mxu0 0.0
    %2159 = vmatpush1.msra.mxu0 %v368
    %2160 = vmatprep.subr.mxu0 0.0
    %2161 = vmatpush1.msra.mxu0 %v369
    %2162 = vmatprep.subr.mxu0 0.0
    %2163 = vmatpush1.msra.mxu0 %v370
    %2164 = vmatprep.subr.mxu0 0.0
    %2165 = vmatpush1.msra.mxu0 %v371
    %2166 = vmatprep.subr.mxu0 0.0
    %2167 = vmatpush1.msra.mxu0 %v372
    %2168 = vmatprep.subr.mxu0 0.0
    %2169 = vmatpush1.msra.mxu0 %v373
    %2170 = vmatprep.subr.mxu0 0.0
    %2171 = vmatpush1.msra.mxu0 %v374
    %2172 = vmatprep.subr.mxu0 0.0
    %2173 = vmatpush1.msra.mxu0 %v375
    %2174 = vmatprep.subr.mxu0 0.0
    %2175 = vmatpush1.msra.mxu0 %v376
    %2176 = vmatprep.subr.mxu0 0.0
    %2177 = vmatpush1.msra.mxu0 %v377
    %2178 = vmatprep.subr.mxu0 0.0
    %2179 = vmatpush1.msra.mxu0 %v378
    %2180 = vmatprep.subr.mxu0 0.0
    %2181 = vmatpush1.msra.mxu0 %v379
    %2182 = vmatprep.subr.mxu0 0.0
    %2183 = vmatpush1.msra.mxu0 %v380
    %2184 = vmatprep.subr.mxu0 0.0
    %2185 = vmatpush1.msra.mxu0 %v381
    %2186 = vmatprep.subr.mxu0 0.0
    %2187 = vmatpush1.msra.mxu0 %v382
    %2188 = vmatprep.subr.mxu0 0.0
    %2189 = vmatpush1.msra.mxu0 %v383
    %2190 = vmatprep.subr.mxu0 0.0
    %2191 = vmatpush1.msra.mxu0 %v384
    %2192 = vmatprep.subr.mxu0 0.0
    %2193 = vmatpush1.msra.mxu0 %v385
    %2194 = vmatprep.subr.mxu0 0.0
    %2195 = vmatpush1.msra.mxu0 %v386
    %2196 = vmatprep.subr.mxu0 0.0
    %2197 = vmatpush1.msra.mxu0 %v387
    %2198 = vmatprep.subr.mxu0 0.0
    %2199 = vmatpush1.msra.mxu0 %v388
    %2200 = vmatprep.mubr.f32.mxu0 %v1200
    %2201 = vmatmul.mubr.f32.gmra.mrb[0].mxu0 %v1192
    %v2202 = vpop.f32.mrb[0].mxu0
    %v2203 = vadd.f32 %v2133, %v2202
    %v2204 = vpop.f32.mrb[0].mxu0
    %2205 = vdwg.mxu0
    %2206 = vmatprep.subr.mxu0 0.0
    %2207 = vmatpush1.msra.mxu0 %v389
    %2208 = vmatprep.subr.mxu0 0.0
    %2209 = vmatpush1.msra.mxu0 %v390
    %2210 = vmatprep.subr.mxu0 0.0
    %2211 = vmatpush1.msra.mxu0 %v391
    %2212 = vmatprep.subr.mxu0 0.0
    %2213 = vmatpush1.msra.mxu0 %v392
    %2214 = vmatprep.subr.mxu0 0.0
    %2215 = vmatpush1.msra.mxu0 %v393
    %2216 = vmatprep.subr.mxu0 0.0
    %2217 = vmatpush1.msra.mxu0 %v394
    %2218 = vmatprep.subr.mxu0 0.0
    %2219 = vmatpush1.msra.mxu0 %v395
    %2220 = vmatprep.subr.mxu0 0.0
    %2221 = vmatpush1.msra.mxu0 %v396
    %2222 = vmatprep.subr.mxu0 0.0
    %2223 = vmatpush1.msra.mxu0 %v397
    %2224 = vmatprep.subr.mxu0 0.0
    %2225 = vmatpush1.msra.mxu0 %v398
    %2226 = vmatprep.subr.mxu0 0.0
    %2227 = vmatpush1.msra.mxu0 %v399
    %2228 = vmatprep.subr.mxu0 0.0
    %2229 = vmatpush1.msra.mxu0 %v400
    %2230 = vmatprep.subr.mxu0 0.0
    %2231 = vmatpush1.msra.mxu0 %v401
    %2232 = vmatprep.subr.mxu0 0.0
    %2233 = vmatpush1.msra.mxu0 %v402
    %2234 = vmatprep.subr.mxu0 0.0
    %2235 = vmatpush1.msra.mxu0 %v403
    %2236 = vmatprep.subr.mxu0 0.0
    %2237 = vmatpush1.msra.mxu0 %v404
    %2238 = vmatprep.subr.mxu0 0.0
    %2239 = vmatpush1.msra.mxu0 %v405
    %2240 = vmatprep.subr.mxu0 0.0
    %2241 = vmatpush1.msra.mxu0 %v406
    %2242 = vmatprep.subr.mxu0 0.0
    %2243 = vmatpush1.msra.mxu0 %v407
    %2244 = vmatprep.subr.mxu0 0.0
    %2245 = vmatpush1.msra.mxu0 %v408
    %2246 = vmatprep.subr.mxu0 0.0
    %2247 = vmatpush1.msra.mxu0 %v409
    %2248 = vmatprep.subr.mxu0 0.0
    %2249 = vmatpush1.msra.mxu0 %v410
    %2250 = vmatprep.subr.mxu0 0.0
    %2251 = vmatpush1.msra.mxu0 %v411
    %2252 = vmatprep.subr.mxu0 0.0
    %2253 = vmatpush1.msra.mxu0 %v412
    %2254 = vmatprep.subr.mxu0 0.0
    %2255 = vmatpush1.msra.mxu0 %v413
    %2256 = vmatprep.subr.mxu0 0.0
    %2257 = vmatpush1.msra.mxu0 %v414
    %2258 = vmatprep.subr.mxu0 0.0
    %2259 = vmatpush1.msra.mxu0 %v415
    %2260 = vmatprep.subr.mxu0 0.0
    %2261 = vmatpush1.msra.mxu0 %v416
    %2262 = vmatprep.subr.mxu0 0.0
    %2263 = vmatpush1.msra.mxu0 %v417
    %2264 = vmatprep.subr.mxu0 0.0
    %2265 = vmatpush1.msra.mxu0 %v418
    %2266 = vmatprep.subr.mxu0 0.0
    %2267 = vmatpush1.msra.mxu0 %v419
    %2268 = vmatprep.subr.mxu0 0.0
    %2269 = vmatpush1.msra.mxu0 %v420
    %2270 = vmatprep.mubr.f32.mxu0 %v1201
    %2271 = vmatmul.mubr.f32.gmra.mrb[0].mxu0 %v1199
    %v2272 = vpop.f32.mrb[0].mxu0
    %v2273 = vadd.f32 %v2203, %v2272
    %v2274 = vpop.f32.mrb[0].mxu0
    %2275 = vdwg.mxu0
    %2276 = vmatprep.subr.mxu0 0.0
    %2277 = vmatpush1.msra.mxu0 %v421
    %2278 = vmatprep.subr.mxu0 0.0
    %2279 = vmatpush1.msra.mxu0 %v422
    %2280 = vmatprep.subr.mxu0 0.0
    %2281 = vmatpush1.msra.mxu0 %v423
    %2282 = vmatprep.subr.mxu0 0.0
    %2283 = vmatpush1.msra.mxu0 %v424
    %2284 = vmatprep.subr.mxu0 0.0
    %2285 = vmatpush1.msra.mxu0 %v425
    %2286 = vmatprep.subr.mxu0 0.0
    %2287 = vmatpush1.msra.mxu0 %v426
    %2288 = vmatprep.subr.mxu0 0.0
    %2289 = vmatpush1.msra.mxu0 %v427
    %2290 = vmatprep.subr.mxu0 0.0
    %2291 = vmatpush1.msra.mxu0 %v428
    %2292 = vmatprep.subr.mxu0 0.0
    %2293 = vmatpush1.msra.mxu0 %v429
    %2294 = vmatprep.subr.mxu0 0.0
    %2295 = vmatpush1.msra.mxu0 %v430
    %2296 = vmatprep.subr.mxu0 0.0
    %2297 = vmatpush1.msra.mxu0 %v431
    %2298 = vmatprep.subr.mxu0 0.0
    %2299 = vmatpush1.msra.mxu0 %v432
    %2300 = vmatprep.subr.mxu0 0.0
    %2301 = vmatpush1.msra.mxu0 %v433
    %2302 = vmatprep.subr.mxu0 0.0
    %2303 = vmatpush1.msra.mxu0 %v434
    %2304 = vmatprep.subr.mxu0 0.0
    %2305 = vmatpush1.msra.mxu0 %v435
    %2306 = vmatprep.subr.mxu0 0.0
    %2307 = vmatpush1.msra.mxu0 %v436
    %2308 = vmatprep.subr.mxu0 0.0
    %2309 = vmatpush1.msra.mxu0 %v437
    %2310 = vmatprep.subr.mxu0 0.0
    %2311 = vmatpush1.msra.mxu0 %v438
    %2312 = vmatprep.subr.mxu0 0.0
    %2313 = vmatpush1.msra.mxu0 %v439
    %2314 = vmatprep.subr.mxu0 0.0
    %2315 = vmatpush1.msra.mxu0 %v440
    %2316 = vmatprep.subr.mxu0 0.0
    %2317 = vmatpush1.msra.mxu0 %v441
    %2318 = vmatprep.subr.mxu0 0.0
    %2319 = vmatpush1.msra.mxu0 %v442
    %2320 = vmatprep.subr.mxu0 0.0
    %2321 = vmatpush1.msra.mxu0 %v443
    %2322 = vmatprep.subr.mxu0 0.0
    %2323 = vmatpush1.msra.mxu0 %v444
    %2324 = vmatprep.subr.mxu0 0.0
    %2325 = vmatpush1.msra.mxu0 %v445
    %2326 = vmatprep.subr.mxu0 0.0
    %2327 = vmatpush1.msra.mxu0 %v446
    %2328 = vmatprep.subr.mxu0 0.0
    %2329 = vmatpush1.msra.mxu0 %v447
    %2330 = vmatprep.subr.mxu0 0.0
    %2331 = vmatpush1.msra.mxu0 %v448
    %2332 = vmatprep.subr.mxu0 0.0
    %2333 = vmatpush1.msra.mxu0 %v449
    %2334 = vmatprep.subr.mxu0 0.0
    %2335 = vmatpush1.msra.mxu0 %v450
    %2336 = vmatprep.subr.mxu0 0.0
    %2337 = vmatpush1.msra.mxu0 %v451
    %2338 = vmatprep.subr.mxu0 0.0
    %2339 = vmatpush1.msra.mxu0 %v452
    %2340 = vmatprep.mubr.f32.mxu0 %v1217
    %2341 = vmatmul.mubr.f32.gmra.mrb[0].mxu0 %v1209
    %v2342 = vpop.f32.mrb[0].mxu0
    %v2343 = vadd.f32 %v2273, %v2342
    %v2344 = vpop.f32.mrb[0].mxu0
    %2345 = vdwg.mxu0
    %2346 = vmatprep.subr.mxu0 0.0
    %2347 = vmatpush1.msra.mxu0 %v453
    %2348 = vmatprep.subr.mxu0 0.0
    %2349 = vmatpush1.msra.mxu0 %v454
    %2350 = vmatprep.subr.mxu0 0.0
    %2351 = vmatpush1.msra.mxu0 %v455
    %2352 = vmatprep.subr.mxu0 0.0
    %2353 = vmatpush1.msra.mxu0 %v456
    %2354 = vmatprep.subr.mxu0 0.0
    %2355 = vmatpush1.msra.mxu0 %v457
    %2356 = vmatprep.subr.mxu0 0.0
    %2357 = vmatpush1.msra.mxu0 %v458
    %2358 = vmatprep.subr.mxu0 0.0
    %2359 = vmatpush1.msra.mxu0 %v459
    %2360 = vmatprep.subr.mxu0 0.0
    %2361 = vmatpush1.msra.mxu0 %v460
    %2362 = vmatprep.subr.mxu0 0.0
    %2363 = vmatpush1.msra.mxu0 %v461
    %2364 = vmatprep.subr.mxu0 0.0
    %2365 = vmatpush1.msra.mxu0 %v462
    %2366 = vmatprep.subr.mxu0 0.0
    %2367 = vmatpush1.msra.mxu0 %v463
    %2368 = vmatprep.subr.mxu0 0.0
    %2369 = vmatpush1.msra.mxu0 %v464
    %2370 = vmatprep.subr.mxu0 0.0
    %2371 = vmatpush1.msra.mxu0 %v465
    %2372 = vmatprep.subr.mxu0 0.0
    %2373 = vmatpush1.msra.mxu0 %v466
    %2374 = vmatprep.subr.mxu0 0.0
    %2375 = vmatpush1.msra.mxu0 %v467
    %2376 = vmatprep.subr.mxu0 0.0
    %2377 = vmatpush1.msra.mxu0 %v468
    %2378 = vmatprep.subr.mxu0 0.0
    %2379 = vmatpush1.msra.mxu0 %v469
    %2380 = vmatprep.subr.mxu0 0.0
    %2381 = vmatpush1.msra.mxu0 %v470
    %2382 = vmatprep.subr.mxu0 0.0
    %2383 = vmatpush1.msra.mxu0 %v471
    %2384 = vmatprep.subr.mxu0 0.0
    %2385 = vmatpush1.msra.mxu0 %v472
    %2386 = vmatprep.subr.mxu0 0.0
    %2387 = vmatpush1.msra.mxu0 %v473
    %2388 = vmatprep.subr.mxu0 0.0
    %2389 = vmatpush1.msra.mxu0 %v474
    %2390 = vmatprep.subr.mxu0 0.0
    %2391 = vmatpush1.msra.mxu0 %v475
    %2392 = vmatprep.subr.mxu0 0.0
    %2393 = vmatpush1.msra.mxu0 %v476
    %2394 = vmatprep.subr.mxu0 0.0
    %2395 = vmatpush1.msra.mxu0 %v477
    %2396 = vmatprep.subr.mxu0 0.0
    %2397 = vmatpush1.msra.mxu0 %v478
    %2398 = vmatprep.subr.mxu0 0.0
    %2399 = vmatpush1.msra.mxu0 %v479
    %2400 = vmatprep.subr.mxu0 0.0
    %2401 = vmatpush1.msra.mxu0 %v480
    %2402 = vmatprep.subr.mxu0 0.0
    %2403 = vmatpush1.msra.mxu0 %v481
    %2404 = vmatprep.subr.mxu0 0.0
    %2405 = vmatpush1.msra.mxu0 %v482
    %2406 = vmatprep.subr.mxu0 0.0
    %2407 = vmatpush1.msra.mxu0 %v483
    %2408 = vmatprep.subr.mxu0 0.0
    %2409 = vmatpush1.msra.mxu0 %v484
    %2410 = vmatprep.mubr.f32.mxu0 %v1218
    %2411 = vmatmul.mubr.f32.gmra.mrb[0].mxu0 %v1216
    %v2412 = vpop.f32.mrb[0].mxu0
    %v2413 = vadd.f32 %v2343, %v2412
    %v2414 = vpop.f32.mrb[0].mxu0
    %2415 = vdwg.mxu0
    %2416 = vmatprep.subr.mxu0 0.0
    %2417 = vmatpush1.msra.mxu0 %v485
    %2418 = vmatprep.subr.mxu0 0.0
    %2419 = vmatpush1.msra.mxu0 %v486
    %2420 = vmatprep.subr.mxu0 0.0
    %2421 = vmatpush1.msra.mxu0 %v487
    %2422 = vmatprep.subr.mxu0 0.0
    %2423 = vmatpush1.msra.mxu0 %v488
    %2424 = vmatprep.subr.mxu0 0.0
    %2425 = vmatpush1.msra.mxu0 %v489
    %2426 = vmatprep.subr.mxu0 0.0
    %2427 = vmatpush1.msra.mxu0 %v490
    %2428 = vmatprep.subr.mxu0 0.0
    %2429 = vmatpush1.msra.mxu0 %v491
    %2430 = vmatprep.subr.mxu0 0.0
    %2431 = vmatpush1.msra.mxu0 %v492
    %2432 = vmatprep.subr.mxu0 0.0
    %2433 = vmatpush1.msra.mxu0 %v493
    %2434 = vmatprep.subr.mxu0 0.0
    %2435 = vmatpush1.msra.mxu0 %v494
    %2436 = vmatprep.subr.mxu0 0.0
    %2437 = vmatpush1.msra.mxu0 %v495
    %2438 = vmatprep.subr.mxu0 0.0
    %2439 = vmatpush1.msra.mxu0 %v496
    %2440 = vmatprep.subr.mxu0 0.0
    %2441 = vmatpush1.msra.mxu0 %v497
    %2442 = vmatprep.subr.mxu0 0.0
    %2443 = vmatpush1.msra.mxu0 %v498
    %2444 = vmatprep.subr.mxu0 0.0
    %2445 = vmatpush1.msra.mxu0 %v499
    %2446 = vmatprep.subr.mxu0 0.0
    %2447 = vmatpush1.msra.mxu0 %v500
    %2448 = vmatprep.subr.mxu0 0.0
    %2449 = vmatpush1.msra.mxu0 %v501
    %2450 = vmatprep.subr.mxu0 0.0
    %2451 = vmatpush1.msra.mxu0 %v502
    %2452 = vmatprep.subr.mxu0 0.0
    %2453 = vmatpush1.msra.mxu0 %v503
    %2454 = vmatprep.subr.mxu0 0.0
    %2455 = vmatpush1.msra.mxu0 %v504
    %2456 = vmatprep.subr.mxu0 0.0
    %2457 = vmatpush1.msra.mxu0 %v505
    %2458 = vmatprep.subr.mxu0 0.0
    %2459 = vmatpush1.msra.mxu0 %v506
    %2460 = vmatprep.subr.mxu0 0.0
    %2461 = vmatpush1.msra.mxu0 %v507
    %2462 = vmatprep.subr.mxu0 0.0
    %2463 = vmatpush1.msra.mxu0 %v508
    %2464 = vmatprep.subr.mxu0 0.0
    %2465 = vmatpush1.msra.mxu0 %v509
    %2466 = vmatprep.subr.mxu0 0.0
    %2467 = vmatpush1.msra.mxu0 %v510
    %2468 = vmatprep.subr.mxu0 0.0
    %2469 = vmatpush1.msra.mxu0 %v511
    %2470 = vmatprep.subr.mxu0 0.0
    %2471 = vmatpush1.msra.mxu0 %v512
    %2472 = vmatprep.subr.mxu0 0.0
    %2473 = vmatpush1.msra.mxu0 %v513
    %2474 = vmatprep.subr.mxu0 0.0
    %2475 = vmatpush1.msra.mxu0 %v514
    %2476 = vmatprep.subr.mxu0 0.0
    %2477 = vmatpush1.msra.mxu0 %v515
    %2478 = vmatprep.subr.mxu0 0.0
    %2479 = vmatpush1.msra.mxu0 %v516
    %2480 = vmatprep.mubr.f32.mxu0 %v1234
    %2481 = vmatmul.mubr.f32.gmra.mrb[0].mxu0 %v1226
    %v2482 = vpop.f32.mrb[0].mxu0
    %v2483 = vadd.f32 %v2413, %v2482
    %v2484 = vpop.f32.mrb[0].mxu0
    %2485 = vdwg.mxu0
    %2486 = vmatprep.subr.mxu0 0.0
    %2487 = vmatpush1.msra.mxu0 %v517
    %2488 = vmatprep.subr.mxu0 0.0
    %2489 = vmatpush1.msra.mxu0 %v518
    %2490 = vmatprep.subr.mxu0 0.0
    %2491 = vmatpush1.msra.mxu0 %v519
    %2492 = vmatprep.subr.mxu0 0.0
    %2493 = vmatpush1.msra.mxu0 %v520
    %2494 = vmatprep.subr.mxu0 0.0
    %2495 = vmatpush1.msra.mxu0 %v521
    %2496 = vmatprep.subr.mxu0 0.0
    %2497 = vmatpush1.msra.mxu0 %v522
    %2498 = vmatprep.subr.mxu0 0.0
    %2499 = vmatpush1.msra.mxu0 %v523
    %2500 = vmatprep.subr.mxu0 0.0
    %2501 = vmatpush1.msra.mxu0 %v524
    %2502 = vmatprep.subr.mxu0 0.0
    %2503 = vmatpush1.msra.mxu0 %v525
    %2504 = vmatprep.subr.mxu0 0.0
    %2505 = vmatpush1.msra.mxu0 %v526
    %2506 = vmatprep.subr.mxu0 0.0
    %2507 = vmatpush1.msra.mxu0 %v527
    %2508 = vmatprep.subr.mxu0 0.0
    %2509 = vmatpush1.msra.mxu0 %v528
    %2510 = vmatprep.subr.mxu0 0.0
    %2511 = vmatpush1.msra.mxu0 %v529
    %2512 = vmatprep.subr.mxu0 0.0
    %2513 = vmatpush1.msra.mxu0 %v530
    %2514 = vmatprep.subr.mxu0 0.0
    %2515 = vmatpush1.msra.mxu0 %v531
    %2516 = vmatprep.subr.mxu0 0.0
    %2517 = vmatpush1.msra.mxu0 %v532
    %2518 = vmatprep.subr.mxu0 0.0
    %2519 = vmatpush1.msra.mxu0 %v533
    %2520 = vmatprep.subr.mxu0 0.0
    %2521 = vmatpush1.msra.mxu0 %v534
    %2522 = vmatprep.subr.mxu0 0.0
    %2523 = vmatpush1.msra.mxu0 %v535
    %2524 = vmatprep.subr.mxu0 0.0
    %2525 = vmatpush1.msra.mxu0 %v536
    %2526 = vmatprep.subr.mxu0 0.0
    %2527 = vmatpush1.msra.mxu0 %v537
    %2528 = vmatprep.subr.mxu0 0.0
    %2529 = vmatpush1.msra.mxu0 %v538
    %2530 = vmatprep.subr.mxu0 0.0
    %2531 = vmatpush1.msra.mxu0 %v539
    %2532 = vmatprep.subr.mxu0 0.0
    %2533 = vmatpush1.msra.mxu0 %v540
    %2534 = vmatprep.subr.mxu0 0.0
    %2535 = vmatpush1.msra.mxu0 %v541
    %2536 = vmatprep.subr.mxu0 0.0
    %2537 = vmatpush1.msra.mxu0 %v542
    %2538 = vmatprep.subr.mxu0 0.0
    %2539 = vmatpush1.msra.mxu0 %v543
    %2540 = vmatprep.subr.mxu0 0.0
    %2541 = vmatpush1.msra.mxu0 %v544
    %2542 = vmatprep.subr.mxu0 0.0
    %2543 = vmatpush1.msra.mxu0 %v545
    %2544 = vmatprep.subr.mxu0 0.0
    %2545 = vmatpush1.msra.mxu0 %v546
    %2546 = vmatprep.subr.mxu0 0.0
    %2547 = vmatpush1.msra.mxu0 %v547
    %2548 = vmatprep.subr.mxu0 0.0
    %2549 = vmatpush1.msra.mxu0 %v548
    %2550 = vmatprep.mubr.f32.mxu0 %v1235
    %2551 = vmatmul.mubr.f32.gmra.mrb[0].mxu0 %v1233
    %v2552 = vpop.f32.mrb[0].mxu0
    %v2553 = vadd.f32 %v2483, %v2552
    %v2554 = vpop.f32.mrb[0].mxu0
    %2555 = vdwg.mxu0
    %2556 = vmatprep.subr.mxu0 0.0
    %2557 = vmatpush1.msra.mxu0 %v549
    %2558 = vmatprep.subr.mxu0 0.0
    %2559 = vmatpush1.msra.mxu0 %v550
    %2560 = vmatprep.subr.mxu0 0.0
    %2561 = vmatpush1.msra.mxu0 %v551
    %2562 = vmatprep.subr.mxu0 0.0
    %2563 = vmatpush1.msra.mxu0 %v552
    %2564 = vmatprep.subr.mxu0 0.0
    %2565 = vmatpush1.msra.mxu0 %v553
    %2566 = vmatprep.subr.mxu0 0.0
    %2567 = vmatpush1.msra.mxu0 %v554
    %2568 = vmatprep.subr.mxu0 0.0
    %2569 = vmatpush1.msra.mxu0 %v555
    %2570 = vmatprep.subr.mxu0 0.0
    %2571 = vmatpush1.msra.mxu0 %v556
    %2572 = vmatprep.subr.mxu0 0.0
    %2573 = vmatpush1.msra.mxu0 %v557
    %2574 = vmatprep.subr.mxu0 0.0
    %2575 = vmatpush1.msra.mxu0 %v558
    %2576 = vmatprep.subr.mxu0 0.0
    %2577 = vmatpush1.msra.mxu0 %v559
    %2578 = vmatprep.subr.mxu0 0.0
    %2579 = vmatpush1.msra.mxu0 %v560
    %2580 = vmatprep.subr.mxu0 0.0
    %2581 = vmatpush1.msra.mxu0 %v561
    %2582 = vmatprep.subr.mxu0 0.0
    %2583 = vmatpush1.msra.mxu0 %v562
    %2584 = vmatprep.subr.mxu0 0.0
    %2585 = vmatpush1.msra.mxu0 %v563
    %2586 = vmatprep.subr.mxu0 0.0
    %2587 = vmatpush1.msra.mxu0 %v564
    %2588 = vmatprep.subr.mxu0 0.0
    %2589 = vmatpush1.msra.mxu0 %v565
    %2590 = vmatprep.subr.mxu0 0.0
    %2591 = vmatpush1.msra.mxu0 %v566
    %2592 = vmatprep.subr.mxu0 0.0
    %2593 = vmatpush1.msra.mxu0 %v567
    %2594 = vmatprep.subr.mxu0 0.0
    %2595 = vmatpush1.msra.mxu0 %v568
    %2596 = vmatprep.subr.mxu0 0.0
    %2597 = vmatpush1.msra.mxu0 %v569
    %2598 = vmatprep.subr.mxu0 0.0
    %2599 = vmatpush1.msra.mxu0 %v570
    %2600 = vmatprep.subr.mxu0 0.0
    %2601 = vmatpush1.msra.mxu0 %v571
    %2602 = vmatprep.subr.mxu0 0.0
    %2603 = vmatpush1.msra.mxu0 %v572
    %2604 = vmatprep.subr.mxu0 0.0
    %2605 = vmatpush1.msra.mxu0 %v573
    %2606 = vmatprep.subr.mxu0 0.0
    %2607 = vmatpush1.msra.mxu0 %v574
    %2608 = vmatprep.subr.mxu0 0.0
    %2609 = vmatpush1.msra.mxu0 %v575
    %2610 = vmatprep.subr.mxu0 0.0
    %2611 = vmatpush1.msra.mxu0 %v576
    %2612 = vmatprep.subr.mxu0 0.0
    %2613 = vmatpush1.msra.mxu0 %v577
    %2614 = vmatprep.subr.mxu0 0.0
    %2615 = vmatpush1.msra.mxu0 %v578
    %2616 = vmatprep.subr.mxu0 0.0
    %2617 = vmatpush1.msra.mxu0 %v579
    %2618 = vmatprep.subr.mxu0 0.0
    %2619 = vmatpush1.msra.mxu0 %v580
    %2620 = vmatprep.mubr.f32.mxu0 %v1251
    %2621 = vmatmul.mubr.f32.gmra.mrb[0].mxu0 %v1243
    %v2622 = vpop.f32.mrb[0].mxu0
    %v2623 = vadd.f32 %v2553, %v2622
    %v2624 = vpop.f32.mrb[0].mxu0
    %2625 = vdwg.mxu0
    %2626 = vmatprep.subr.mxu0 0.0
    %2627 = vmatpush1.msra.mxu0 %v581
    %2628 = vmatprep.subr.mxu0 0.0
    %2629 = vmatpush1.msra.mxu0 %v582
    %2630 = vmatprep.subr.mxu0 0.0
    %2631 = vmatpush1.msra.mxu0 %v583
    %2632 = vmatprep.subr.mxu0 0.0
    %2633 = vmatpush1.msra.mxu0 %v584
    %2634 = vmatprep.subr.mxu0 0.0
    %2635 = vmatpush1.msra.mxu0 %v585
    %2636 = vmatprep.subr.mxu0 0.0
    %2637 = vmatpush1.msra.mxu0 %v586
    %2638 = vmatprep.subr.mxu0 0.0
    %2639 = vmatpush1.msra.mxu0 %v587
    %2640 = vmatprep.subr.mxu0 0.0
    %2641 = vmatpush1.msra.mxu0 %v588
    %2642 = vmatprep.subr.mxu0 0.0
    %2643 = vmatpush1.msra.mxu0 %v589
    %2644 = vmatprep.subr.mxu0 0.0
    %2645 = vmatpush1.msra.mxu0 %v590
    %2646 = vmatprep.subr.mxu0 0.0
    %2647 = vmatpush1.msra.mxu0 %v591
    %2648 = vmatprep.subr.mxu0 0.0
    %2649 = vmatpush1.msra.mxu0 %v592
    %2650 = vmatprep.subr.mxu0 0.0
    %2651 = vmatpush1.msra.mxu0 %v593
    %2652 = vmatprep.subr.mxu0 0.0
    %2653 = vmatpush1.msra.mxu0 %v594
    %2654 = vmatprep.subr.mxu0 0.0
    %2655 = vmatpush1.msra.mxu0 %v595
    %2656 = vmatprep.subr.mxu0 0.0
    %2657 = vmatpush1.msra.mxu0 %v596
    %2658 = vmatprep.subr.mxu0 0.0
    %2659 = vmatpush1.msra.mxu0 %v597
    %2660 = vmatprep.subr.mxu0 0.0
    %2661 = vmatpush1.msra.mxu0 %v598
    %2662 = vmatprep.subr.mxu0 0.0
    %2663 = vmatpush1.msra.mxu0 %v599
    %2664 = vmatprep.subr.mxu0 0.0
    %2665 = vmatpush1.msra.mxu0 %v600
    %2666 = vmatprep.subr.mxu0 0.0
    %2667 = vmatpush1.msra.mxu0 %v601
    %2668 = vmatprep.subr.mxu0 0.0
    %2669 = vmatpush1.msra.mxu0 %v602
    %2670 = vmatprep.subr.mxu0 0.0
    %2671 = vmatpush1.msra.mxu0 %v603
    %2672 = vmatprep.subr.mxu0 0.0
    %2673 = vmatpush1.msra.mxu0 %v604
    %2674 = vmatprep.subr.mxu0 0.0
    %2675 = vmatpush1.msra.mxu0 %v605
    %2676 = vmatprep.subr.mxu0 0.0
    %2677 = vmatpush1.msra.mxu0 %v606
    %2678 = vmatprep.subr.mxu0 0.0
    %2679 = vmatpush1.msra.mxu0 %v607
    %2680 = vmatprep.subr.mxu0 0.0
    %2681 = vmatpush1.msra.mxu0 %v608
    %2682 = vmatprep.subr.mxu0 0.0
    %2683 = vmatpush1.msra.mxu0 %v609
    %2684 = vmatprep.subr.mxu0 0.0
    %2685 = vmatpush1.msra.mxu0 %v610
    %2686 = vmatprep.subr.mxu0 0.0
    %2687 = vmatpush1.msra.mxu0 %v611
    %2688 = vmatprep.subr.mxu0 0.0
    %2689 = vmatpush1.msra.mxu0 %v612
    %2690 = vmatprep.mubr.f32.mxu0 %v1252
    %2691 = vmatmul.mubr.f32.gmra.mrb[0].mxu0 %v1250
    %v2692 = vpop.f32.mrb[0].mxu0
    %v2693 = vadd.f32 %v2623, %v2692
    %v2694 = vpop.f32.mrb[0].mxu0
    %2695 = vdwg.mxu0
    %2696 = vmatprep.subr.mxu0 0.0
    %2697 = vmatpush1.msra.mxu0 %v613
    %2698 = vmatprep.subr.mxu0 0.0
    %2699 = vmatpush1.msra.mxu0 %v614
    %2700 = vmatprep.subr.mxu0 0.0
    %2701 = vmatpush1.msra.mxu0 %v615
    %2702 = vmatprep.subr.mxu0 0.0
    %2703 = vmatpush1.msra.mxu0 %v616
    %2704 = vmatprep.subr.mxu0 0.0
    %2705 = vmatpush1.msra.mxu0 %v617
    %2706 = vmatprep.subr.mxu0 0.0
    %2707 = vmatpush1.msra.mxu0 %v618
    %2708 = vmatprep.subr.mxu0 0.0
    %2709 = vmatpush1.msra.mxu0 %v619
    %2710 = vmatprep.subr.mxu0 0.0
    %2711 = vmatpush1.msra.mxu0 %v620
    %2712 = vmatprep.subr.mxu0 0.0
    %2713 = vmatpush1.msra.mxu0 %v621
    %2714 = vmatprep.subr.mxu0 0.0
    %2715 = vmatpush1.msra.mxu0 %v622
    %2716 = vmatprep.subr.mxu0 0.0
    %2717 = vmatpush1.msra.mxu0 %v623
    %2718 = vmatprep.subr.mxu0 0.0
    %2719 = vmatpush1.msra.mxu0 %v624
    %2720 = vmatprep.subr.mxu0 0.0
    %2721 = vmatpush1.msra.mxu0 %v625
    %2722 = vmatprep.subr.mxu0 0.0
    %2723 = vmatpush1.msra.mxu0 %v626
    %2724 = vmatprep.subr.mxu0 0.0
    %2725 = vmatpush1.msra.mxu0 %v627
    %2726 = vmatprep.subr.mxu0 0.0
    %2727 = vmatpush1.msra.mxu0 %v628
    %2728 = vmatprep.subr.mxu0 0.0
    %2729 = vmatpush1.msra.mxu0 %v629
    %2730 = vmatprep.subr.mxu0 0.0
    %2731 = vmatpush1.msra.mxu0 %v630
    %2732 = vmatprep.subr.mxu0 0.0
    %2733 = vmatpush1.msra.mxu0 %v631
    %2734 = vmatprep.subr.mxu0 0.0
    %2735 = vmatpush1.msra.mxu0 %v632
    %2736 = vmatprep.subr.mxu0 0.0
    %2737 = vmatpush1.msra.mxu0 %v633
    %2738 = vmatprep.subr.mxu0 0.0
    %2739 = vmatpush1.msra.mxu0 %v634
    %2740 = vmatprep.subr.mxu0 0.0
    %2741 = vmatpush1.msra.mxu0 %v635
    %2742 = vmatprep.subr.mxu0 0.0
    %2743 = vmatpush1.msra.mxu0 %v636
    %2744 = vmatprep.subr.mxu0 0.0
    %2745 = vmatpush1.msra.mxu0 %v637
    %2746 = vmatprep.subr.mxu0 0.0
    %2747 = vmatpush1.msra.mxu0 %v638
    %2748 = vmatprep.subr.mxu0 0.0
    %2749 = vmatpush1.msra.mxu0 %v639
    %2750 = vmatprep.subr.mxu0 0.0
    %2751 = vmatpush1.msra.mxu0 %v640
    %2752 = vmatprep.subr.mxu0 0.0
    %2753 = vmatpush1.msra.mxu0 %v641
    %2754 = vmatprep.subr.mxu0 0.0
    %2755 = vmatpush1.msra.mxu0 %v642
    %2756 = vmatprep.subr.mxu0 0.0
    %2757 = vmatpush1.msra.mxu0 %v643
    %2758 = vmatprep.subr.mxu0 0.0
    %2759 = vmatpush1.msra.mxu0 %v644
    %2760 = vmatprep.mubr.f32.mxu0 %v1268
    %2761 = vmatmul.mubr.f32.gmra.mrb[0].mxu0 %v1260
    %v2762 = vpop.f32.mrb[0].mxu0
    %v2763 = vadd.f32 %v2693, %v2762
    %v2764 = vpop.f32.mrb[0].mxu0
    %2765 = vdwg.mxu0
    %2766 = vmatprep.subr.mxu0 0.0
    %2767 = vmatpush1.msra.mxu0 %v645
    %2768 = vmatprep.subr.mxu0 0.0
    %2769 = vmatpush1.msra.mxu0 %v646
    %2770 = vmatprep.subr.mxu0 0.0
    %2771 = vmatpush1.msra.mxu0 %v647
    %2772 = vmatprep.subr.mxu0 0.0
    %2773 = vmatpush1.msra.mxu0 %v648
    %2774 = vmatprep.subr.mxu0 0.0
    %2775 = vmatpush1.msra.mxu0 %v649
    %2776 = vmatprep.subr.mxu0 0.0
    %2777 = vmatpush1.msra.mxu0 %v650
    %2778 = vmatprep.subr.mxu0 0.0
    %2779 = vmatpush1.msra.mxu0 %v651
    %2780 = vmatprep.subr.mxu0 0.0
    %2781 = vmatpush1.msra.mxu0 %v652
    %2782 = vmatprep.subr.mxu0 0.0
    %2783 = vmatpush1.msra.mxu0 %v653
    %2784 = vmatprep.subr.mxu0 0.0
    %2785 = vmatpush1.msra.mxu0 %v654
    %2786 = vmatprep.subr.mxu0 0.0
    %2787 = vmatpush1.msra.mxu0 %v655
    %2788 = vmatprep.subr.mxu0 0.0
    %2789 = vmatpush1.msra.mxu0 %v656
    %2790 = vmatprep.subr.mxu0 0.0
    %2791 = vmatpush1.msra.mxu0 %v657
    %2792 = vmatprep.subr.mxu0 0.0
    %2793 = vmatpush1.msra.mxu0 %v658
    %2794 = vmatprep.subr.mxu0 0.0
    %2795 = vmatpush1.msra.mxu0 %v659
    %2796 = vmatprep.subr.mxu0 0.0
    %2797 = vmatpush1.msra.mxu0 %v660
    %2798 = vmatprep.subr.mxu0 0.0
    %2799 = vmatpush1.msra.mxu0 %v661
    %2800 = vmatprep.subr.mxu0 0.0
    %2801 = vmatpush1.msra.mxu0 %v662
    %2802 = vmatprep.subr.mxu0 0.0
    %2803 = vmatpush1.msra.mxu0 %v663
    %2804 = vmatprep.subr.mxu0 0.0
    %2805 = vmatpush1.msra.mxu0 %v664
    %2806 = vmatprep.subr.mxu0 0.0
    %2807 = vmatpush1.msra.mxu0 %v665
    %2808 = vmatprep.subr.mxu0 0.0
    %2809 = vmatpush1.msra.mxu0 %v666
    %2810 = vmatprep.subr.mxu0 0.0
    %2811 = vmatpush1.msra.mxu0 %v667
    %2812 = vmatprep.subr.mxu0 0.0
    %2813 = vmatpush1.msra.mxu0 %v668
    %2814 = vmatprep.subr.mxu0 0.0
    %2815 = vmatpush1.msra.mxu0 %v669
    %2816 = vmatprep.subr.mxu0 0.0
    %2817 = vmatpush1.msra.mxu0 %v670
    %2818 = vmatprep.subr.mxu0 0.0
    %2819 = vmatpush1.msra.mxu0 %v671
    %2820 = vmatprep.subr.mxu0 0.0
    %2821 = vmatpush1.msra.mxu0 %v672
    %2822 = vmatprep.subr.mxu0 0.0
    %2823 = vmatpush1.msra.mxu0 %v673
    %2824 = vmatprep.subr.mxu0 0.0
    %2825 = vmatpush1.msra.mxu0 %v674
    %2826 = vmatprep.subr.mxu0 0.0
    %2827 = vmatpush1.msra.mxu0 %v675
    %2828 = vmatprep.subr.mxu0 0.0
    %2829 = vmatpush1.msra.mxu0 %v676
    %2830 = vmatprep.mubr.f32.mxu0 %v1269
    %2831 = vmatmul.mubr.f32.gmra.mrb[0].mxu0 %v1267
    %v2832 = vpop.f32.mrb[0].mxu0
    %v2833 = vadd.f32 %v2763, %v2832
    %v2834 = vpop.f32.mrb[0].mxu0
    %2835 = vdwg.mxu0
    %2836 = vmatprep.subr.mxu0 0.0
    %2837 = vmatpush1.msra.mxu0 %v677
    %2838 = vmatprep.subr.mxu0 0.0
    %2839 = vmatpush1.msra.mxu0 %v678
    %2840 = vmatprep.subr.mxu0 0.0
    %2841 = vmatpush1.msra.mxu0 %v679
    %2842 = vmatprep.subr.mxu0 0.0
    %2843 = vmatpush1.msra.mxu0 %v680
    %2844 = vmatprep.subr.mxu0 0.0
    %2845 = vmatpush1.msra.mxu0 %v681
    %2846 = vmatprep.subr.mxu0 0.0
    %2847 = vmatpush1.msra.mxu0 %v682
    %2848 = vmatprep.subr.mxu0 0.0
    %2849 = vmatpush1.msra.mxu0 %v683
    %2850 = vmatprep.subr.mxu0 0.0
    %2851 = vmatpush1.msra.mxu0 %v684
    %2852 = vmatprep.subr.mxu0 0.0
    %2853 = vmatpush1.msra.mxu0 %v685
    %2854 = vmatprep.subr.mxu0 0.0
    %2855 = vmatpush1.msra.mxu0 %v686
    %2856 = vmatprep.subr.mxu0 0.0
    %2857 = vmatpush1.msra.mxu0 %v687
    %2858 = vmatprep.subr.mxu0 0.0
    %2859 = vmatpush1.msra.mxu0 %v688
    %2860 = vmatprep.subr.mxu0 0.0
    %2861 = vmatpush1.msra.mxu0 %v689
    %2862 = vmatprep.subr.mxu0 0.0
    %2863 = vmatpush1.msra.mxu0 %v690
    %2864 = vmatprep.subr.mxu0 0.0
    %2865 = vmatpush1.msra.mxu0 %v691
    %2866 = vmatprep.subr.mxu0 0.0
    %2867 = vmatpush1.msra.mxu0 %v692
    %2868 = vmatprep.subr.mxu0 0.0
    %2869 = vmatpush1.msra.mxu0 %v693
    %2870 = vmatprep.subr.mxu0 0.0
    %2871 = vmatpush1.msra.mxu0 %v694
    %2872 = vmatprep.subr.mxu0 0.0
    %2873 = vmatpush1.msra.mxu0 %v695
    %2874 = vmatprep.subr.mxu0 0.0
    %2875 = vmatpush1.msra.mxu0 %v696
    %2876 = vmatprep.subr.mxu0 0.0
    %2877 = vmatpush1.msra.mxu0 %v697
    %2878 = vmatprep.subr.mxu0 0.0
    %2879 = vmatpush1.msra.mxu0 %v698
    %2880 = vmatprep.subr.mxu0 0.0
    %2881 = vmatpush1.msra.mxu0 %v699
    %2882 = vmatprep.subr.mxu0 0.0
    %2883 = vmatpush1.msra.mxu0 %v700
    %2884 = vmatprep.subr.mxu0 0.0
    %2885 = vmatpush1.msra.mxu0 %v701
    %2886 = vmatprep.subr.mxu0 0.0
    %2887 = vmatpush1.msra.mxu0 %v702
    %2888 = vmatprep.subr.mxu0 0.0
    %2889 = vmatpush1.msra.mxu0 %v703
    %2890 = vmatprep.subr.mxu0 0.0
    %2891 = vmatpush1.msra.mxu0 %v704
    %2892 = vmatprep.subr.mxu0 0.0
    %2893 = vmatpush1.msra.mxu0 %v705
    %2894 = vmatprep.subr.mxu0 0.0
    %2895 = vmatpush1.msra.mxu0 %v706
    %2896 = vmatprep.subr.mxu0 0.0
    %2897 = vmatpush1.msra.mxu0 %v707
    %2898 = vmatprep.subr.mxu0 0.0
    %2899 = vmatpush1.msra.mxu0 %v708
    %2900 = vmatprep.mubr.f32.mxu0 %v1285
    %2901 = vmatmul.mubr.f32.gmra.mrb[0].mxu0 %v1277
    %v2902 = vpop.f32.mrb[0].mxu0
    %v2903 = vadd.f32 %v2833, %v2902
    %v2904 = vpop.f32.mrb[0].mxu0
    %2905 = vdwg.mxu0
    %2906 = vmatprep.subr.mxu0 0.0
    %2907 = vmatpush1.msra.mxu0 %v709
    %2908 = vmatprep.subr.mxu0 0.0
    %2909 = vmatpush1.msra.mxu0 %v710
    %2910 = vmatprep.subr.mxu0 0.0
    %2911 = vmatpush1.msra.mxu0 %v711
    %2912 = vmatprep.subr.mxu0 0.0
    %2913 = vmatpush1.msra.mxu0 %v712
    %2914 = vmatprep.subr.mxu0 0.0
    %2915 = vmatpush1.msra.mxu0 %v713
    %2916 = vmatprep.subr.mxu0 0.0
    %2917 = vmatpush1.msra.mxu0 %v714
    %2918 = vmatprep.subr.mxu0 0.0
    %2919 = vmatpush1.msra.mxu0 %v715
    %2920 = vmatprep.subr.mxu0 0.0
    %2921 = vmatpush1.msra.mxu0 %v716
    %2922 = vmatprep.subr.mxu0 0.0
    %2923 = vmatpush1.msra.mxu0 %v717
    %2924 = vmatprep.subr.mxu0 0.0
    %2925 = vmatpush1.msra.mxu0 %v718
    %2926 = vmatprep.subr.mxu0 0.0
    %2927 = vmatpush1.msra.mxu0 %v719
    %2928 = vmatprep.subr.mxu0 0.0
    %2929 = vmatpush1.msra.mxu0 %v720
    %2930 = vmatprep.subr.mxu0 0.0
    %2931 = vmatpush1.msra.mxu0 %v721
    %2932 = vmatprep.subr.mxu0 0.0
    %2933 = vmatpush1.msra.mxu0 %v722
    %2934 = vmatprep.subr.mxu0 0.0
    %2935 = vmatpush1.msra.mxu0 %v723
    %2936 = vmatprep.subr.mxu0 0.0
    %2937 = vmatpush1.msra.mxu0 %v724
    %2938 = vmatprep.subr.mxu0 0.0
    %2939 = vmatpush1.msra.mxu0 %v725
    %2940 = vmatprep.subr.mxu0 0.0
    %2941 = vmatpush1.msra.mxu0 %v726
    %2942 = vmatprep.subr.mxu0 0.0
    %2943 = vmatpush1.msra.mxu0 %v727
    %2944 = vmatprep.subr.mxu0 0.0
    %2945 = vmatpush1.msra.mxu0 %v728
    %2946 = vmatprep.subr.mxu0 0.0
    %2947 = vmatpush1.msra.mxu0 %v729
    %2948 = vmatprep.subr.mxu0 0.0
    %2949 = vmatpush1.msra.mxu0 %v730
    %2950 = vmatprep.subr.mxu0 0.0
    %2951 = vmatpush1.msra.mxu0 %v731
    %2952 = vmatprep.subr.mxu0 0.0
    %2953 = vmatpush1.msra.mxu0 %v732
    %2954 = vmatprep.subr.mxu0 0.0
    %2955 = vmatpush1.msra.mxu0 %v733
    %2956 = vmatprep.subr.mxu0 0.0
    %2957 = vmatpush1.msra.mxu0 %v734
    %2958 = vmatprep.subr.mxu0 0.0
    %2959 = vmatpush1.msra.mxu0 %v735
    %2960 = vmatprep.subr.mxu0 0.0
    %2961 = vmatpush1.msra.mxu0 %v736
    %2962 = vmatprep.subr.mxu0 0.0
    %2963 = vmatpush1.msra.mxu0 %v737
    %2964 = vmatprep.subr.mxu0 0.0
    %2965 = vmatpush1.msra.mxu0 %v738
    %2966 = vmatprep.subr.mxu0 0.0
    %2967 = vmatpush1.msra.mxu0 %v739
    %2968 = vmatprep.subr.mxu0 0.0
    %2969 = vmatpush1.msra.mxu0 %v740
    %2970 = vmatprep.mubr.f32.mxu0 %v1286
    %2971 = vmatmul.mubr.f32.gmra.mrb[0].mxu0 %v1284
    %v2972 = vpop.f32.mrb[0].mxu0
    %v2973 = vadd.f32 %v2903, %v2972
    %v2974 = vpop.f32.mrb[0].mxu0
    %2975 = vdwg.mxu0
    %2976 = vmatprep.subr.mxu0 0.0
    %2977 = vmatpush1.msra.mxu0 %v741
    %2978 = vmatprep.subr.mxu0 0.0
    %2979 = vmatpush1.msra.mxu0 %v742
    %2980 = vmatprep.subr.mxu0 0.0
    %2981 = vmatpush1.msra.mxu0 %v743
    %2982 = vmatprep.subr.mxu0 0.0
    %2983 = vmatpush1.msra.mxu0 %v744
    %2984 = vmatprep.subr.mxu0 0.0
    %2985 = vmatpush1.msra.mxu0 %v745
    %2986 = vmatprep.subr.mxu0 0.0
    %2987 = vmatpush1.msra.mxu0 %v746
    %2988 = vmatprep.subr.mxu0 0.0
    %2989 = vmatpush1.msra.mxu0 %v747
    %2990 = vmatprep.subr.mxu0 0.0
    %2991 = vmatpush1.msra.mxu0 %v748
    %2992 = vmatprep.subr.mxu0 0.0
    %2993 = vmatpush1.msra.mxu0 %v749
    %2994 = vmatprep.subr.mxu0 0.0
    %2995 = vmatpush1.msra.mxu0 %v750
    %2996 = vmatprep.subr.mxu0 0.0
    %2997 = vmatpush1.msra.mxu0 %v751
    %2998 = vmatprep.subr.mxu0 0.0
    %2999 = vmatpush1.msra.mxu0 %v752
    %3000 = vmatprep.subr.mxu0 0.0
    %3001 = vmatpush1.msra.mxu0 %v753
    %3002 = vmatprep.subr.mxu0 0.0
    %3003 = vmatpush1.msra.mxu0 %v754
    %3004 = vmatprep.subr.mxu0 0.0
    %3005 = vmatpush1.msra.mxu0 %v755
    %3006 = vmatprep.subr.mxu0 0.0
    %3007 = vmatpush1.msra.mxu0 %v756
    %3008 = vmatprep.subr.mxu0 0.0
    %3009 = vmatpush1.msra.mxu0 %v757
    %3010 = vmatprep.subr.mxu0 0.0
    %3011 = vmatpush1.msra.mxu0 %v758
    %3012 = vmatprep.subr.mxu0 0.0
    %3013 = vmatpush1.msra.mxu0 %v759
    %3014 = vmatprep.subr.mxu0 0.0
    %3015 = vmatpush1.msra.mxu0 %v760
    %3016 = vmatprep.subr.mxu0 0.0
    %3017 = vmatpush1.msra.mxu0 %v761
    %3018 = vmatprep.subr.mxu0 0.0
    %3019 = vmatpush1.msra.mxu0 %v762
    %3020 = vmatprep.subr.mxu0 0.0
    %3021 = vmatpush1.msra.mxu0 %v763
    %3022 = vmatprep.subr.mxu0 0.0
    %3023 = vmatpush1.msra.mxu0 %v764
    %3024 = vmatprep.subr.mxu0 0.0
    %3025 = vmatpush1.msra.mxu0 %v765
    %3026 = vmatprep.subr.mxu0 0.0
    %3027 = vmatpush1.msra.mxu0 %v766
    %3028 = vmatprep.subr.mxu0 0.0
    %3029 = vmatpush1.msra.mxu0 %v767
    %3030 = vmatprep.subr.mxu0 0.0
    %3031 = vmatpush1.msra.mxu0 %v768
    %3032 = vmatprep.subr.mxu0 0.0
    %3033 = vmatpush1.msra.mxu0 %v769
    %3034 = vmatprep.subr.mxu0 0.0
    %3035 = vmatpush1.msra.mxu0 %v770
    %3036 = vmatprep.subr.mxu0 0.0
    %3037 = vmatpush1.msra.mxu0 %v771
    %3038 = vmatprep.subr.mxu0 0.0
    %3039 = vmatpush1.msra.mxu0 %v772
    %3040 = vmatprep.mubr.f32.mxu0 %v1302
    %3041 = vmatmul.mubr.f32.gmra.mrb[0].mxu0 %v1294
    %v3042 = vpop.f32.mrb[0].mxu0
    %v3043 = vadd.f32 %v2973, %v3042
    %v3044 = vpop.f32.mrb[0].mxu0
    %3045 = vdwg.mxu0
    %3046 = vmatprep.subr.mxu0 0.0
    %3047 = vmatpush1.msra.mxu0 %v773
    %3048 = vmatprep.subr.mxu0 0.0
    %3049 = vmatpush1.msra.mxu0 %v774
    %3050 = vmatprep.subr.mxu0 0.0
    %3051 = vmatpush1.msra.mxu0 %v775
    %3052 = vmatprep.subr.mxu0 0.0
    %3053 = vmatpush1.msra.mxu0 %v776
    %3054 = vmatprep.subr.mxu0 0.0
    %3055 = vmatpush1.msra.mxu0 %v777
    %3056 = vmatprep.subr.mxu0 0.0
    %3057 = vmatpush1.msra.mxu0 %v778
    %3058 = vmatprep.subr.mxu0 0.0
    %3059 = vmatpush1.msra.mxu0 %v779
    %3060 = vmatprep.subr.mxu0 0.0
    %3061 = vmatpush1.msra.mxu0 %v780
    %3062 = vmatprep.subr.mxu0 0.0
    %3063 = vmatpush1.msra.mxu0 %v781
    %3064 = vmatprep.subr.mxu0 0.0
    %3065 = vmatpush1.msra.mxu0 %v782
    %3066 = vmatprep.subr.mxu0 0.0
    %3067 = vmatpush1.msra.mxu0 %v783
    %3068 = vmatprep.subr.mxu0 0.0
    %3069 = vmatpush1.msra.mxu0 %v784
    %3070 = vmatprep.subr.mxu0 0.0
    %3071 = vmatpush1.msra.mxu0 %v785
    %3072 = vmatprep.subr.mxu0 0.0
    %3073 = vmatpush1.msra.mxu0 %v786
    %3074 = vmatprep.subr.mxu0 0.0
    %3075 = vmatpush1.msra.mxu0 %v787
    %3076 = vmatprep.subr.mxu0 0.0
    %3077 = vmatpush1.msra.mxu0 %v788
    %3078 = vmatprep.subr.mxu0 0.0
    %3079 = vmatpush1.msra.mxu0 %v789
    %3080 = vmatprep.subr.mxu0 0.0
    %3081 = vmatpush1.msra.mxu0 %v790
    %3082 = vmatprep.subr.mxu0 0.0
    %3083 = vmatpush1.msra.mxu0 %v791
    %3084 = vmatprep.subr.mxu0 0.0
    %3085 = vmatpush1.msra.mxu0 %v792
    %3086 = vmatprep.subr.mxu0 0.0
    %3087 = vmatpush1.msra.mxu0 %v793
    %3088 = vmatprep.subr.mxu0 0.0
    %3089 = vmatpush1.msra.mxu0 %v794
    %3090 = vmatprep.subr.mxu0 0.0
    %3091 = vmatpush1.msra.mxu0 %v795
    %3092 = vmatprep.subr.mxu0 0.0
    %3093 = vmatpush1.msra.mxu0 %v796
    %3094 = vmatprep.subr.mxu0 0.0
    %3095 = vmatpush1.msra.mxu0 %v797
    %3096 = vmatprep.subr.mxu0 0.0
    %3097 = vmatpush1.msra.mxu0 %v798
    %3098 = vmatprep.subr.mxu0 0.0
    %3099 = vmatpush1.msra.mxu0 %v799
    %3100 = vmatprep.subr.mxu0 0.0
    %3101 = vmatpush1.msra.mxu0 %v800
    %3102 = vmatprep.subr.mxu0 0.0
    %3103 = vmatpush1.msra.mxu0 %v801
    %3104 = vmatprep.subr.mxu0 0.0
    %3105 = vmatpush1.msra.mxu0 %v802
    %3106 = vmatprep.subr.mxu0 0.0
    %3107 = vmatpush1.msra.mxu0 %v803
    %3108 = vmatprep.subr.mxu0 0.0
    %3109 = vmatpush1.msra.mxu0 %v804
    %3110 = vmatprep.mubr.f32.mxu0 %v1303
    %3111 = vmatmul.mubr.f32.gmra.mrb[0].mxu0 %v1301
    %v3112 = vpop.f32.mrb[0].mxu0
    %v3113 = vadd.f32 %v3043, %v3112
    %v3114 = vpop.f32.mrb[0].mxu0
    %3115 = vdwg.mxu0
    %3116 = vmatprep.subr.mxu0 0.0
    %3117 = vmatpush1.msra.mxu0 %v805
    %3118 = vmatprep.subr.mxu0 0.0
    %3119 = vmatpush1.msra.mxu0 %v806
    %3120 = vmatprep.subr.mxu0 0.0
    %3121 = vmatpush1.msra.mxu0 %v807
    %3122 = vmatprep.subr.mxu0 0.0
    %3123 = vmatpush1.msra.mxu0 %v808
    %3124 = vmatprep.subr.mxu0 0.0
    %3125 = vmatpush1.msra.mxu0 %v809
    %3126 = vmatprep.subr.mxu0 0.0
    %3127 = vmatpush1.msra.mxu0 %v810
    %3128 = vmatprep.subr.mxu0 0.0
    %3129 = vmatpush1.msra.mxu0 %v811
    %3130 = vmatprep.subr.mxu0 0.0
    %3131 = vmatpush1.msra.mxu0 %v812
    %3132 = vmatprep.subr.mxu0 0.0
    %3133 = vmatpush1.msra.mxu0 %v813
    %3134 = vmatprep.subr.mxu0 0.0
    %3135 = vmatpush1.msra.mxu0 %v814
    %3136 = vmatprep.subr.mxu0 0.0
    %3137 = vmatpush1.msra.mxu0 %v815
    %3138 = vmatprep.subr.mxu0 0.0
    %3139 = vmatpush1.msra.mxu0 %v816
    %3140 = vmatprep.subr.mxu0 0.0
    %3141 = vmatpush1.msra.mxu0 %v817
    %3142 = vmatprep.subr.mxu0 0.0
    %3143 = vmatpush1.msra.mxu0 %v818
    %3144 = vmatprep.subr.mxu0 0.0
    %3145 = vmatpush1.msra.mxu0 %v819
    %3146 = vmatprep.subr.mxu0 0.0
    %3147 = vmatpush1.msra.mxu0 %v820
    %3148 = vmatprep.subr.mxu0 0.0
    %3149 = vmatpush1.msra.mxu0 %v821
    %3150 = vmatprep.subr.mxu0 0.0
    %3151 = vmatpush1.msra.mxu0 %v822
    %3152 = vmatprep.subr.mxu0 0.0
    %3153 = vmatpush1.msra.mxu0 %v823
    %3154 = vmatprep.subr.mxu0 0.0
    %3155 = vmatpush1.msra.mxu0 %v824
    %3156 = vmatprep.subr.mxu0 0.0
    %3157 = vmatpush1.msra.mxu0 %v825
    %3158 = vmatprep.subr.mxu0 0.0
    %3159 = vmatpush1.msra.mxu0 %v826
    %3160 = vmatprep.subr.mxu0 0.0
    %3161 = vmatpush1.msra.mxu0 %v827
    %3162 = vmatprep.subr.mxu0 0.0
    %3163 = vmatpush1.msra.mxu0 %v828
    %3164 = vmatprep.subr.mxu0 0.0
    %3165 = vmatpush1.msra.mxu0 %v829
    %3166 = vmatprep.subr.mxu0 0.0
    %3167 = vmatpush1.msra.mxu0 %v830
    %3168 = vmatprep.subr.mxu0 0.0
    %3169 = vmatpush1.msra.mxu0 %v831
    %3170 = vmatprep.subr.mxu0 0.0
    %3171 = vmatpush1.msra.mxu0 %v832
    %3172 = vmatprep.subr.mxu0 0.0
    %3173 = vmatpush1.msra.mxu0 %v833
    %3174 = vmatprep.subr.mxu0 0.0
    %3175 = vmatpush1.msra.mxu0 %v834
    %3176 = vmatprep.subr.mxu0 0.0
    %3177 = vmatpush1.msra.mxu0 %v835
    %3178 = vmatprep.subr.mxu0 0.0
    %3179 = vmatpush1.msra.mxu0 %v836
    %3180 = vmatprep.mubr.f32.mxu0 %v1319
    %3181 = vmatmul.mubr.f32.gmra.mrb[0].mxu0 %v1311
    %v3182 = vpop.f32.mrb[0].mxu0
    %v3183 = vadd.f32 %v3113, %v3182
    %v3184 = vpop.f32.mrb[0].mxu0
    %3185 = vdwg.mxu0
    %3186 = vmatprep.subr.mxu0 0.0
    %3187 = vmatpush1.msra.mxu0 %v837
    %3188 = vmatprep.subr.mxu0 0.0
    %3189 = vmatpush1.msra.mxu0 %v838
    %3190 = vmatprep.subr.mxu0 0.0
    %3191 = vmatpush1.msra.mxu0 %v839
    %3192 = vmatprep.subr.mxu0 0.0
    %3193 = vmatpush1.msra.mxu0 %v840
    %3194 = vmatprep.subr.mxu0 0.0
    %3195 = vmatpush1.msra.mxu0 %v841
    %3196 = vmatprep.subr.mxu0 0.0
    %3197 = vmatpush1.msra.mxu0 %v842
    %3198 = vmatprep.subr.mxu0 0.0
    %3199 = vmatpush1.msra.mxu0 %v843
    %3200 = vmatprep.subr.mxu0 0.0
    %3201 = vmatpush1.msra.mxu0 %v844
    %3202 = vmatprep.subr.mxu0 0.0
    %3203 = vmatpush1.msra.mxu0 %v845
    %3204 = vmatprep.subr.mxu0 0.0
    %3205 = vmatpush1.msra.mxu0 %v846
    %3206 = vmatprep.subr.mxu0 0.0
    %3207 = vmatpush1.msra.mxu0 %v847
    %3208 = vmatprep.subr.mxu0 0.0
    %3209 = vmatpush1.msra.mxu0 %v848
    %3210 = vmatprep.subr.mxu0 0.0
    %3211 = vmatpush1.msra.mxu0 %v849
    %3212 = vmatprep.subr.mxu0 0.0
    %3213 = vmatpush1.msra.mxu0 %v850
    %3214 = vmatprep.subr.mxu0 0.0
    %3215 = vmatpush1.msra.mxu0 %v851
    %3216 = vmatprep.subr.mxu0 0.0
    %3217 = vmatpush1.msra.mxu0 %v852
    %3218 = vmatprep.subr.mxu0 0.0
    %3219 = vmatpush1.msra.mxu0 %v853
    %3220 = vmatprep.subr.mxu0 0.0
    %3221 = vmatpush1.msra.mxu0 %v854
    %3222 = vmatprep.subr.mxu0 0.0
    %3223 = vmatpush1.msra.mxu0 %v855
    %3224 = vmatprep.subr.mxu0 0.0
    %3225 = vmatpush1.msra.mxu0 %v856
    %3226 = vmatprep.subr.mxu0 0.0
    %3227 = vmatpush1.msra.mxu0 %v857
    %3228 = vmatprep.subr.mxu0 0.0
    %3229 = vmatpush1.msra.mxu0 %v858
    %3230 = vmatprep.subr.mxu0 0.0
    %3231 = vmatpush1.msra.mxu0 %v859
    %3232 = vmatprep.subr.mxu0 0.0
    %3233 = vmatpush1.msra.mxu0 %v860
    %3234 = vmatprep.subr.mxu0 0.0
    %3235 = vmatpush1.msra.mxu0 %v861
    %3236 = vmatprep.subr.mxu0 0.0
    %3237 = vmatpush1.msra.mxu0 %v862
    %3238 = vmatprep.subr.mxu0 0.0
    %3239 = vmatpush1.msra.mxu0 %v863
    %3240 = vmatprep.subr.mxu0 0.0
    %3241 = vmatpush1.msra.mxu0 %v864
    %3242 = vmatprep.subr.mxu0 0.0
    %3243 = vmatpush1.msra.mxu0 %v865
    %3244 = vmatprep.subr.mxu0 0.0
    %3245 = vmatpush1.msra.mxu0 %v866
    %3246 = vmatprep.subr.mxu0 0.0
    %3247 = vmatpush1.msra.mxu0 %v867
    %3248 = vmatprep.subr.mxu0 0.0
    %3249 = vmatpush1.msra.mxu0 %v868
    %3250 = vmatprep.mubr.f32.mxu0 %v1320
    %3251 = vmatmul.mubr.f32.gmra.mrb[0].mxu0 %v1318
    %v3252 = vpop.f32.mrb[0].mxu0
    %v3253 = vadd.f32 %v3183, %v3252
    %v3254 = vpop.f32.mrb[0].mxu0
    %3255 = vdwg.mxu0
    %3256 = vmatprep.subr.mxu0 0.0
    %3257 = vmatpush1.msra.mxu0 %v869
    %3258 = vmatprep.subr.mxu0 0.0
    %3259 = vmatpush1.msra.mxu0 %v870
    %3260 = vmatprep.subr.mxu0 0.0
    %3261 = vmatpush1.msra.mxu0 %v871
    %3262 = vmatprep.subr.mxu0 0.0
    %3263 = vmatpush1.msra.mxu0 %v872
    %3264 = vmatprep.subr.mxu0 0.0
    %3265 = vmatpush1.msra.mxu0 %v873
    %3266 = vmatprep.subr.mxu0 0.0
    %3267 = vmatpush1.msra.mxu0 %v874
    %3268 = vmatprep.subr.mxu0 0.0
    %3269 = vmatpush1.msra.mxu0 %v875
    %3270 = vmatprep.subr.mxu0 0.0
    %3271 = vmatpush1.msra.mxu0 %v876
    %3272 = vmatprep.subr.mxu0 0.0
    %3273 = vmatpush1.msra.mxu0 %v877
    %3274 = vmatprep.subr.mxu0 0.0
    %3275 = vmatpush1.msra.mxu0 %v878
    %3276 = vmatprep.subr.mxu0 0.0
    %3277 = vmatpush1.msra.mxu0 %v879
    %3278 = vmatprep.subr.mxu0 0.0
    %3279 = vmatpush1.msra.mxu0 %v880
    %3280 = vmatprep.subr.mxu0 0.0
    %3281 = vmatpush1.msra.mxu0 %v881
    %3282 = vmatprep.subr.mxu0 0.0
    %3283 = vmatpush1.msra.mxu0 %v882
    %3284 = vmatprep.subr.mxu0 0.0
    %3285 = vmatpush1.msra.mxu0 %v883
    %3286 = vmatprep.subr.mxu0 0.0
    %3287 = vmatpush1.msra.mxu0 %v884
    %3288 = vmatprep.subr.mxu0 0.0
    %3289 = vmatpush1.msra.mxu0 %v885
    %3290 = vmatprep.subr.mxu0 0.0
    %3291 = vmatpush1.msra.mxu0 %v886
    %3292 = vmatprep.subr.mxu0 0.0
    %3293 = vmatpush1.msra.mxu0 %v887
    %3294 = vmatprep.subr.mxu0 0.0
    %3295 = vmatpush1.msra.mxu0 %v888
    %3296 = vmatprep.subr.mxu0 0.0
    %3297 = vmatpush1.msra.mxu0 %v889
    %3298 = vmatprep.subr.mxu0 0.0
    %3299 = vmatpush1.msra.mxu0 %v890
    %3300 = vmatprep.subr.mxu0 0.0
    %3301 = vmatpush1.msra.mxu0 %v891
    %3302 = vmatprep.subr.mxu0 0.0
    %3303 = vmatpush1.msra.mxu0 %v892
    %3304 = vmatprep.subr.mxu0 0.0
    %3305 = vmatpush1.msra.mxu0 %v893
    %3306 = vmatprep.subr.mxu0 0.0
    %3307 = vmatpush1.msra.mxu0 %v894
    %3308 = vmatprep.subr.mxu0 0.0
    %3309 = vmatpush1.msra.mxu0 %v895
    %3310 = vmatprep.subr.mxu0 0.0
    %3311 = vmatpush1.msra.mxu0 %v896
    %3312 = vmatprep.subr.mxu0 0.0
    %3313 = vmatpush1.msra.mxu0 %v897
    %3314 = vmatprep.subr.mxu0 0.0
    %3315 = vmatpush1.msra.mxu0 %v898
    %3316 = vmatprep.subr.mxu0 0.0
    %3317 = vmatpush1.msra.mxu0 %v899
    %3318 = vmatprep.subr.mxu0 0.0
    %3319 = vmatpush1.msra.mxu0 %v900
    %3320 = vmatprep.mubr.f32.mxu0 %v1336
    %3321 = vmatmul.mubr.f32.gmra.mrb[0].mxu0 %v1328
    %v3322 = vpop.f32.mrb[0].mxu0
    %v3323 = vadd.f32 %v3253, %v3322
    %v3324 = vpop.f32.mrb[0].mxu0
    %3325 = vdwg.mxu0
    %3326 = vmatprep.subr.mxu0 0.0
    %3327 = vmatpush1.msra.mxu0 %v901
    %3328 = vmatprep.subr.mxu0 0.0
    %3329 = vmatpush1.msra.mxu0 %v902
    %3330 = vmatprep.subr.mxu0 0.0
    %3331 = vmatpush1.msra.mxu0 %v903
    %3332 = vmatprep.subr.mxu0 0.0
    %3333 = vmatpush1.msra.mxu0 %v904
    %3334 = vmatprep.subr.mxu0 0.0
    %3335 = vmatpush1.msra.mxu0 %v905
    %3336 = vmatprep.subr.mxu0 0.0
    %3337 = vmatpush1.msra.mxu0 %v906
    %3338 = vmatprep.subr.mxu0 0.0
    %3339 = vmatpush1.msra.mxu0 %v907
    %3340 = vmatprep.subr.mxu0 0.0
    %3341 = vmatpush1.msra.mxu0 %v908
    %3342 = vmatprep.subr.mxu0 0.0
    %3343 = vmatpush1.msra.mxu0 %v909
    %3344 = vmatprep.subr.mxu0 0.0
    %3345 = vmatpush1.msra.mxu0 %v910
    %3346 = vmatprep.subr.mxu0 0.0
    %3347 = vmatpush1.msra.mxu0 %v911
    %3348 = vmatprep.subr.mxu0 0.0
    %3349 = vmatpush1.msra.mxu0 %v912
    %3350 = vmatprep.subr.mxu0 0.0
    %3351 = vmatpush1.msra.mxu0 %v913
    %3352 = vmatprep.subr.mxu0 0.0
    %3353 = vmatpush1.msra.mxu0 %v914
    %3354 = vmatprep.subr.mxu0 0.0
    %3355 = vmatpush1.msra.mxu0 %v915
    %3356 = vmatprep.subr.mxu0 0.0
    %3357 = vmatpush1.msra.mxu0 %v916
    %3358 = vmatprep.subr.mxu0 0.0
    %3359 = vmatpush1.msra.mxu0 %v917
    %3360 = vmatprep.subr.mxu0 0.0
    %3361 = vmatpush1.msra.mxu0 %v918
    %3362 = vmatprep.subr.mxu0 0.0
    %3363 = vmatpush1.msra.mxu0 %v919
    %3364 = vmatprep.subr.mxu0 0.0
    %3365 = vmatpush1.msra.mxu0 %v920
    %3366 = vmatprep.subr.mxu0 0.0
    %3367 = vmatpush1.msra.mxu0 %v921
    %3368 = vmatprep.subr.mxu0 0.0
    %3369 = vmatpush1.msra.mxu0 %v922
    %3370 = vmatprep.subr.mxu0 0.0
    %3371 = vmatpush1.msra.mxu0 %v923
    %3372 = vmatprep.subr.mxu0 0.0
    %3373 = vmatpush1.msra.mxu0 %v924
    %3374 = vmatprep.subr.mxu0 0.0
    %3375 = vmatpush1.msra.mxu0 %v925
    %3376 = vmatprep.subr.mxu0 0.0
    %3377 = vmatpush1.msra.mxu0 %v926
    %3378 = vmatprep.subr.mxu0 0.0
    %3379 = vmatpush1.msra.mxu0 %v927
    %3380 = vmatprep.subr.mxu0 0.0
    %3381 = vmatpush1.msra.mxu0 %v928
    %3382 = vmatprep.subr.mxu0 0.0
    %3383 = vmatpush1.msra.mxu0 %v929
    %3384 = vmatprep.subr.mxu0 0.0
    %3385 = vmatpush1.msra.mxu0 %v930
    %3386 = vmatprep.subr.mxu0 0.0
    %3387 = vmatpush1.msra.mxu0 %v931
    %3388 = vmatprep.subr.mxu0 0.0
    %3389 = vmatpush1.msra.mxu0 %v932
    %3390 = vmatprep.mubr.f32.mxu0 %v1337
    %3391 = vmatmul.mubr.f32.gmra.mrb[0].mxu0 %v1335
    %v3392 = vpop.f32.mrb[0].mxu0
    %v3393 = vadd.f32 %v3323, %v3392
    %v3394 = vpop.f32.mrb[0].mxu0
    %3395 = vdwg.mxu0
    %3396 = vmatprep.subr.mxu0 0.0
    %3397 = vmatpush1.msra.mxu0 %v933
    %3398 = vmatprep.subr.mxu0 0.0
    %3399 = vmatpush1.msra.mxu0 %v934
    %3400 = vmatprep.subr.mxu0 0.0
    %3401 = vmatpush1.msra.mxu0 %v935
    %3402 = vmatprep.subr.mxu0 0.0
    %3403 = vmatpush1.msra.mxu0 %v936
    %3404 = vmatprep.subr.mxu0 0.0
    %3405 = vmatpush1.msra.mxu0 %v937
    %3406 = vmatprep.subr.mxu0 0.0
    %3407 = vmatpush1.msra.mxu0 %v938
    %3408 = vmatprep.subr.mxu0 0.0
    %3409 = vmatpush1.msra.mxu0 %v939
    %3410 = vmatprep.subr.mxu0 0.0
    %3411 = vmatpush1.msra.mxu0 %v940
    %3412 = vmatprep.subr.mxu0 0.0
    %3413 = vmatpush1.msra.mxu0 %v941
    %3414 = vmatprep.subr.mxu0 0.0
    %3415 = vmatpush1.msra.mxu0 %v942
    %3416 = vmatprep.subr.mxu0 0.0
    %3417 = vmatpush1.msra.mxu0 %v943
    %3418 = vmatprep.subr.mxu0 0.0
    %3419 = vmatpush1.msra.mxu0 %v944
    %3420 = vmatprep.subr.mxu0 0.0
    %3421 = vmatpush1.msra.mxu0 %v945
    %3422 = vmatprep.subr.mxu0 0.0
    %3423 = vmatpush1.msra.mxu0 %v946
    %3424 = vmatprep.subr.mxu0 0.0
    %3425 = vmatpush1.msra.mxu0 %v947
    %3426 = vmatprep.subr.mxu0 0.0
    %3427 = vmatpush1.msra.mxu0 %v948
    %3428 = vmatprep.subr.mxu0 0.0
    %3429 = vmatpush1.msra.mxu0 %v949
    %3430 = vmatprep.subr.mxu0 0.0
    %3431 = vmatpush1.msra.mxu0 %v950
    %3432 = vmatprep.subr.mxu0 0.0
    %3433 = vmatpush1.msra.mxu0 %v951
    %3434 = vmatprep.subr.mxu0 0.0
    %3435 = vmatpush1.msra.mxu0 %v952
    %3436 = vmatprep.subr.mxu0 0.0
    %3437 = vmatpush1.msra.mxu0 %v953
    %3438 = vmatprep.subr.mxu0 0.0
    %3439 = vmatpush1.msra.mxu0 %v954
    %3440 = vmatprep.subr.mxu0 0.0
    %3441 = vmatpush1.msra.mxu0 %v955
    %3442 = vmatprep.subr.mxu0 0.0
    %3443 = vmatpush1.msra.mxu0 %v956
    %3444 = vmatprep.subr.mxu0 0.0
    %3445 = vmatpush1.msra.mxu0 %v957
    %3446 = vmatprep.subr.mxu0 0.0
    %3447 = vmatpush1.msra.mxu0 %v958
    %3448 = vmatprep.subr.mxu0 0.0
    %3449 = vmatpush1.msra.mxu0 %v959
    %3450 = vmatprep.subr.mxu0 0.0
    %3451 = vmatpush1.msra.mxu0 %v960
    %3452 = vmatprep.subr.mxu0 0.0
    %3453 = vmatpush1.msra.mxu0 %v961
    %3454 = vmatprep.subr.mxu0 0.0
    %3455 = vmatpush1.msra.mxu0 %v962
    %3456 = vmatprep.subr.mxu0 0.0
    %3457 = vmatpush1.msra.mxu0 %v963
    %3458 = vmatprep.subr.mxu0 0.0
    %3459 = vmatpush1.msra.mxu0 %v964
    %3460 = vmatprep.mubr.f32.mxu0 %v1353
    %3461 = vmatmul.mubr.f32.gmra.mrb[0].mxu0 %v1345
    %v3462 = vpop.f32.mrb[0].mxu0
    %v3463 = vadd.f32 %v3393, %v3462
    %v3464 = vpop.f32.mrb[0].mxu0
    %3465 = vdwg.mxu0
    %3466 = vmatprep.subr.mxu0 0.0
    %3467 = vmatpush1.msra.mxu0 %v965
    %3468 = vmatprep.subr.mxu0 0.0
    %3469 = vmatpush1.msra.mxu0 %v966
    %3470 = vmatprep.subr.mxu0 0.0
    %3471 = vmatpush1.msra.mxu0 %v967
    %3472 = vmatprep.subr.mxu0 0.0
    %3473 = vmatpush1.msra.mxu0 %v968
    %3474 = vmatprep.subr.mxu0 0.0
    %3475 = vmatpush1.msra.mxu0 %v969
    %3476 = vmatprep.subr.mxu0 0.0
    %3477 = vmatpush1.msra.mxu0 %v970
    %3478 = vmatprep.subr.mxu0 0.0
    %3479 = vmatpush1.msra.mxu0 %v971
    %3480 = vmatprep.subr.mxu0 0.0
    %3481 = vmatpush1.msra.mxu0 %v972
    %3482 = vmatprep.subr.mxu0 0.0
    %3483 = vmatpush1.msra.mxu0 %v973
    %3484 = vmatprep.subr.mxu0 0.0
    %3485 = vmatpush1.msra.mxu0 %v974
    %3486 = vmatprep.subr.mxu0 0.0
    %3487 = vmatpush1.msra.mxu0 %v975
    %3488 = vmatprep.subr.mxu0 0.0
    %3489 = vmatpush1.msra.mxu0 %v976
    %3490 = vmatprep.subr.mxu0 0.0
    %3491 = vmatpush1.msra.mxu0 %v977
    %3492 = vmatprep.subr.mxu0 0.0
    %3493 = vmatpush1.msra.mxu0 %v978
    %3494 = vmatprep.subr.mxu0 0.0
    %3495 = vmatpush1.msra.mxu0 %v979
    %3496 = vmatprep.subr.mxu0 0.0
    %3497 = vmatpush1.msra.mxu0 %v980
    %3498 = vmatprep.subr.mxu0 0.0
    %3499 = vmatpush1.msra.mxu0 %v981
    %3500 = vmatprep.subr.mxu0 0.0
    %3501 = vmatpush1.msra.mxu0 %v982
    %3502 = vmatprep.subr.mxu0 0.0
    %3503 = vmatpush1.msra.mxu0 %v983
    %3504 = vmatprep.subr.mxu0 0.0
    %3505 = vmatpush1.msra.mxu0 %v984
    %3506 = vmatprep.subr.mxu0 0.0
    %3507 = vmatpush1.msra.mxu0 %v985
    %3508 = vmatprep.subr.mxu0 0.0
    %3509 = vmatpush1.msra.mxu0 %v986
    %3510 = vmatprep.subr.mxu0 0.0
    %3511 = vmatpush1.msra.mxu0 %v987
    %3512 = vmatprep.subr.mxu0 0.0
    %3513 = vmatpush1.msra.mxu0 %v988
    %3514 = vmatprep.subr.mxu0 0.0
    %3515 = vmatpush1.msra.mxu0 %v989
    %3516 = vmatprep.subr.mxu0 0.0
    %3517 = vmatpush1.msra.mxu0 %v990
    %3518 = vmatprep.subr.mxu0 0.0
    %3519 = vmatpush1.msra.mxu0 %v991
    %3520 = vmatprep.subr.mxu0 0.0
    %3521 = vmatpush1.msra.mxu0 %v992
    %3522 = vmatprep.subr.mxu0 0.0
    %3523 = vmatpush1.msra.mxu0 %v993
    %3524 = vmatprep.subr.mxu0 0.0
    %3525 = vmatpush1.msra.mxu0 %v994
    %3526 = vmatprep.subr.mxu0 0.0
    %3527 = vmatpush1.msra.mxu0 %v995
    %3528 = vmatprep.subr.mxu0 0.0
    %3529 = vmatpush1.msra.mxu0 %v996
    %3530 = vmatprep.mubr.f32.mxu0 %v1354
    %3531 = vmatmul.mubr.f32.gmra.mrb[0].mxu0 %v1352
    %v3532 = vpop.f32.mrb[0].mxu0
    %v3533 = vadd.f32 %v3463, %v3532
    %v3534 = vpop.f32.mrb[0].mxu0
    %3535 = vdwg.mxu0
    %3536 = vmatprep.subr.mxu0 0.0
    %3537 = vmatpush1.msra.mxu0 %v997
    %3538 = vmatprep.subr.mxu0 0.0
    %3539 = vmatpush1.msra.mxu0 %v998
    %3540 = vmatprep.subr.mxu0 0.0
    %3541 = vmatpush1.msra.mxu0 %v999
    %3542 = vmatprep.subr.mxu0 0.0
    %3543 = vmatpush1.msra.mxu0 %v1000
    %3544 = vmatprep.subr.mxu0 0.0
    %3545 = vmatpush1.msra.mxu0 %v1001
    %3546 = vmatprep.subr.mxu0 0.0
    %3547 = vmatpush1.msra.mxu0 %v1002
    %3548 = vmatprep.subr.mxu0 0.0
    %3549 = vmatpush1.msra.mxu0 %v1003
    %3550 = vmatprep.subr.mxu0 0.0
    %3551 = vmatpush1.msra.mxu0 %v1004
    %3552 = vmatprep.subr.mxu0 0.0
    %3553 = vmatpush1.msra.mxu0 %v1005
    %3554 = vmatprep.subr.mxu0 0.0
    %3555 = vmatpush1.msra.mxu0 %v1006
    %3556 = vmatprep.subr.mxu0 0.0
    %3557 = vmatpush1.msra.mxu0 %v1007
    %3558 = vmatprep.subr.mxu0 0.0
    %3559 = vmatpush1.msra.mxu0 %v1008
    %3560 = vmatprep.subr.mxu0 0.0
    %3561 = vmatpush1.msra.mxu0 %v1009
    %3562 = vmatprep.subr.mxu0 0.0
    %3563 = vmatpush1.msra.mxu0 %v1010
    %3564 = vmatprep.subr.mxu0 0.0
    %3565 = vmatpush1.msra.mxu0 %v1011
    %3566 = vmatprep.subr.mxu0 0.0
    %3567 = vmatpush1.msra.mxu0 %v1012
    %3568 = vmatprep.subr.mxu0 0.0
    %3569 = vmatpush1.msra.mxu0 %v1013
    %3570 = vmatprep.subr.mxu0 0.0
    %3571 = vmatpush1.msra.mxu0 %v1014
    %3572 = vmatprep.subr.mxu0 0.0
    %3573 = vmatpush1.msra.mxu0 %v1015
    %3574 = vmatprep.subr.mxu0 0.0
    %3575 = vmatpush1.msra.mxu0 %v1016
    %3576 = vmatprep.subr.mxu0 0.0
    %3577 = vmatpush1.msra.mxu0 %v1017
    %3578 = vmatprep.subr.mxu0 0.0
    %3579 = vmatpush1.msra.mxu0 %v1018
    %3580 = vmatprep.subr.mxu0 0.0
    %3581 = vmatpush1.msra.mxu0 %v1019
    %3582 = vmatprep.subr.mxu0 0.0
    %3583 = vmatpush1.msra.mxu0 %v1020
    %3584 = vmatprep.subr.mxu0 0.0
    %3585 = vmatpush1.msra.mxu0 %v1021
    %3586 = vmatprep.subr.mxu0 0.0
    %3587 = vmatpush1.msra.mxu0 %v1022
    %3588 = vmatprep.subr.mxu0 0.0
    %3589 = vmatpush1.msra.mxu0 %v1023
    %3590 = vmatprep.subr.mxu0 0.0
    %3591 = vmatpush1.msra.mxu0 %v1024
    %3592 = vmatprep.subr.mxu0 0.0
    %3593 = vmatpush1.msra.mxu0 %v1025
    %3594 = vmatprep.subr.mxu0 0.0
    %3595 = vmatpush1.msra.mxu0 %v1026
    %3596 = vmatprep.subr.mxu0 0.0
    %3597 = vmatpush1.msra.mxu0 %v1027
    %3598 = vmatprep.subr.mxu0 0.0
    %3599 = vmatpush1.msra.mxu0 %v1028
    %3600 = vmatprep.mubr.f32.mxu0 %v1370
    %3601 = vmatmul.mubr.f32.gmra.mrb[0].mxu0 %v1362
    %v3602 = vpop.f32.mrb[0].mxu0
    %v3603 = vadd.f32 %v3533, %v3602
    %v3604 = vpop.f32.mrb[0].mxu0
    %3605 = vdwg.mxu0
    %3606 = vmatprep.subr.mxu0 0.0
    %3607 = vmatpush1.msra.mxu0 %v1029
    %3608 = vmatprep.subr.mxu0 0.0
    %3609 = vmatpush1.msra.mxu0 %v1030
    %3610 = vmatprep.subr.mxu0 0.0
    %3611 = vmatpush1.msra.mxu0 %v1031
    %3612 = vmatprep.subr.mxu0 0.0
    %3613 = vmatpush1.msra.mxu0 %v1032
    %3614 = vmatprep.subr.mxu0 0.0
    %3615 = vmatpush1.msra.mxu0 %v1033
    %3616 = vmatprep.subr.mxu0 0.0
    %3617 = vmatpush1.msra.mxu0 %v1034
    %3618 = vmatprep.subr.mxu0 0.0
    %3619 = vmatpush1.msra.mxu0 %v1035
    %3620 = vmatprep.subr.mxu0 0.0
    %3621 = vmatpush1.msra.mxu0 %v1036
    %3622 = vmatprep.subr.mxu0 0.0
    %3623 = vmatpush1.msra.mxu0 %v1037
    %3624 = vmatprep.subr.mxu0 0.0
    %3625 = vmatpush1.msra.mxu0 %v1038
    %3626 = vmatprep.subr.mxu0 0.0
    %3627 = vmatpush1.msra.mxu0 %v1039
    %3628 = vmatprep.subr.mxu0 0.0
    %3629 = vmatpush1.msra.mxu0 %v1040
    %3630 = vmatprep.subr.mxu0 0.0
    %3631 = vmatpush1.msra.mxu0 %v1041
    %3632 = vmatprep.subr.mxu0 0.0
    %3633 = vmatpush1.msra.mxu0 %v1042
    %3634 = vmatprep.subr.mxu0 0.0
    %3635 = vmatpush1.msra.mxu0 %v1043
    %3636 = vmatprep.subr.mxu0 0.0
    %3637 = vmatpush1.msra.mxu0 %v1044
    %3638 = vmatprep.subr.mxu0 0.0
    %3639 = vmatpush1.msra.mxu0 %v1045
    %3640 = vmatprep.subr.mxu0 0.0
    %3641 = vmatpush1.msra.mxu0 %v1046
    %3642 = vmatprep.subr.mxu0 0.0
    %3643 = vmatpush1.msra.mxu0 %v1047
    %3644 = vmatprep.subr.mxu0 0.0
    %3645 = vmatpush1.msra.mxu0 %v1048
    %3646 = vmatprep.subr.mxu0 0.0
    %3647 = vmatpush1.msra.mxu0 %v1049
    %3648 = vmatprep.subr.mxu0 0.0
    %3649 = vmatpush1.msra.mxu0 %v1050
    %3650 = vmatprep.subr.mxu0 0.0
    %3651 = vmatpush1.msra.mxu0 %v1051
    %3652 = vmatprep.subr.mxu0 0.0
    %3653 = vmatpush1.msra.mxu0 %v1052
    %3654 = vmatprep.subr.mxu0 0.0
    %3655 = vmatpush1.msra.mxu0 %v1053
    %3656 = vmatprep.subr.mxu0 0.0
    %3657 = vmatpush1.msra.mxu0 %v1054
    %3658 = vmatprep.subr.mxu0 0.0
    %3659 = vmatpush1.msra.mxu0 %v1055
    %3660 = vmatprep.subr.mxu0 0.0
    %3661 = vmatpush1.msra.mxu0 %v1056
    %3662 = vmatprep.subr.mxu0 0.0
    %3663 = vmatpush1.msra.mxu0 %v1057
    %3664 = vmatprep.subr.mxu0 0.0
    %3665 = vmatpush1.msra.mxu0 %v1058
    %3666 = vmatprep.subr.mxu0 0.0
    %3667 = vmatpush1.msra.mxu0 %v1059
    %3668 = vmatprep.subr.mxu0 0.0
    %3669 = vmatpush1.msra.mxu0 %v1060
    %3670 = vmatprep.mubr.f32.mxu0 %v1371
    %3671 = vmatmul.mubr.f32.gmra.mrb[0].mxu0 %v1369
    %v3672 = vpop.f32.mrb[0].mxu0
    %v3673 = vadd.f32 %v3603, %v3672
    %v3674 = vpop.f32.mrb[0].mxu0
    %3675 = vdwg.mxu0
    %v3676 = vmax.f32 %v3673, 0.0
    %3677 = vst [vmem:[#allocation2] sm:$0x3] %v3676
    %v3678 = vld [vmem:[%s3] sm:$0x1]
    %v3680 = vlaneseq
    %v3681 = vshrl.u32 %v3680, 7
    %v3682 = vsub.s32 0, %v3681
    %v3683 = vrot.slane %v3678, %v3682
    %v3701 = vcombine.high %v1061, %v1061
    %v3703 = vunpack.c.l.s4 1983009808
    %v3704 = vunpack.c.0.s8 %v3703
    %v3705 = vlaneseq
    %v3706 = vshrl.u32 %v3705, 7
    %v3707 = vsub.s32 %v3704, %v3706
    %v3708 = vrot.slane %v1061, %v3707
    %v3710 = vunpack.c.l.s4 1983009808
    %v3711 = vunpack.c.0.s8 %v3710
    %v3712 = vlaneseq
    %v3713 = vshrl.u32 %v3712, 7
    %v3714 = vsub.s32 %v3711, %v3713
    %v3715 = vrot.slane %v3701, %v3714
    %v3716 = vcombine.high %v3708, %v3708
    %v3717 = vcombine.high %v3715, %v3715
    %v3718 = vcombine.high %v1062, %v1062
    %v3720 = vunpack.c.l.s4 1983009808
    %v3721 = vunpack.c.0.s8 %v3720
    %v3722 = vlaneseq
    %v3723 = vshrl.u32 %v3722, 7
    %v3724 = vsub.s32 %v3721, %v3723
    %v3725 = vrot.slane %v1062, %v3724
    %v3727 = vunpack.c.l.s4 1983009808
    %v3728 = vunpack.c.0.s8 %v3727
    %v3729 = vlaneseq
    %v3730 = vshrl.u32 %v3729, 7
    %v3731 = vsub.s32 %v3728, %v3730
    %v3732 = vrot.slane %v3718, %v3731
    %v3733 = vcombine.high %v3725, %v3725
    %v3734 = vcombine.high %v3732, %v3732
    %v3735 = vcombine.high %v1063, %v1063
    %v3737 = vunpack.c.l.s4 1983009808
    %v3738 = vunpack.c.0.s8 %v3737
    %v3739 = vlaneseq
    %v3740 = vshrl.u32 %v3739, 7
    %v3741 = vsub.s32 %v3738, %v3740
    %v3742 = vrot.slane %v1063, %v3741
    %v3744 = vunpack.c.l.s4 1983009808
    %v3745 = vunpack.c.0.s8 %v3744
    %v3746 = vlaneseq
    %v3747 = vshrl.u32 %v3746, 7
    %v3748 = vsub.s32 %v3745, %v3747
    %v3749 = vrot.slane %v3735, %v3748
    %v3750 = vcombine.high %v3742, %v3742
    %v3751 = vcombine.high %v3749, %v3749
    %v3752 = vcombine.high %v1064, %v1064
    %v3754 = vunpack.c.l.s4 1983009808
    %v3755 = vunpack.c.0.s8 %v3754
    %v3756 = vlaneseq
    %v3757 = vshrl.u32 %v3756, 7
    %v3758 = vsub.s32 %v3755, %v3757
    %v3759 = vrot.slane %v1064, %v3758
    %v3761 = vunpack.c.l.s4 1983009808
    %v3762 = vunpack.c.0.s8 %v3761
    %v3763 = vlaneseq
    %v3764 = vshrl.u32 %v3763, 7
    %v3765 = vsub.s32 %v3762, %v3764
    %v3766 = vrot.slane %v3752, %v3765
    %v3767 = vcombine.high %v3759, %v3759
    %v3768 = vcombine.high %v3766, %v3766
    %v3769 = vcombine.high %v1065, %v1065
    %v3771 = vunpack.c.l.s4 1983009808
    %v3772 = vunpack.c.0.s8 %v3771
    %v3773 = vlaneseq
    %v3774 = vshrl.u32 %v3773, 7
    %v3775 = vsub.s32 %v3772, %v3774
    %v3776 = vrot.slane %v1065, %v3775
    %v3778 = vunpack.c.l.s4 1983009808
    %v3779 = vunpack.c.0.s8 %v3778
    %v3780 = vlaneseq
    %v3781 = vshrl.u32 %v3780, 7
    %v3782 = vsub.s32 %v3779, %v3781
    %v3783 = vrot.slane %v3769, %v3782
    %v3784 = vcombine.high %v3776, %v3776
    %v3785 = vcombine.high %v3783, %v3783
    %v3786 = vcombine.high %v1066, %v1066
    %v3788 = vunpack.c.l.s4 1983009808
    %v3789 = vunpack.c.0.s8 %v3788
    %v3790 = vlaneseq
    %v3791 = vshrl.u32 %v3790, 7
    %v3792 = vsub.s32 %v3789, %v3791
    %v3793 = vrot.slane %v1066, %v3792
    %v3795 = vunpack.c.l.s4 1983009808
    %v3796 = vunpack.c.0.s8 %v3795
    %v3797 = vlaneseq
    %v3798 = vshrl.u32 %v3797, 7
    %v3799 = vsub.s32 %v3796, %v3798
    %v3800 = vrot.slane %v3786, %v3799
    %v3801 = vcombine.high %v3793, %v3793
    %v3802 = vcombine.high %v3800, %v3800
    %v3803 = vcombine.high %v1067, %v1067
    %v3805 = vunpack.c.l.s4 1983009808
    %v3806 = vunpack.c.0.s8 %v3805
    %v3807 = vlaneseq
    %v3808 = vshrl.u32 %v3807, 7
    %v3809 = vsub.s32 %v3806, %v3808
    %v3810 = vrot.slane %v1067, %v3809
    %v3812 = vunpack.c.l.s4 1983009808
    %v3813 = vunpack.c.0.s8 %v3812
    %v3814 = vlaneseq
    %v3815 = vshrl.u32 %v3814, 7
    %v3816 = vsub.s32 %v3813, %v3815
    %v3817 = vrot.slane %v3803, %v3816
    %v3818 = vcombine.high %v3810, %v3810
    %v3819 = vcombine.high %v3817, %v3817
    %v3820 = vcombine.high %v1068, %v1068
    %v3822 = vunpack.c.l.s4 1983009808
    %v3823 = vunpack.c.0.s8 %v3822
    %v3824 = vlaneseq
    %v3825 = vshrl.u32 %v3824, 7
    %v3826 = vsub.s32 %v3823, %v3825
    %v3827 = vrot.slane %v1068, %v3826
    %v3829 = vunpack.c.l.s4 1983009808
    %v3830 = vunpack.c.0.s8 %v3829
    %v3831 = vlaneseq
    %v3832 = vshrl.u32 %v3831, 7
    %v3833 = vsub.s32 %v3830, %v3832
    %v3834 = vrot.slane %v3820, %v3833
    %v3835 = vcombine.high %v3827, %v3827
    %v3836 = vcombine.high %v3834, %v3834
    %v3837 = vcombine.high %v1069, %v1069
    %v3839 = vunpack.c.l.s4 1983009808
    %v3840 = vunpack.c.0.s8 %v3839
    %v3841 = vlaneseq
    %v3842 = vshrl.u32 %v3841, 7
    %v3843 = vsub.s32 %v3840, %v3842
    %v3844 = vrot.slane %v1069, %v3843
    %v3846 = vunpack.c.l.s4 1983009808
    %v3847 = vunpack.c.0.s8 %v3846
    %v3848 = vlaneseq
    %v3849 = vshrl.u32 %v3848, 7
    %v3850 = vsub.s32 %v3847, %v3849
    %v3851 = vrot.slane %v3837, %v3850
    %v3852 = vcombine.high %v3844, %v3844
    %v3853 = vcombine.high %v3851, %v3851
    %v3854 = vcombine.high %v1070, %v1070
    %v3856 = vunpack.c.l.s4 1983009808
    %v3857 = vunpack.c.0.s8 %v3856
    %v3858 = vlaneseq
    %v3859 = vshrl.u32 %v3858, 7
    %v3860 = vsub.s32 %v3857, %v3859
    %v3861 = vrot.slane %v1070, %v3860
    %v3863 = vunpack.c.l.s4 1983009808
    %v3864 = vunpack.c.0.s8 %v3863
    %v3865 = vlaneseq
    %v3866 = vshrl.u32 %v3865, 7
    %v3867 = vsub.s32 %v3864, %v3866
    %v3868 = vrot.slane %v3854, %v3867
    %v3869 = vcombine.high %v3861, %v3861
    %v3870 = vcombine.high %v3868, %v3868
    %v3871 = vcombine.high %v1071, %v1071
    %v3873 = vunpack.c.l.s4 1983009808
    %v3874 = vunpack.c.0.s8 %v3873
    %v3875 = vlaneseq
    %v3876 = vshrl.u32 %v3875, 7
    %v3877 = vsub.s32 %v3874, %v3876
    %v3878 = vrot.slane %v1071, %v3877
    %v3880 = vunpack.c.l.s4 1983009808
    %v3881 = vunpack.c.0.s8 %v3880
    %v3882 = vlaneseq
    %v3883 = vshrl.u32 %v3882, 7
    %v3884 = vsub.s32 %v3881, %v3883
    %v3885 = vrot.slane %v3871, %v3884
    %v3886 = vcombine.high %v3878, %v3878
    %v3887 = vcombine.high %v3885, %v3885
    %v3888 = vcombine.high %v1072, %v1072
    %v3890 = vunpack.c.l.s4 1983009808
    %v3891 = vunpack.c.0.s8 %v3890
    %v3892 = vlaneseq
    %v3893 = vshrl.u32 %v3892, 7
    %v3894 = vsub.s32 %v3891, %v3893
    %v3895 = vrot.slane %v1072, %v3894
    %v3897 = vunpack.c.l.s4 1983009808
    %v3898 = vunpack.c.0.s8 %v3897
    %v3899 = vlaneseq
    %v3900 = vshrl.u32 %v3899, 7
    %v3901 = vsub.s32 %v3898, %v3900
    %v3902 = vrot.slane %v3888, %v3901
    %v3903 = vcombine.high %v3895, %v3895
    %v3904 = vcombine.high %v3902, %v3902
    %v3905 = vcombine.high %v1073, %v1073
    %v3907 = vunpack.c.l.s4 1983009808
    %v3908 = vunpack.c.0.s8 %v3907
    %v3909 = vlaneseq
    %v3910 = vshrl.u32 %v3909, 7
    %v3911 = vsub.s32 %v3908, %v3910
    %v3912 = vrot.slane %v1073, %v3911
    %v3914 = vunpack.c.l.s4 1983009808
    %v3915 = vunpack.c.0.s8 %v3914
    %v3916 = vlaneseq
    %v3917 = vshrl.u32 %v3916, 7
    %v3918 = vsub.s32 %v3915, %v3917
    %v3919 = vrot.slane %v3905, %v3918
    %v3920 = vcombine.high %v3912, %v3912
    %v3921 = vcombine.high %v3919, %v3919
    %v3922 = vcombine.high %v1074, %v1074
    %v3924 = vunpack.c.l.s4 1983009808
    %v3925 = vunpack.c.0.s8 %v3924
    %v3926 = vlaneseq
    %v3927 = vshrl.u32 %v3926, 7
    %v3928 = vsub.s32 %v3925, %v3927
    %v3929 = vrot.slane %v1074, %v3928
    %v3931 = vunpack.c.l.s4 1983009808
    %v3932 = vunpack.c.0.s8 %v3931
    %v3933 = vlaneseq
    %v3934 = vshrl.u32 %v3933, 7
    %v3935 = vsub.s32 %v3932, %v3934
    %v3936 = vrot.slane %v3922, %v3935
    %v3937 = vcombine.high %v3929, %v3929
    %v3938 = vcombine.high %v3936, %v3936
    %v3939 = vcombine.high %v1075, %v1075
    %v3941 = vunpack.c.l.s4 1983009808
    %v3942 = vunpack.c.0.s8 %v3941
    %v3943 = vlaneseq
    %v3944 = vshrl.u32 %v3943, 7
    %v3945 = vsub.s32 %v3942, %v3944
    %v3946 = vrot.slane %v1075, %v3945
    %v3948 = vunpack.c.l.s4 1983009808
    %v3949 = vunpack.c.0.s8 %v3948
    %v3950 = vlaneseq
    %v3951 = vshrl.u32 %v3950, 7
    %v3952 = vsub.s32 %v3949, %v3951
    %v3953 = vrot.slane %v3939, %v3952
    %v3954 = vcombine.high %v3946, %v3946
    %v3955 = vcombine.high %v3953, %v3953
    %v3956 = vcombine.high %v1076, %v1076
    %v3958 = vunpack.c.l.s4 1983009808
    %v3959 = vunpack.c.0.s8 %v3958
    %v3960 = vlaneseq
    %v3961 = vshrl.u32 %v3960, 7
    %v3962 = vsub.s32 %v3959, %v3961
    %v3963 = vrot.slane %v1076, %v3962
    %v3965 = vunpack.c.l.s4 1983009808
    %v3966 = vunpack.c.0.s8 %v3965
    %v3967 = vlaneseq
    %v3968 = vshrl.u32 %v3967, 7
    %v3969 = vsub.s32 %v3966, %v3968
    %v3970 = vrot.slane %v3956, %v3969
    %v3971 = vcombine.high %v3963, %v3963
    %v3972 = vcombine.high %v3970, %v3970
    %4037 = vmatprep.subr.mxu0 0.0
    %4038 = vmatpush1.msra.mxu0 %v37
    %4039 = vmatprep.subr.mxu0 0.0
    %4040 = vmatpush1.msra.mxu0 %v38
    %4041 = vmatprep.subr.mxu0 0.0
    %4042 = vmatpush1.msra.mxu0 %v39
    %4043 = vmatprep.subr.mxu0 0.0
    %4044 = vmatpush1.msra.mxu0 %v40
    %4045 = vmatprep.subr.mxu0 0.0
    %4046 = vmatpush1.msra.mxu0 %v41
    %4047 = vmatprep.subr.mxu0 0.0
    %4048 = vmatpush1.msra.mxu0 %v42
    %4049 = vmatprep.subr.mxu0 0.0
    %4050 = vmatpush1.msra.mxu0 %v43
    %4051 = vmatprep.subr.mxu0 0.0
    %4052 = vmatpush1.msra.mxu0 %v44
    %4053 = vmatprep.subr.mxu0 0.0
    %4054 = vmatpush1.msra.mxu0 %v45
    %4055 = vmatprep.subr.mxu0 0.0
    %4056 = vmatpush1.msra.mxu0 %v46
    %4057 = vmatprep.subr.mxu0 0.0
    %4058 = vmatpush1.msra.mxu0 %v47
    %4059 = vmatprep.subr.mxu0 0.0
    %4060 = vmatpush1.msra.mxu0 %v48
    %4061 = vmatprep.subr.mxu0 0.0
    %4062 = vmatpush1.msra.mxu0 %v49
    %4063 = vmatprep.subr.mxu0 0.0
    %4064 = vmatpush1.msra.mxu0 %v50
    %4065 = vmatprep.subr.mxu0 0.0
    %4066 = vmatpush1.msra.mxu0 %v51
    %4067 = vmatprep.subr.mxu0 0.0
    %4068 = vmatpush1.msra.mxu0 %v52
    %4069 = vmatprep.subr.mxu0 0.0
    %4070 = vmatpush1.msra.mxu0 %v53
    %4071 = vmatprep.subr.mxu0 0.0
    %4072 = vmatpush1.msra.mxu0 %v54
    %4073 = vmatprep.subr.mxu0 0.0
    %4074 = vmatpush1.msra.mxu0 %v55
    %4075 = vmatprep.subr.mxu0 0.0
    %4076 = vmatpush1.msra.mxu0 %v56
    %4077 = vmatprep.subr.mxu0 0.0
    %4078 = vmatpush1.msra.mxu0 %v57
    %4079 = vmatprep.subr.mxu0 0.0
    %4080 = vmatpush1.msra.mxu0 %v58
    %4081 = vmatprep.subr.mxu0 0.0
    %4082 = vmatpush1.msra.mxu0 %v59
    %4083 = vmatprep.subr.mxu0 0.0
    %4084 = vmatpush1.msra.mxu0 %v60
    %4085 = vmatprep.subr.mxu0 0.0
    %4086 = vmatpush1.msra.mxu0 %v61
    %4087 = vmatprep.subr.mxu0 0.0
    %4088 = vmatpush1.msra.mxu0 %v62
    %4089 = vmatprep.subr.mxu0 0.0
    %4090 = vmatpush1.msra.mxu0 %v63
    %4091 = vmatprep.subr.mxu0 0.0
    %4092 = vmatpush1.msra.mxu0 %v64
    %4093 = vmatprep.subr.mxu0 0.0
    %4094 = vmatpush1.msra.mxu0 %v65
    %4095 = vmatprep.subr.mxu0 0.0
    %4096 = vmatpush1.msra.mxu0 %v66
    %4097 = vmatprep.subr.mxu0 0.0
    %4098 = vmatpush1.msra.mxu0 %v67
    %4099 = vmatprep.subr.mxu0 0.0
    %4100 = vmatpush1.msra.mxu0 %v68
    %4101 = vmatprep.mubr.f32.mxu0 %v3716
    %4102 = vmatmul.mubr.f32.gmra.mrb[0].mxu0 %v3708
    %v4103 = vpop.f32.mrb[0].mxu0
    %v4104 = vadd.f32 %v3683, %v4103
    %v4105 = vpop.f32.mrb[0].mxu0
    %4106 = vdwg.mxu0
    %4107 = vmatprep.subr.mxu0 0.0
    %4108 = vmatpush1.msra.mxu0 %v69
    %4109 = vmatprep.subr.mxu0 0.0
    %4110 = vmatpush1.msra.mxu0 %v70
    %4111 = vmatprep.subr.mxu0 0.0
    %4112 = vmatpush1.msra.mxu0 %v71
    %4113 = vmatprep.subr.mxu0 0.0
    %4114 = vmatpush1.msra.mxu0 %v72
    %4115 = vmatprep.subr.mxu0 0.0
    %4116 = vmatpush1.msra.mxu0 %v73
    %4117 = vmatprep.subr.mxu0 0.0
    %4118 = vmatpush1.msra.mxu0 %v74
    %4119 = vmatprep.subr.mxu0 0.0
    %4120 = vmatpush1.msra.mxu0 %v75
    %4121 = vmatprep.subr.mxu0 0.0
    %4122 = vmatpush1.msra.mxu0 %v76
    %4123 = vmatprep.subr.mxu0 0.0
    %4124 = vmatpush1.msra.mxu0 %v77
    %4125 = vmatprep.subr.mxu0 0.0
    %4126 = vmatpush1.msra.mxu0 %v78
    %4127 = vmatprep.subr.mxu0 0.0
    %4128 = vmatpush1.msra.mxu0 %v79
    %4129 = vmatprep.subr.mxu0 0.0
    %4130 = vmatpush1.msra.mxu0 %v80
    %4131 = vmatprep.subr.mxu0 0.0
    %4132 = vmatpush1.msra.mxu0 %v81
    %4133 = vmatprep.subr.mxu0 0.0
    %4134 = vmatpush1.msra.mxu0 %v82
    %4135 = vmatprep.subr.mxu0 0.0
    %4136 = vmatpush1.msra.mxu0 %v83
    %4137 = vmatprep.subr.mxu0 0.0
    %4138 = vmatpush1.msra.mxu0 %v84
    %4139 = vmatprep.subr.mxu0 0.0
    %4140 = vmatpush1.msra.mxu0 %v85
    %4141 = vmatprep.subr.mxu0 0.0
    %4142 = vmatpush1.msra.mxu0 %v86
    %4143 = vmatprep.subr.mxu0 0.0
    %4144 = vmatpush1.msra.mxu0 %v87
    %4145 = vmatprep.subr.mxu0 0.0
    %4146 = vmatpush1.msra.mxu0 %v88
    %4147 = vmatprep.subr.mxu0 0.0
    %4148 = vmatpush1.msra.mxu0 %v89
    %4149 = vmatprep.subr.mxu0 0.0
    %4150 = vmatpush1.msra.mxu0 %v90
    %4151 = vmatprep.subr.mxu0 0.0
    %4152 = vmatpush1.msra.mxu0 %v91
    %4153 = vmatprep.subr.mxu0 0.0
    %4154 = vmatpush1.msra.mxu0 %v92
    %4155 = vmatprep.subr.mxu0 0.0
    %4156 = vmatpush1.msra.mxu0 %v93
    %4157 = vmatprep.subr.mxu0 0.0
    %4158 = vmatpush1.msra.mxu0 %v94
    %4159 = vmatprep.subr.mxu0 0.0
    %4160 = vmatpush1.msra.mxu0 %v95
    %4161 = vmatprep.subr.mxu0 0.0
    %4162 = vmatpush1.msra.mxu0 %v96
    %4163 = vmatprep.subr.mxu0 0.0
    %4164 = vmatpush1.msra.mxu0 %v97
    %4165 = vmatprep.subr.mxu0 0.0
    %4166 = vmatpush1.msra.mxu0 %v98
    %4167 = vmatprep.subr.mxu0 0.0
    %4168 = vmatpush1.msra.mxu0 %v99
    %4169 = vmatprep.subr.mxu0 0.0
    %4170 = vmatpush1.msra.mxu0 %v100
    %4171 = vmatprep.mubr.f32.mxu0 %v3717
    %4172 = vmatmul.mubr.f32.gmra.mrb[0].mxu0 %v3715
    %v4173 = vpop.f32.mrb[0].mxu0
    %v4174 = vadd.f32 %v4104, %v4173
    %v4175 = vpop.f32.mrb[0].mxu0
    %4176 = vdwg.mxu0
    %4177 = vmatprep.subr.mxu0 0.0
    %4178 = vmatpush1.msra.mxu0 %v101
    %4179 = vmatprep.subr.mxu0 0.0
    %4180 = vmatpush1.msra.mxu0 %v102
    %4181 = vmatprep.subr.mxu0 0.0
    %4182 = vmatpush1.msra.mxu0 %v103
    %4183 = vmatprep.subr.mxu0 0.0
    %4184 = vmatpush1.msra.mxu0 %v104
    %4185 = vmatprep.subr.mxu0 0.0
    %4186 = vmatpush1.msra.mxu0 %v105
    %4187 = vmatprep.subr.mxu0 0.0
    %4188 = vmatpush1.msra.mxu0 %v106
    %4189 = vmatprep.subr.mxu0 0.0
    %4190 = vmatpush1.msra.mxu0 %v107
    %4191 = vmatprep.subr.mxu0 0.0
    %4192 = vmatpush1.msra.mxu0 %v108
    %4193 = vmatprep.subr.mxu0 0.0
    %4194 = vmatpush1.msra.mxu0 %v109
    %4195 = vmatprep.subr.mxu0 0.0
    %4196 = vmatpush1.msra.mxu0 %v110
    %4197 = vmatprep.subr.mxu0 0.0
    %4198 = vmatpush1.msra.mxu0 %v111
    %4199 = vmatprep.subr.mxu0 0.0
    %4200 = vmatpush1.msra.mxu0 %v112
    %4201 = vmatprep.subr.mxu0 0.0
    %4202 = vmatpush1.msra.mxu0 %v113
    %4203 = vmatprep.subr.mxu0 0.0
    %4204 = vmatpush1.msra.mxu0 %v114
    %4205 = vmatprep.subr.mxu0 0.0
    %4206 = vmatpush1.msra.mxu0 %v115
    %4207 = vmatprep.subr.mxu0 0.0
    %4208 = vmatpush1.msra.mxu0 %v116
    %4209 = vmatprep.subr.mxu0 0.0
    %4210 = vmatpush1.msra.mxu0 %v117
    %4211 = vmatprep.subr.mxu0 0.0
    %4212 = vmatpush1.msra.mxu0 %v118
    %4213 = vmatprep.subr.mxu0 0.0
    %4214 = vmatpush1.msra.mxu0 %v119
    %4215 = vmatprep.subr.mxu0 0.0
    %4216 = vmatpush1.msra.mxu0 %v120
    %4217 = vmatprep.subr.mxu0 0.0
    %4218 = vmatpush1.msra.mxu0 %v121
    %4219 = vmatprep.subr.mxu0 0.0
    %4220 = vmatpush1.msra.mxu0 %v122
    %4221 = vmatprep.subr.mxu0 0.0
    %4222 = vmatpush1.msra.mxu0 %v123
    %4223 = vmatprep.subr.mxu0 0.0
    %4224 = vmatpush1.msra.mxu0 %v124
    %4225 = vmatprep.subr.mxu0 0.0
    %4226 = vmatpush1.msra.mxu0 %v125
    %4227 = vmatprep.subr.mxu0 0.0
    %4228 = vmatpush1.msra.mxu0 %v126
    %4229 = vmatprep.subr.mxu0 0.0
    %4230 = vmatpush1.msra.mxu0 %v127
    %4231 = vmatprep.subr.mxu0 0.0
    %4232 = vmatpush1.msra.mxu0 %v128
    %4233 = vmatprep.subr.mxu0 0.0
    %4234 = vmatpush1.msra.mxu0 %v129
    %4235 = vmatprep.subr.mxu0 0.0
    %4236 = vmatpush1.msra.mxu0 %v130
    %4237 = vmatprep.subr.mxu0 0.0
    %4238 = vmatpush1.msra.mxu0 %v131
    %4239 = vmatprep.subr.mxu0 0.0
    %4240 = vmatpush1.msra.mxu0 %v132
    %4241 = vmatprep.mubr.f32.mxu0 %v3733
    %4242 = vmatmul.mubr.f32.gmra.mrb[0].mxu0 %v3725
    %v4243 = vpop.f32.mrb[0].mxu0
    %v4244 = vadd.f32 %v4174, %v4243
    %v4245 = vpop.f32.mrb[0].mxu0
    %4246 = vdwg.mxu0
    %4247 = vmatprep.subr.mxu0 0.0
    %4248 = vmatpush1.msra.mxu0 %v133
    %4249 = vmatprep.subr.mxu0 0.0
    %4250 = vmatpush1.msra.mxu0 %v134
    %4251 = vmatprep.subr.mxu0 0.0
    %4252 = vmatpush1.msra.mxu0 %v135
    %4253 = vmatprep.subr.mxu0 0.0
    %4254 = vmatpush1.msra.mxu0 %v136
    %4255 = vmatprep.subr.mxu0 0.0
    %4256 = vmatpush1.msra.mxu0 %v137
    %4257 = vmatprep.subr.mxu0 0.0
    %4258 = vmatpush1.msra.mxu0 %v138
    %4259 = vmatprep.subr.mxu0 0.0
    %4260 = vmatpush1.msra.mxu0 %v139
    %4261 = vmatprep.subr.mxu0 0.0
    %4262 = vmatpush1.msra.mxu0 %v140
    %4263 = vmatprep.subr.mxu0 0.0
    %4264 = vmatpush1.msra.mxu0 %v141
    %4265 = vmatprep.subr.mxu0 0.0
    %4266 = vmatpush1.msra.mxu0 %v142
    %4267 = vmatprep.subr.mxu0 0.0
    %4268 = vmatpush1.msra.mxu0 %v143
    %4269 = vmatprep.subr.mxu0 0.0
    %4270 = vmatpush1.msra.mxu0 %v144
    %4271 = vmatprep.subr.mxu0 0.0
    %4272 = vmatpush1.msra.mxu0 %v145
    %4273 = vmatprep.subr.mxu0 0.0
    %4274 = vmatpush1.msra.mxu0 %v146
    %4275 = vmatprep.subr.mxu0 0.0
    %4276 = vmatpush1.msra.mxu0 %v147
    %4277 = vmatprep.subr.mxu0 0.0
    %4278 = vmatpush1.msra.mxu0 %v148
    %4279 = vmatprep.subr.mxu0 0.0
    %4280 = vmatpush1.msra.mxu0 %v149
    %4281 = vmatprep.subr.mxu0 0.0
    %4282 = vmatpush1.msra.mxu0 %v150
    %4283 = vmatprep.subr.mxu0 0.0
    %4284 = vmatpush1.msra.mxu0 %v151
    %4285 = vmatprep.subr.mxu0 0.0
    %4286 = vmatpush1.msra.mxu0 %v152
    %4287 = vmatprep.subr.mxu0 0.0
    %4288 = vmatpush1.msra.mxu0 %v153
    %4289 = vmatprep.subr.mxu0 0.0
    %4290 = vmatpush1.msra.mxu0 %v154
    %4291 = vmatprep.subr.mxu0 0.0
    %4292 = vmatpush1.msra.mxu0 %v155
    %4293 = vmatprep.subr.mxu0 0.0
    %4294 = vmatpush1.msra.mxu0 %v156
    %4295 = vmatprep.subr.mxu0 0.0
    %4296 = vmatpush1.msra.mxu0 %v157
    %4297 = vmatprep.subr.mxu0 0.0
    %4298 = vmatpush1.msra.mxu0 %v158
    %4299 = vmatprep.subr.mxu0 0.0
    %4300 = vmatpush1.msra.mxu0 %v159
    %4301 = vmatprep.subr.mxu0 0.0
    %4302 = vmatpush1.msra.mxu0 %v160
    %4303 = vmatprep.subr.mxu0 0.0
    %4304 = vmatpush1.msra.mxu0 %v161
    %4305 = vmatprep.subr.mxu0 0.0
    %4306 = vmatpush1.msra.mxu0 %v162
    %4307 = vmatprep.subr.mxu0 0.0
    %4308 = vmatpush1.msra.mxu0 %v163
    %4309 = vmatprep.subr.mxu0 0.0
    %4310 = vmatpush1.msra.mxu0 %v164
    %4311 = vmatprep.mubr.f32.mxu0 %v3734
    %4312 = vmatmul.mubr.f32.gmra.mrb[0].mxu0 %v3732
    %v4313 = vpop.f32.mrb[0].mxu0
    %v4314 = vadd.f32 %v4244, %v4313
    %v4315 = vpop.f32.mrb[0].mxu0
    %4316 = vdwg.mxu0
    %4317 = vmatprep.subr.mxu0 0.0
    %4318 = vmatpush1.msra.mxu0 %v165
    %4319 = vmatprep.subr.mxu0 0.0
    %4320 = vmatpush1.msra.mxu0 %v166
    %4321 = vmatprep.subr.mxu0 0.0
    %4322 = vmatpush1.msra.mxu0 %v167
    %4323 = vmatprep.subr.mxu0 0.0
    %4324 = vmatpush1.msra.mxu0 %v168
    %4325 = vmatprep.subr.mxu0 0.0
    %4326 = vmatpush1.msra.mxu0 %v169
    %4327 = vmatprep.subr.mxu0 0.0
    %4328 = vmatpush1.msra.mxu0 %v170
    %4329 = vmatprep.subr.mxu0 0.0
    %4330 = vmatpush1.msra.mxu0 %v171
    %4331 = vmatprep.subr.mxu0 0.0
    %4332 = vmatpush1.msra.mxu0 %v172
    %4333 = vmatprep.subr.mxu0 0.0
    %4334 = vmatpush1.msra.mxu0 %v173
    %4335 = vmatprep.subr.mxu0 0.0
    %4336 = vmatpush1.msra.mxu0 %v174
    %4337 = vmatprep.subr.mxu0 0.0
    %4338 = vmatpush1.msra.mxu0 %v175
    %4339 = vmatprep.subr.mxu0 0.0
    %4340 = vmatpush1.msra.mxu0 %v176
    %4341 = vmatprep.subr.mxu0 0.0
    %4342 = vmatpush1.msra.mxu0 %v177
    %4343 = vmatprep.subr.mxu0 0.0
    %4344 = vmatpush1.msra.mxu0 %v178
    %4345 = vmatprep.subr.mxu0 0.0
    %4346 = vmatpush1.msra.mxu0 %v179
    %4347 = vmatprep.subr.mxu0 0.0
    %4348 = vmatpush1.msra.mxu0 %v180
    %4349 = vmatprep.subr.mxu0 0.0
    %4350 = vmatpush1.msra.mxu0 %v181
    %4351 = vmatprep.subr.mxu0 0.0
    %4352 = vmatpush1.msra.mxu0 %v182
    %4353 = vmatprep.subr.mxu0 0.0
    %4354 = vmatpush1.msra.mxu0 %v183
    %4355 = vmatprep.subr.mxu0 0.0
    %4356 = vmatpush1.msra.mxu0 %v184
    %4357 = vmatprep.subr.mxu0 0.0
    %4358 = vmatpush1.msra.mxu0 %v185
    %4359 = vmatprep.subr.mxu0 0.0
    %4360 = vmatpush1.msra.mxu0 %v186
    %4361 = vmatprep.subr.mxu0 0.0
    %4362 = vmatpush1.msra.mxu0 %v187
    %4363 = vmatprep.subr.mxu0 0.0
    %4364 = vmatpush1.msra.mxu0 %v188
    %4365 = vmatprep.subr.mxu0 0.0
    %4366 = vmatpush1.msra.mxu0 %v189
    %4367 = vmatprep.subr.mxu0 0.0
    %4368 = vmatpush1.msra.mxu0 %v190
    %4369 = vmatprep.subr.mxu0 0.0
    %4370 = vmatpush1.msra.mxu0 %v191
    %4371 = vmatprep.subr.mxu0 0.0
    %4372 = vmatpush1.msra.mxu0 %v192
    %4373 = vmatprep.subr.mxu0 0.0
    %4374 = vmatpush1.msra.mxu0 %v193
    %4375 = vmatprep.subr.mxu0 0.0
    %4376 = vmatpush1.msra.mxu0 %v194
    %4377 = vmatprep.subr.mxu0 0.0
    %4378 = vmatpush1.msra.mxu0 %v195
    %4379 = vmatprep.subr.mxu0 0.0
    %4380 = vmatpush1.msra.mxu0 %v196
    %4381 = vmatprep.mubr.f32.mxu0 %v3750
    %4382 = vmatmul.mubr.f32.gmra.mrb[0].mxu0 %v3742
    %v4383 = vpop.f32.mrb[0].mxu0
    %v4384 = vadd.f32 %v4314, %v4383
    %v4385 = vpop.f32.mrb[0].mxu0
    %4386 = vdwg.mxu0
    %4387 = vmatprep.subr.mxu0 0.0
    %4388 = vmatpush1.msra.mxu0 %v197
    %4389 = vmatprep.subr.mxu0 0.0
    %4390 = vmatpush1.msra.mxu0 %v198
    %4391 = vmatprep.subr.mxu0 0.0
    %4392 = vmatpush1.msra.mxu0 %v199
    %4393 = vmatprep.subr.mxu0 0.0
    %4394 = vmatpush1.msra.mxu0 %v200
    %4395 = vmatprep.subr.mxu0 0.0
    %4396 = vmatpush1.msra.mxu0 %v201
    %4397 = vmatprep.subr.mxu0 0.0
    %4398 = vmatpush1.msra.mxu0 %v202
    %4399 = vmatprep.subr.mxu0 0.0
    %4400 = vmatpush1.msra.mxu0 %v203
    %4401 = vmatprep.subr.mxu0 0.0
    %4402 = vmatpush1.msra.mxu0 %v204
    %4403 = vmatprep.subr.mxu0 0.0
    %4404 = vmatpush1.msra.mxu0 %v205
    %4405 = vmatprep.subr.mxu0 0.0
    %4406 = vmatpush1.msra.mxu0 %v206
    %4407 = vmatprep.subr.mxu0 0.0
    %4408 = vmatpush1.msra.mxu0 %v207
    %4409 = vmatprep.subr.mxu0 0.0
    %4410 = vmatpush1.msra.mxu0 %v208
    %4411 = vmatprep.subr.mxu0 0.0
    %4412 = vmatpush1.msra.mxu0 %v209
    %4413 = vmatprep.subr.mxu0 0.0
    %4414 = vmatpush1.msra.mxu0 %v210
    %4415 = vmatprep.subr.mxu0 0.0
    %4416 = vmatpush1.msra.mxu0 %v211
    %4417 = vmatprep.subr.mxu0 0.0
    %4418 = vmatpush1.msra.mxu0 %v212
    %4419 = vmatprep.subr.mxu0 0.0
    %4420 = vmatpush1.msra.mxu0 %v213
    %4421 = vmatprep.subr.mxu0 0.0
    %4422 = vmatpush1.msra.mxu0 %v214
    %4423 = vmatprep.subr.mxu0 0.0
    %4424 = vmatpush1.msra.mxu0 %v215
    %4425 = vmatprep.subr.mxu0 0.0
    %4426 = vmatpush1.msra.mxu0 %v216
    %4427 = vmatprep.subr.mxu0 0.0
    %4428 = vmatpush1.msra.mxu0 %v217
    %4429 = vmatprep.subr.mxu0 0.0
    %4430 = vmatpush1.msra.mxu0 %v218
    %4431 = vmatprep.subr.mxu0 0.0
    %4432 = vmatpush1.msra.mxu0 %v219
    %4433 = vmatprep.subr.mxu0 0.0
    %4434 = vmatpush1.msra.mxu0 %v220
    %4435 = vmatprep.subr.mxu0 0.0
    %4436 = vmatpush1.msra.mxu0 %v221
    %4437 = vmatprep.subr.mxu0 0.0
    %4438 = vmatpush1.msra.mxu0 %v222
    %4439 = vmatprep.subr.mxu0 0.0
    %4440 = vmatpush1.msra.mxu0 %v223
    %4441 = vmatprep.subr.mxu0 0.0
    %4442 = vmatpush1.msra.mxu0 %v224
    %4443 = vmatprep.subr.mxu0 0.0
    %4444 = vmatpush1.msra.mxu0 %v225
    %4445 = vmatprep.subr.mxu0 0.0
    %4446 = vmatpush1.msra.mxu0 %v226
    %4447 = vmatprep.subr.mxu0 0.0
    %4448 = vmatpush1.msra.mxu0 %v227
    %4449 = vmatprep.subr.mxu0 0.0
    %4450 = vmatpush1.msra.mxu0 %v228
    %4451 = vmatprep.mubr.f32.mxu0 %v3751
    %4452 = vmatmul.mubr.f32.gmra.mrb[0].mxu0 %v3749
    %v4453 = vpop.f32.mrb[0].mxu0
    %v4454 = vadd.f32 %v4384, %v4453
    %v4455 = vpop.f32.mrb[0].mxu0
    %4456 = vdwg.mxu0
    %4457 = vmatprep.subr.mxu0 0.0
    %4458 = vmatpush1.msra.mxu0 %v229
    %4459 = vmatprep.subr.mxu0 0.0
    %4460 = vmatpush1.msra.mxu0 %v230
    %4461 = vmatprep.subr.mxu0 0.0
    %4462 = vmatpush1.msra.mxu0 %v231
    %4463 = vmatprep.subr.mxu0 0.0
    %4464 = vmatpush1.msra.mxu0 %v232
    %4465 = vmatprep.subr.mxu0 0.0
    %4466 = vmatpush1.msra.mxu0 %v233
    %4467 = vmatprep.subr.mxu0 0.0
    %4468 = vmatpush1.msra.mxu0 %v234
    %4469 = vmatprep.subr.mxu0 0.0
    %4470 = vmatpush1.msra.mxu0 %v235
    %4471 = vmatprep.subr.mxu0 0.0
    %4472 = vmatpush1.msra.mxu0 %v236
    %4473 = vmatprep.subr.mxu0 0.0
    %4474 = vmatpush1.msra.mxu0 %v237
    %4475 = vmatprep.subr.mxu0 0.0
    %4476 = vmatpush1.msra.mxu0 %v238
    %4477 = vmatprep.subr.mxu0 0.0
    %4478 = vmatpush1.msra.mxu0 %v239
    %4479 = vmatprep.subr.mxu0 0.0
    %4480 = vmatpush1.msra.mxu0 %v240
    %4481 = vmatprep.subr.mxu0 0.0
    %4482 = vmatpush1.msra.mxu0 %v241
    %4483 = vmatprep.subr.mxu0 0.0
    %4484 = vmatpush1.msra.mxu0 %v242
    %4485 = vmatprep.subr.mxu0 0.0
    %4486 = vmatpush1.msra.mxu0 %v243
    %4487 = vmatprep.subr.mxu0 0.0
    %4488 = vmatpush1.msra.mxu0 %v244
    %4489 = vmatprep.subr.mxu0 0.0
    %4490 = vmatpush1.msra.mxu0 %v245
    %4491 = vmatprep.subr.mxu0 0.0
    %4492 = vmatpush1.msra.mxu0 %v246
    %4493 = vmatprep.subr.mxu0 0.0
    %4494 = vmatpush1.msra.mxu0 %v247
    %4495 = vmatprep.subr.mxu0 0.0
    %4496 = vmatpush1.msra.mxu0 %v248
    %4497 = vmatprep.subr.mxu0 0.0
    %4498 = vmatpush1.msra.mxu0 %v249
    %4499 = vmatprep.subr.mxu0 0.0
    %4500 = vmatpush1.msra.mxu0 %v250
    %4501 = vmatprep.subr.mxu0 0.0
    %4502 = vmatpush1.msra.mxu0 %v251
    %4503 = vmatprep.subr.mxu0 0.0
    %4504 = vmatpush1.msra.mxu0 %v252
    %4505 = vmatprep.subr.mxu0 0.0
    %4506 = vmatpush1.msra.mxu0 %v253
    %4507 = vmatprep.subr.mxu0 0.0
    %4508 = vmatpush1.msra.mxu0 %v254
    %4509 = vmatprep.subr.mxu0 0.0
    %4510 = vmatpush1.msra.mxu0 %v255
    %4511 = vmatprep.subr.mxu0 0.0
    %4512 = vmatpush1.msra.mxu0 %v256
    %4513 = vmatprep.subr.mxu0 0.0
    %4514 = vmatpush1.msra.mxu0 %v257
    %4515 = vmatprep.subr.mxu0 0.0
    %4516 = vmatpush1.msra.mxu0 %v258
    %4517 = vmatprep.subr.mxu0 0.0
    %4518 = vmatpush1.msra.mxu0 %v259
    %4519 = vmatprep.subr.mxu0 0.0
    %4520 = vmatpush1.msra.mxu0 %v260
    %4521 = vmatprep.mubr.f32.mxu0 %v3767
    %4522 = vmatmul.mubr.f32.gmra.mrb[0].mxu0 %v3759
    %v4523 = vpop.f32.mrb[0].mxu0
    %v4524 = vadd.f32 %v4454, %v4523
    %v4525 = vpop.f32.mrb[0].mxu0
    %4526 = vdwg.mxu0
    %4527 = vmatprep.subr.mxu0 0.0
    %4528 = vmatpush1.msra.mxu0 %v261
    %4529 = vmatprep.subr.mxu0 0.0
    %4530 = vmatpush1.msra.mxu0 %v262
    %4531 = vmatprep.subr.mxu0 0.0
    %4532 = vmatpush1.msra.mxu0 %v263
    %4533 = vmatprep.subr.mxu0 0.0
    %4534 = vmatpush1.msra.mxu0 %v264
    %4535 = vmatprep.subr.mxu0 0.0
    %4536 = vmatpush1.msra.mxu0 %v265
    %4537 = vmatprep.subr.mxu0 0.0
    %4538 = vmatpush1.msra.mxu0 %v266
    %4539 = vmatprep.subr.mxu0 0.0
    %4540 = vmatpush1.msra.mxu0 %v267
    %4541 = vmatprep.subr.mxu0 0.0
    %4542 = vmatpush1.msra.mxu0 %v268
    %4543 = vmatprep.subr.mxu0 0.0
    %4544 = vmatpush1.msra.mxu0 %v269
    %4545 = vmatprep.subr.mxu0 0.0
    %4546 = vmatpush1.msra.mxu0 %v270
    %4547 = vmatprep.subr.mxu0 0.0
    %4548 = vmatpush1.msra.mxu0 %v271
    %4549 = vmatprep.subr.mxu0 0.0
    %4550 = vmatpush1.msra.mxu0 %v272
    %4551 = vmatprep.subr.mxu0 0.0
    %4552 = vmatpush1.msra.mxu0 %v273
    %4553 = vmatprep.subr.mxu0 0.0
    %4554 = vmatpush1.msra.mxu0 %v274
    %4555 = vmatprep.subr.mxu0 0.0
    %4556 = vmatpush1.msra.mxu0 %v275
    %4557 = vmatprep.subr.mxu0 0.0
    %4558 = vmatpush1.msra.mxu0 %v276
    %4559 = vmatprep.subr.mxu0 0.0
    %4560 = vmatpush1.msra.mxu0 %v277
    %4561 = vmatprep.subr.mxu0 0.0
    %4562 = vmatpush1.msra.mxu0 %v278
    %4563 = vmatprep.subr.mxu0 0.0
    %4564 = vmatpush1.msra.mxu0 %v279
    %4565 = vmatprep.subr.mxu0 0.0
    %4566 = vmatpush1.msra.mxu0 %v280
    %4567 = vmatprep.subr.mxu0 0.0
    %4568 = vmatpush1.msra.mxu0 %v281
    %4569 = vmatprep.subr.mxu0 0.0
    %4570 = vmatpush1.msra.mxu0 %v282
    %4571 = vmatprep.subr.mxu0 0.0
    %4572 = vmatpush1.msra.mxu0 %v283
    %4573 = vmatprep.subr.mxu0 0.0
    %4574 = vmatpush1.msra.mxu0 %v284
    %4575 = vmatprep.subr.mxu0 0.0
    %4576 = vmatpush1.msra.mxu0 %v285
    %4577 = vmatprep.subr.mxu0 0.0
    %4578 = vmatpush1.msra.mxu0 %v286
    %4579 = vmatprep.subr.mxu0 0.0
    %4580 = vmatpush1.msra.mxu0 %v287
    %4581 = vmatprep.subr.mxu0 0.0
    %4582 = vmatpush1.msra.mxu0 %v288
    %4583 = vmatprep.subr.mxu0 0.0
    %4584 = vmatpush1.msra.mxu0 %v289
    %4585 = vmatprep.subr.mxu0 0.0
    %4586 = vmatpush1.msra.mxu0 %v290
    %4587 = vmatprep.subr.mxu0 0.0
    %4588 = vmatpush1.msra.mxu0 %v291
    %4589 = vmatprep.subr.mxu0 0.0
    %4590 = vmatpush1.msra.mxu0 %v292
    %4591 = vmatprep.mubr.f32.mxu0 %v3768
    %4592 = vmatmul.mubr.f32.gmra.mrb[0].mxu0 %v3766
    %v4593 = vpop.f32.mrb[0].mxu0
    %v4594 = vadd.f32 %v4524, %v4593
    %v4595 = vpop.f32.mrb[0].mxu0
    %4596 = vdwg.mxu0
    %4597 = vmatprep.subr.mxu0 0.0
    %4598 = vmatpush1.msra.mxu0 %v293
    %4599 = vmatprep.subr.mxu0 0.0
    %4600 = vmatpush1.msra.mxu0 %v294
    %4601 = vmatprep.subr.mxu0 0.0
    %4602 = vmatpush1.msra.mxu0 %v295
    %4603 = vmatprep.subr.mxu0 0.0
    %4604 = vmatpush1.msra.mxu0 %v296
    %4605 = vmatprep.subr.mxu0 0.0
    %4606 = vmatpush1.msra.mxu0 %v297
    %4607 = vmatprep.subr.mxu0 0.0
    %4608 = vmatpush1.msra.mxu0 %v298
    %4609 = vmatprep.subr.mxu0 0.0
    %4610 = vmatpush1.msra.mxu0 %v299
    %4611 = vmatprep.subr.mxu0 0.0
    %4612 = vmatpush1.msra.mxu0 %v300
    %4613 = vmatprep.subr.mxu0 0.0
    %4614 = vmatpush1.msra.mxu0 %v301
    %4615 = vmatprep.subr.mxu0 0.0
    %4616 = vmatpush1.msra.mxu0 %v302
    %4617 = vmatprep.subr.mxu0 0.0
    %4618 = vmatpush1.msra.mxu0 %v303
    %4619 = vmatprep.subr.mxu0 0.0
    %4620 = vmatpush1.msra.mxu0 %v304
    %4621 = vmatprep.subr.mxu0 0.0
    %4622 = vmatpush1.msra.mxu0 %v305
    %4623 = vmatprep.subr.mxu0 0.0
    %4624 = vmatpush1.msra.mxu0 %v306
    %4625 = vmatprep.subr.mxu0 0.0
    %4626 = vmatpush1.msra.mxu0 %v307
    %4627 = vmatprep.subr.mxu0 0.0
    %4628 = vmatpush1.msra.mxu0 %v308
    %4629 = vmatprep.subr.mxu0 0.0
    %4630 = vmatpush1.msra.mxu0 %v309
    %4631 = vmatprep.subr.mxu0 0.0
    %4632 = vmatpush1.msra.mxu0 %v310
    %4633 = vmatprep.subr.mxu0 0.0
    %4634 = vmatpush1.msra.mxu0 %v311
    %4635 = vmatprep.subr.mxu0 0.0
    %4636 = vmatpush1.msra.mxu0 %v312
    %4637 = vmatprep.subr.mxu0 0.0
    %4638 = vmatpush1.msra.mxu0 %v313
    %4639 = vmatprep.subr.mxu0 0.0
    %4640 = vmatpush1.msra.mxu0 %v314
    %4641 = vmatprep.subr.mxu0 0.0
    %4642 = vmatpush1.msra.mxu0 %v315
    %4643 = vmatprep.subr.mxu0 0.0
    %4644 = vmatpush1.msra.mxu0 %v316
    %4645 = vmatprep.subr.mxu0 0.0
    %4646 = vmatpush1.msra.mxu0 %v317
    %4647 = vmatprep.subr.mxu0 0.0
    %4648 = vmatpush1.msra.mxu0 %v318
    %4649 = vmatprep.subr.mxu0 0.0
    %4650 = vmatpush1.msra.mxu0 %v319
    %4651 = vmatprep.subr.mxu0 0.0
    %4652 = vmatpush1.msra.mxu0 %v320
    %4653 = vmatprep.subr.mxu0 0.0
    %4654 = vmatpush1.msra.mxu0 %v321
    %4655 = vmatprep.subr.mxu0 0.0
    %4656 = vmatpush1.msra.mxu0 %v322
    %4657 = vmatprep.subr.mxu0 0.0
    %4658 = vmatpush1.msra.mxu0 %v323
    %4659 = vmatprep.subr.mxu0 0.0
    %4660 = vmatpush1.msra.mxu0 %v324
    %4661 = vmatprep.mubr.f32.mxu0 %v3784
    %4662 = vmatmul.mubr.f32.gmra.mrb[0].mxu0 %v3776
    %v4663 = vpop.f32.mrb[0].mxu0
    %v4664 = vadd.f32 %v4594, %v4663
    %v4665 = vpop.f32.mrb[0].mxu0
    %4666 = vdwg.mxu0
    %4667 = vmatprep.subr.mxu0 0.0
    %4668 = vmatpush1.msra.mxu0 %v325
    %4669 = vmatprep.subr.mxu0 0.0
    %4670 = vmatpush1.msra.mxu0 %v326
    %4671 = vmatprep.subr.mxu0 0.0
    %4672 = vmatpush1.msra.mxu0 %v327
    %4673 = vmatprep.subr.mxu0 0.0
    %4674 = vmatpush1.msra.mxu0 %v328
    %4675 = vmatprep.subr.mxu0 0.0
    %4676 = vmatpush1.msra.mxu0 %v329
    %4677 = vmatprep.subr.mxu0 0.0
    %4678 = vmatpush1.msra.mxu0 %v330
    %4679 = vmatprep.subr.mxu0 0.0
    %4680 = vmatpush1.msra.mxu0 %v331
    %4681 = vmatprep.subr.mxu0 0.0
    %4682 = vmatpush1.msra.mxu0 %v332
    %4683 = vmatprep.subr.mxu0 0.0
    %4684 = vmatpush1.msra.mxu0 %v333
    %4685 = vmatprep.subr.mxu0 0.0
    %4686 = vmatpush1.msra.mxu0 %v334
    %4687 = vmatprep.subr.mxu0 0.0
    %4688 = vmatpush1.msra.mxu0 %v335
    %4689 = vmatprep.subr.mxu0 0.0
    %4690 = vmatpush1.msra.mxu0 %v336
    %4691 = vmatprep.subr.mxu0 0.0
    %4692 = vmatpush1.msra.mxu0 %v337
    %4693 = vmatprep.subr.mxu0 0.0
    %4694 = vmatpush1.msra.mxu0 %v338
    %4695 = vmatprep.subr.mxu0 0.0
    %4696 = vmatpush1.msra.mxu0 %v339
    %4697 = vmatprep.subr.mxu0 0.0
    %4698 = vmatpush1.msra.mxu0 %v340
    %4699 = vmatprep.subr.mxu0 0.0
    %4700 = vmatpush1.msra.mxu0 %v341
    %4701 = vmatprep.subr.mxu0 0.0
    %4702 = vmatpush1.msra.mxu0 %v342
    %4703 = vmatprep.subr.mxu0 0.0
    %4704 = vmatpush1.msra.mxu0 %v343
    %4705 = vmatprep.subr.mxu0 0.0
    %4706 = vmatpush1.msra.mxu0 %v344
    %4707 = vmatprep.subr.mxu0 0.0
    %4708 = vmatpush1.msra.mxu0 %v345
    %4709 = vmatprep.subr.mxu0 0.0
    %4710 = vmatpush1.msra.mxu0 %v346
    %4711 = vmatprep.subr.mxu0 0.0
    %4712 = vmatpush1.msra.mxu0 %v347
    %4713 = vmatprep.subr.mxu0 0.0
    %4714 = vmatpush1.msra.mxu0 %v348
    %4715 = vmatprep.subr.mxu0 0.0
    %4716 = vmatpush1.msra.mxu0 %v349
    %4717 = vmatprep.subr.mxu0 0.0
    %4718 = vmatpush1.msra.mxu0 %v350
    %4719 = vmatprep.subr.mxu0 0.0
    %4720 = vmatpush1.msra.mxu0 %v351
    %4721 = vmatprep.subr.mxu0 0.0
    %4722 = vmatpush1.msra.mxu0 %v352
    %4723 = vmatprep.subr.mxu0 0.0
    %4724 = vmatpush1.msra.mxu0 %v353
    %4725 = vmatprep.subr.mxu0 0.0
    %4726 = vmatpush1.msra.mxu0 %v354
    %4727 = vmatprep.subr.mxu0 0.0
    %4728 = vmatpush1.msra.mxu0 %v355
    %4729 = vmatprep.subr.mxu0 0.0
    %4730 = vmatpush1.msra.mxu0 %v356
    %4731 = vmatprep.mubr.f32.mxu0 %v3785
    %4732 = vmatmul.mubr.f32.gmra.mrb[0].mxu0 %v3783
    %v4733 = vpop.f32.mrb[0].mxu0
    %v4734 = vadd.f32 %v4664, %v4733
    %v4735 = vpop.f32.mrb[0].mxu0
    %4736 = vdwg.mxu0
    %4737 = vmatprep.subr.mxu0 0.0
    %4738 = vmatpush1.msra.mxu0 %v357
    %4739 = vmatprep.subr.mxu0 0.0
    %4740 = vmatpush1.msra.mxu0 %v358
    %4741 = vmatprep.subr.mxu0 0.0
    %4742 = vmatpush1.msra.mxu0 %v359
    %4743 = vmatprep.subr.mxu0 0.0
    %4744 = vmatpush1.msra.mxu0 %v360
    %4745 = vmatprep.subr.mxu0 0.0
    %4746 = vmatpush1.msra.mxu0 %v361
    %4747 = vmatprep.subr.mxu0 0.0
    %4748 = vmatpush1.msra.mxu0 %v362
    %4749 = vmatprep.subr.mxu0 0.0
    %4750 = vmatpush1.msra.mxu0 %v363
    %4751 = vmatprep.subr.mxu0 0.0
    %4752 = vmatpush1.msra.mxu0 %v364
    %4753 = vmatprep.subr.mxu0 0.0
    %4754 = vmatpush1.msra.mxu0 %v365
    %4755 = vmatprep.subr.mxu0 0.0
    %4756 = vmatpush1.msra.mxu0 %v366
    %4757 = vmatprep.subr.mxu0 0.0
    %4758 = vmatpush1.msra.mxu0 %v367
    %4759 = vmatprep.subr.mxu0 0.0
    %4760 = vmatpush1.msra.mxu0 %v368
    %4761 = vmatprep.subr.mxu0 0.0
    %4762 = vmatpush1.msra.mxu0 %v369
    %4763 = vmatprep.subr.mxu0 0.0
    %4764 = vmatpush1.msra.mxu0 %v370
    %4765 = vmatprep.subr.mxu0 0.0
    %4766 = vmatpush1.msra.mxu0 %v371
    %4767 = vmatprep.subr.mxu0 0.0
    %4768 = vmatpush1.msra.mxu0 %v372
    %4769 = vmatprep.subr.mxu0 0.0
    %4770 = vmatpush1.msra.mxu0 %v373
    %4771 = vmatprep.subr.mxu0 0.0
    %4772 = vmatpush1.msra.mxu0 %v374
    %4773 = vmatprep.subr.mxu0 0.0
    %4774 = vmatpush1.msra.mxu0 %v375
    %4775 = vmatprep.subr.mxu0 0.0
    %4776 = vmatpush1.msra.mxu0 %v376
    %4777 = vmatprep.subr.mxu0 0.0
    %4778 = vmatpush1.msra.mxu0 %v377
    %4779 = vmatprep.subr.mxu0 0.0
    %4780 = vmatpush1.msra.mxu0 %v378
    %4781 = vmatprep.subr.mxu0 0.0
    %4782 = vmatpush1.msra.mxu0 %v379
    %4783 = vmatprep.subr.mxu0 0.0
    %4784 = vmatpush1.msra.mxu0 %v380
    %4785 = vmatprep.subr.mxu0 0.0
    %4786 = vmatpush1.msra.mxu0 %v381
    %4787 = vmatprep.subr.mxu0 0.0
    %4788 = vmatpush1.msra.mxu0 %v382
    %4789 = vmatprep.subr.mxu0 0.0
    %4790 = vmatpush1.msra.mxu0 %v383
    %4791 = vmatprep.subr.mxu0 0.0
    %4792 = vmatpush1.msra.mxu0 %v384
    %4793 = vmatprep.subr.mxu0 0.0
    %4794 = vmatpush1.msra.mxu0 %v385
    %4795 = vmatprep.subr.mxu0 0.0
    %4796 = vmatpush1.msra.mxu0 %v386
    %4797 = vmatprep.subr.mxu0 0.0
    %4798 = vmatpush1.msra.mxu0 %v387
    %4799 = vmatprep.subr.mxu0 0.0
    %4800 = vmatpush1.msra.mxu0 %v388
    %4801 = vmatprep.mubr.f32.mxu0 %v3801
    %4802 = vmatmul.mubr.f32.gmra.mrb[0].mxu0 %v3793
    %v4803 = vpop.f32.mrb[0].mxu0
    %v4804 = vadd.f32 %v4734, %v4803
    %v4805 = vpop.f32.mrb[0].mxu0
    %4806 = vdwg.mxu0
    %4807 = vmatprep.subr.mxu0 0.0
    %4808 = vmatpush1.msra.mxu0 %v389
    %4809 = vmatprep.subr.mxu0 0.0
    %4810 = vmatpush1.msra.mxu0 %v390
    %4811 = vmatprep.subr.mxu0 0.0
    %4812 = vmatpush1.msra.mxu0 %v391
    %4813 = vmatprep.subr.mxu0 0.0
    %4814 = vmatpush1.msra.mxu0 %v392
    %4815 = vmatprep.subr.mxu0 0.0
    %4816 = vmatpush1.msra.mxu0 %v393
    %4817 = vmatprep.subr.mxu0 0.0
    %4818 = vmatpush1.msra.mxu0 %v394
    %4819 = vmatprep.subr.mxu0 0.0
    %4820 = vmatpush1.msra.mxu0 %v395
    %4821 = vmatprep.subr.mxu0 0.0
    %4822 = vmatpush1.msra.mxu0 %v396
    %4823 = vmatprep.subr.mxu0 0.0
    %4824 = vmatpush1.msra.mxu0 %v397
    %4825 = vmatprep.subr.mxu0 0.0
    %4826 = vmatpush1.msra.mxu0 %v398
    %4827 = vmatprep.subr.mxu0 0.0
    %4828 = vmatpush1.msra.mxu0 %v399
    %4829 = vmatprep.subr.mxu0 0.0
    %4830 = vmatpush1.msra.mxu0 %v400
    %4831 = vmatprep.subr.mxu0 0.0
    %4832 = vmatpush1.msra.mxu0 %v401
    %4833 = vmatprep.subr.mxu0 0.0
    %4834 = vmatpush1.msra.mxu0 %v402
    %4835 = vmatprep.subr.mxu0 0.0
    %4836 = vmatpush1.msra.mxu0 %v403
    %4837 = vmatprep.subr.mxu0 0.0
    %4838 = vmatpush1.msra.mxu0 %v404
    %4839 = vmatprep.subr.mxu0 0.0
    %4840 = vmatpush1.msra.mxu0 %v405
    %4841 = vmatprep.subr.mxu0 0.0
    %4842 = vmatpush1.msra.mxu0 %v406
    %4843 = vmatprep.subr.mxu0 0.0
    %4844 = vmatpush1.msra.mxu0 %v407
    %4845 = vmatprep.subr.mxu0 0.0
    %4846 = vmatpush1.msra.mxu0 %v408
    %4847 = vmatprep.subr.mxu0 0.0
    %4848 = vmatpush1.msra.mxu0 %v409
    %4849 = vmatprep.subr.mxu0 0.0
    %4850 = vmatpush1.msra.mxu0 %v410
    %4851 = vmatprep.subr.mxu0 0.0
    %4852 = vmatpush1.msra.mxu0 %v411
    %4853 = vmatprep.subr.mxu0 0.0
    %4854 = vmatpush1.msra.mxu0 %v412
    %4855 = vmatprep.subr.mxu0 0.0
    %4856 = vmatpush1.msra.mxu0 %v413
    %4857 = vmatprep.subr.mxu0 0.0
    %4858 = vmatpush1.msra.mxu0 %v414
    %4859 = vmatprep.subr.mxu0 0.0
    %4860 = vmatpush1.msra.mxu0 %v415
    %4861 = vmatprep.subr.mxu0 0.0
    %4862 = vmatpush1.msra.mxu0 %v416
    %4863 = vmatprep.subr.mxu0 0.0
    %4864 = vmatpush1.msra.mxu0 %v417
    %4865 = vmatprep.subr.mxu0 0.0
    %4866 = vmatpush1.msra.mxu0 %v418
    %4867 = vmatprep.subr.mxu0 0.0
    %4868 = vmatpush1.msra.mxu0 %v419
    %4869 = vmatprep.subr.mxu0 0.0
    %4870 = vmatpush1.msra.mxu0 %v420
    %4871 = vmatprep.mubr.f32.mxu0 %v3802
    %4872 = vmatmul.mubr.f32.gmra.mrb[0].mxu0 %v3800
    %v4873 = vpop.f32.mrb[0].mxu0
    %v4874 = vadd.f32 %v4804, %v4873
    %v4875 = vpop.f32.mrb[0].mxu0
    %4876 = vdwg.mxu0
    %4877 = vmatprep.subr.mxu0 0.0
    %4878 = vmatpush1.msra.mxu0 %v421
    %4879 = vmatprep.subr.mxu0 0.0
    %4880 = vmatpush1.msra.mxu0 %v422
    %4881 = vmatprep.subr.mxu0 0.0
    %4882 = vmatpush1.msra.mxu0 %v423
    %4883 = vmatprep.subr.mxu0 0.0
    %4884 = vmatpush1.msra.mxu0 %v424
    %4885 = vmatprep.subr.mxu0 0.0
    %4886 = vmatpush1.msra.mxu0 %v425
    %4887 = vmatprep.subr.mxu0 0.0
    %4888 = vmatpush1.msra.mxu0 %v426
    %4889 = vmatprep.subr.mxu0 0.0
    %4890 = vmatpush1.msra.mxu0 %v427
    %4891 = vmatprep.subr.mxu0 0.0
    %4892 = vmatpush1.msra.mxu0 %v428
    %4893 = vmatprep.subr.mxu0 0.0
    %4894 = vmatpush1.msra.mxu0 %v429
    %4895 = vmatprep.subr.mxu0 0.0
    %4896 = vmatpush1.msra.mxu0 %v430
    %4897 = vmatprep.subr.mxu0 0.0
    %4898 = vmatpush1.msra.mxu0 %v431
    %4899 = vmatprep.subr.mxu0 0.0
    %4900 = vmatpush1.msra.mxu0 %v432
    %4901 = vmatprep.subr.mxu0 0.0
    %4902 = vmatpush1.msra.mxu0 %v433
    %4903 = vmatprep.subr.mxu0 0.0
    %4904 = vmatpush1.msra.mxu0 %v434
    %4905 = vmatprep.subr.mxu0 0.0
    %4906 = vmatpush1.msra.mxu0 %v435
    %4907 = vmatprep.subr.mxu0 0.0
    %4908 = vmatpush1.msra.mxu0 %v436
    %4909 = vmatprep.subr.mxu0 0.0
    %4910 = vmatpush1.msra.mxu0 %v437
    %4911 = vmatprep.subr.mxu0 0.0
    %4912 = vmatpush1.msra.mxu0 %v438
    %4913 = vmatprep.subr.mxu0 0.0
    %4914 = vmatpush1.msra.mxu0 %v439
    %4915 = vmatprep.subr.mxu0 0.0
    %4916 = vmatpush1.msra.mxu0 %v440
    %4917 = vmatprep.subr.mxu0 0.0
    %4918 = vmatpush1.msra.mxu0 %v441
    %4919 = vmatprep.subr.mxu0 0.0
    %4920 = vmatpush1.msra.mxu0 %v442
    %4921 = vmatprep.subr.mxu0 0.0
    %4922 = vmatpush1.msra.mxu0 %v443
    %4923 = vmatprep.subr.mxu0 0.0
    %4924 = vmatpush1.msra.mxu0 %v444
    %4925 = vmatprep.subr.mxu0 0.0
    %4926 = vmatpush1.msra.mxu0 %v445
    %4927 = vmatprep.subr.mxu0 0.0
    %4928 = vmatpush1.msra.mxu0 %v446
    %4929 = vmatprep.subr.mxu0 0.0
    %4930 = vmatpush1.msra.mxu0 %v447
    %4931 = vmatprep.subr.mxu0 0.0
    %4932 = vmatpush1.msra.mxu0 %v448
    %4933 = vmatprep.subr.mxu0 0.0
    %4934 = vmatpush1.msra.mxu0 %v449
    %4935 = vmatprep.subr.mxu0 0.0
    %4936 = vmatpush1.msra.mxu0 %v450
    %4937 = vmatprep.subr.mxu0 0.0
    %4938 = vmatpush1.msra.mxu0 %v451
    %4939 = vmatprep.subr.mxu0 0.0
    %4940 = vmatpush1.msra.mxu0 %v452
    %4941 = vmatprep.mubr.f32.mxu0 %v3818
    %4942 = vmatmul.mubr.f32.gmra.mrb[0].mxu0 %v3810
    %v4943 = vpop.f32.mrb[0].mxu0
    %v4944 = vadd.f32 %v4874, %v4943
    %v4945 = vpop.f32.mrb[0].mxu0
    %4946 = vdwg.mxu0
    %4947 = vmatprep.subr.mxu0 0.0
    %4948 = vmatpush1.msra.mxu0 %v453
    %4949 = vmatprep.subr.mxu0 0.0
    %4950 = vmatpush1.msra.mxu0 %v454
    %4951 = vmatprep.subr.mxu0 0.0
    %4952 = vmatpush1.msra.mxu0 %v455
    %4953 = vmatprep.subr.mxu0 0.0
    %4954 = vmatpush1.msra.mxu0 %v456
    %4955 = vmatprep.subr.mxu0 0.0
    %4956 = vmatpush1.msra.mxu0 %v457
    %4957 = vmatprep.subr.mxu0 0.0
    %4958 = vmatpush1.msra.mxu0 %v458
    %4959 = vmatprep.subr.mxu0 0.0
    %4960 = vmatpush1.msra.mxu0 %v459
    %4961 = vmatprep.subr.mxu0 0.0
    %4962 = vmatpush1.msra.mxu0 %v460
    %4963 = vmatprep.subr.mxu0 0.0
    %4964 = vmatpush1.msra.mxu0 %v461
    %4965 = vmatprep.subr.mxu0 0.0
    %4966 = vmatpush1.msra.mxu0 %v462
    %4967 = vmatprep.subr.mxu0 0.0
    %4968 = vmatpush1.msra.mxu0 %v463
    %4969 = vmatprep.subr.mxu0 0.0
    %4970 = vmatpush1.msra.mxu0 %v464
    %4971 = vmatprep.subr.mxu0 0.0
    %4972 = vmatpush1.msra.mxu0 %v465
    %4973 = vmatprep.subr.mxu0 0.0
    %4974 = vmatpush1.msra.mxu0 %v466
    %4975 = vmatprep.subr.mxu0 0.0
    %4976 = vmatpush1.msra.mxu0 %v467
    %4977 = vmatprep.subr.mxu0 0.0
    %4978 = vmatpush1.msra.mxu0 %v468
    %4979 = vmatprep.subr.mxu0 0.0
    %4980 = vmatpush1.msra.mxu0 %v469
    %4981 = vmatprep.subr.mxu0 0.0
    %4982 = vmatpush1.msra.mxu0 %v470
    %4983 = vmatprep.subr.mxu0 0.0
    %4984 = vmatpush1.msra.mxu0 %v471
    %4985 = vmatprep.subr.mxu0 0.0
    %4986 = vmatpush1.msra.mxu0 %v472
    %4987 = vmatprep.subr.mxu0 0.0
    %4988 = vmatpush1.msra.mxu0 %v473
    %4989 = vmatprep.subr.mxu0 0.0
    %4990 = vmatpush1.msra.mxu0 %v474
    %4991 = vmatprep.subr.mxu0 0.0
    %4992 = vmatpush1.msra.mxu0 %v475
    %4993 = vmatprep.subr.mxu0 0.0
    %4994 = vmatpush1.msra.mxu0 %v476
    %4995 = vmatprep.subr.mxu0 0.0
    %4996 = vmatpush1.msra.mxu0 %v477
    %4997 = vmatprep.subr.mxu0 0.0
    %4998 = vmatpush1.msra.mxu0 %v478
    %4999 = vmatprep.subr.mxu0 0.0
    %5000 = vmatpush1.msra.mxu0 %v479
    %5001 = vmatprep.subr.mxu0 0.0
    %5002 = vmatpush1.msra.mxu0 %v480
    %5003 = vmatprep.subr.mxu0 0.0
    %5004 = vmatpush1.msra.mxu0 %v481
    %5005 = vmatprep.subr.mxu0 0.0
    %5006 = vmatpush1.msra.mxu0 %v482
    %5007 = vmatprep.subr.mxu0 0.0
    %5008 = vmatpush1.msra.mxu0 %v483
    %5009 = vmatprep.subr.mxu0 0.0
    %5010 = vmatpush1.msra.mxu0 %v484
    %5011 = vmatprep.mubr.f32.mxu0 %v3819
    %5012 = vmatmul.mubr.f32.gmra.mrb[0].mxu0 %v3817
    %v5013 = vpop.f32.mrb[0].mxu0
    %v5014 = vadd.f32 %v4944, %v5013
    %v5015 = vpop.f32.mrb[0].mxu0
    %5016 = vdwg.mxu0
    %5017 = vmatprep.subr.mxu0 0.0
    %5018 = vmatpush1.msra.mxu0 %v485
    %5019 = vmatprep.subr.mxu0 0.0
    %5020 = vmatpush1.msra.mxu0 %v486
    %5021 = vmatprep.subr.mxu0 0.0
    %5022 = vmatpush1.msra.mxu0 %v487
    %5023 = vmatprep.subr.mxu0 0.0
    %5024 = vmatpush1.msra.mxu0 %v488
    %5025 = vmatprep.subr.mxu0 0.0
    %5026 = vmatpush1.msra.mxu0 %v489
    %5027 = vmatprep.subr.mxu0 0.0
    %5028 = vmatpush1.msra.mxu0 %v490
    %5029 = vmatprep.subr.mxu0 0.0
    %5030 = vmatpush1.msra.mxu0 %v491
    %5031 = vmatprep.subr.mxu0 0.0
    %5032 = vmatpush1.msra.mxu0 %v492
    %5033 = vmatprep.subr.mxu0 0.0
    %5034 = vmatpush1.msra.mxu0 %v493
    %5035 = vmatprep.subr.mxu0 0.0
    %5036 = vmatpush1.msra.mxu0 %v494
    %5037 = vmatprep.subr.mxu0 0.0
    %5038 = vmatpush1.msra.mxu0 %v495
    %5039 = vmatprep.subr.mxu0 0.0
    %5040 = vmatpush1.msra.mxu0 %v496
    %5041 = vmatprep.subr.mxu0 0.0
    %5042 = vmatpush1.msra.mxu0 %v497
    %5043 = vmatprep.subr.mxu0 0.0
    %5044 = vmatpush1.msra.mxu0 %v498
    %5045 = vmatprep.subr.mxu0 0.0
    %5046 = vmatpush1.msra.mxu0 %v499
    %5047 = vmatprep.subr.mxu0 0.0
    %5048 = vmatpush1.msra.mxu0 %v500
    %5049 = vmatprep.subr.mxu0 0.0
    %5050 = vmatpush1.msra.mxu0 %v501
    %5051 = vmatprep.subr.mxu0 0.0
    %5052 = vmatpush1.msra.mxu0 %v502
    %5053 = vmatprep.subr.mxu0 0.0
    %5054 = vmatpush1.msra.mxu0 %v503
    %5055 = vmatprep.subr.mxu0 0.0
    %5056 = vmatpush1.msra.mxu0 %v504
    %5057 = vmatprep.subr.mxu0 0.0
    %5058 = vmatpush1.msra.mxu0 %v505
    %5059 = vmatprep.subr.mxu0 0.0
    %5060 = vmatpush1.msra.mxu0 %v506
    %5061 = vmatprep.subr.mxu0 0.0
    %5062 = vmatpush1.msra.mxu0 %v507
    %5063 = vmatprep.subr.mxu0 0.0
    %5064 = vmatpush1.msra.mxu0 %v508
    %5065 = vmatprep.subr.mxu0 0.0
    %5066 = vmatpush1.msra.mxu0 %v509
    %5067 = vmatprep.subr.mxu0 0.0
    %5068 = vmatpush1.msra.mxu0 %v510
    %5069 = vmatprep.subr.mxu0 0.0
    %5070 = vmatpush1.msra.mxu0 %v511
    %5071 = vmatprep.subr.mxu0 0.0
    %5072 = vmatpush1.msra.mxu0 %v512
    %5073 = vmatprep.subr.mxu0 0.0
    %5074 = vmatpush1.msra.mxu0 %v513
    %5075 = vmatprep.subr.mxu0 0.0
    %5076 = vmatpush1.msra.mxu0 %v514
    %5077 = vmatprep.subr.mxu0 0.0
    %5078 = vmatpush1.msra.mxu0 %v515
    %5079 = vmatprep.subr.mxu0 0.0
    %5080 = vmatpush1.msra.mxu0 %v516
    %5081 = vmatprep.mubr.f32.mxu0 %v3835
    %5082 = vmatmul.mubr.f32.gmra.mrb[0].mxu0 %v3827
    %v5083 = vpop.f32.mrb[0].mxu0
    %v5084 = vadd.f32 %v5014, %v5083
    %v5085 = vpop.f32.mrb[0].mxu0
    %5086 = vdwg.mxu0
    %5087 = vmatprep.subr.mxu0 0.0
    %5088 = vmatpush1.msra.mxu0 %v517
    %5089 = vmatprep.subr.mxu0 0.0
    %5090 = vmatpush1.msra.mxu0 %v518
    %5091 = vmatprep.subr.mxu0 0.0
    %5092 = vmatpush1.msra.mxu0 %v519
    %5093 = vmatprep.subr.mxu0 0.0
    %5094 = vmatpush1.msra.mxu0 %v520
    %5095 = vmatprep.subr.mxu0 0.0
    %5096 = vmatpush1.msra.mxu0 %v521
    %5097 = vmatprep.subr.mxu0 0.0
    %5098 = vmatpush1.msra.mxu0 %v522
    %5099 = vmatprep.subr.mxu0 0.0
    %5100 = vmatpush1.msra.mxu0 %v523
    %5101 = vmatprep.subr.mxu0 0.0
    %5102 = vmatpush1.msra.mxu0 %v524
    %5103 = vmatprep.subr.mxu0 0.0
    %5104 = vmatpush1.msra.mxu0 %v525
    %5105 = vmatprep.subr.mxu0 0.0
    %5106 = vmatpush1.msra.mxu0 %v526
    %5107 = vmatprep.subr.mxu0 0.0
    %5108 = vmatpush1.msra.mxu0 %v527
    %5109 = vmatprep.subr.mxu0 0.0
    %5110 = vmatpush1.msra.mxu0 %v528
    %5111 = vmatprep.subr.mxu0 0.0
    %5112 = vmatpush1.msra.mxu0 %v529
    %5113 = vmatprep.subr.mxu0 0.0
    %5114 = vmatpush1.msra.mxu0 %v530
    %5115 = vmatprep.subr.mxu0 0.0
    %5116 = vmatpush1.msra.mxu0 %v531
    %5117 = vmatprep.subr.mxu0 0.0
    %5118 = vmatpush1.msra.mxu0 %v532
    %5119 = vmatprep.subr.mxu0 0.0
    %5120 = vmatpush1.msra.mxu0 %v533
    %5121 = vmatprep.subr.mxu0 0.0
    %5122 = vmatpush1.msra.mxu0 %v534
    %5123 = vmatprep.subr.mxu0 0.0
    %5124 = vmatpush1.msra.mxu0 %v535
    %5125 = vmatprep.subr.mxu0 0.0
    %5126 = vmatpush1.msra.mxu0 %v536
    %5127 = vmatprep.subr.mxu0 0.0
    %5128 = vmatpush1.msra.mxu0 %v537
    %5129 = vmatprep.subr.mxu0 0.0
    %5130 = vmatpush1.msra.mxu0 %v538
    %5131 = vmatprep.subr.mxu0 0.0
    %5132 = vmatpush1.msra.mxu0 %v539
    %5133 = vmatprep.subr.mxu0 0.0
    %5134 = vmatpush1.msra.mxu0 %v540
    %5135 = vmatprep.subr.mxu0 0.0
    %5136 = vmatpush1.msra.mxu0 %v541
    %5137 = vmatprep.subr.mxu0 0.0
    %5138 = vmatpush1.msra.mxu0 %v542
    %5139 = vmatprep.subr.mxu0 0.0
    %5140 = vmatpush1.msra.mxu0 %v543
    %5141 = vmatprep.subr.mxu0 0.0
    %5142 = vmatpush1.msra.mxu0 %v544
    %5143 = vmatprep.subr.mxu0 0.0
    %5144 = vmatpush1.msra.mxu0 %v545
    %5145 = vmatprep.subr.mxu0 0.0
    %5146 = vmatpush1.msra.mxu0 %v546
    %5147 = vmatprep.subr.mxu0 0.0
    %5148 = vmatpush1.msra.mxu0 %v547
    %5149 = vmatprep.subr.mxu0 0.0
    %5150 = vmatpush1.msra.mxu0 %v548
    %5151 = vmatprep.mubr.f32.mxu0 %v3836
    %5152 = vmatmul.mubr.f32.gmra.mrb[0].mxu0 %v3834
    %v5153 = vpop.f32.mrb[0].mxu0
    %v5154 = vadd.f32 %v5084, %v5153
    %v5155 = vpop.f32.mrb[0].mxu0
    %5156 = vdwg.mxu0
    %5157 = vmatprep.subr.mxu0 0.0
    %5158 = vmatpush1.msra.mxu0 %v549
    %5159 = vmatprep.subr.mxu0 0.0
    %5160 = vmatpush1.msra.mxu0 %v550
    %5161 = vmatprep.subr.mxu0 0.0
    %5162 = vmatpush1.msra.mxu0 %v551
    %5163 = vmatprep.subr.mxu0 0.0
    %5164 = vmatpush1.msra.mxu0 %v552
    %5165 = vmatprep.subr.mxu0 0.0
    %5166 = vmatpush1.msra.mxu0 %v553
    %5167 = vmatprep.subr.mxu0 0.0
    %5168 = vmatpush1.msra.mxu0 %v554
    %5169 = vmatprep.subr.mxu0 0.0
    %5170 = vmatpush1.msra.mxu0 %v555
    %5171 = vmatprep.subr.mxu0 0.0
    %5172 = vmatpush1.msra.mxu0 %v556
    %5173 = vmatprep.subr.mxu0 0.0
    %5174 = vmatpush1.msra.mxu0 %v557
    %5175 = vmatprep.subr.mxu0 0.0
    %5176 = vmatpush1.msra.mxu0 %v558
    %5177 = vmatprep.subr.mxu0 0.0
    %5178 = vmatpush1.msra.mxu0 %v559
    %5179 = vmatprep.subr.mxu0 0.0
    %5180 = vmatpush1.msra.mxu0 %v560
    %5181 = vmatprep.subr.mxu0 0.0
    %5182 = vmatpush1.msra.mxu0 %v561
    %5183 = vmatprep.subr.mxu0 0.0
    %5184 = vmatpush1.msra.mxu0 %v562
    %5185 = vmatprep.subr.mxu0 0.0
    %5186 = vmatpush1.msra.mxu0 %v563
    %5187 = vmatprep.subr.mxu0 0.0
    %5188 = vmatpush1.msra.mxu0 %v564
    %5189 = vmatprep.subr.mxu0 0.0
    %5190 = vmatpush1.msra.mxu0 %v565
    %5191 = vmatprep.subr.mxu0 0.0
    %5192 = vmatpush1.msra.mxu0 %v566
    %5193 = vmatprep.subr.mxu0 0.0
    %5194 = vmatpush1.msra.mxu0 %v567
    %5195 = vmatprep.subr.mxu0 0.0
    %5196 = vmatpush1.msra.mxu0 %v568
    %5197 = vmatprep.subr.mxu0 0.0
    %5198 = vmatpush1.msra.mxu0 %v569
    %5199 = vmatprep.subr.mxu0 0.0
    %5200 = vmatpush1.msra.mxu0 %v570
    %5201 = vmatprep.subr.mxu0 0.0
    %5202 = vmatpush1.msra.mxu0 %v571
    %5203 = vmatprep.subr.mxu0 0.0
    %5204 = vmatpush1.msra.mxu0 %v572
    %5205 = vmatprep.subr.mxu0 0.0
    %5206 = vmatpush1.msra.mxu0 %v573
    %5207 = vmatprep.subr.mxu0 0.0
    %5208 = vmatpush1.msra.mxu0 %v574
    %5209 = vmatprep.subr.mxu0 0.0
    %5210 = vmatpush1.msra.mxu0 %v575
    %5211 = vmatprep.subr.mxu0 0.0
    %5212 = vmatpush1.msra.mxu0 %v576
    %5213 = vmatprep.subr.mxu0 0.0
    %5214 = vmatpush1.msra.mxu0 %v577
    %5215 = vmatprep.subr.mxu0 0.0
    %5216 = vmatpush1.msra.mxu0 %v578
    %5217 = vmatprep.subr.mxu0 0.0
    %5218 = vmatpush1.msra.mxu0 %v579
    %5219 = vmatprep.subr.mxu0 0.0
    %5220 = vmatpush1.msra.mxu0 %v580
    %5221 = vmatprep.mubr.f32.mxu0 %v3852
    %5222 = vmatmul.mubr.f32.gmra.mrb[0].mxu0 %v3844
    %v5223 = vpop.f32.mrb[0].mxu0
    %v5224 = vadd.f32 %v5154, %v5223
    %v5225 = vpop.f32.mrb[0].mxu0
    %5226 = vdwg.mxu0
    %5227 = vmatprep.subr.mxu0 0.0
    %5228 = vmatpush1.msra.mxu0 %v581
    %5229 = vmatprep.subr.mxu0 0.0
    %5230 = vmatpush1.msra.mxu0 %v582
    %5231 = vmatprep.subr.mxu0 0.0
    %5232 = vmatpush1.msra.mxu0 %v583
    %5233 = vmatprep.subr.mxu0 0.0
    %5234 = vmatpush1.msra.mxu0 %v584
    %5235 = vmatprep.subr.mxu0 0.0
    %5236 = vmatpush1.msra.mxu0 %v585
    %5237 = vmatprep.subr.mxu0 0.0
    %5238 = vmatpush1.msra.mxu0 %v586
    %5239 = vmatprep.subr.mxu0 0.0
    %5240 = vmatpush1.msra.mxu0 %v587
    %5241 = vmatprep.subr.mxu0 0.0
    %5242 = vmatpush1.msra.mxu0 %v588
    %5243 = vmatprep.subr.mxu0 0.0
    %5244 = vmatpush1.msra.mxu0 %v589
    %5245 = vmatprep.subr.mxu0 0.0
    %5246 = vmatpush1.msra.mxu0 %v590
    %5247 = vmatprep.subr.mxu0 0.0
    %5248 = vmatpush1.msra.mxu0 %v591
    %5249 = vmatprep.subr.mxu0 0.0
    %5250 = vmatpush1.msra.mxu0 %v592
    %5251 = vmatprep.subr.mxu0 0.0
    %5252 = vmatpush1.msra.mxu0 %v593
    %5253 = vmatprep.subr.mxu0 0.0
    %5254 = vmatpush1.msra.mxu0 %v594
    %5255 = vmatprep.subr.mxu0 0.0
    %5256 = vmatpush1.msra.mxu0 %v595
    %5257 = vmatprep.subr.mxu0 0.0
    %5258 = vmatpush1.msra.mxu0 %v596
    %5259 = vmatprep.subr.mxu0 0.0
    %5260 = vmatpush1.msra.mxu0 %v597
    %5261 = vmatprep.subr.mxu0 0.0
    %5262 = vmatpush1.msra.mxu0 %v598
    %5263 = vmatprep.subr.mxu0 0.0
    %5264 = vmatpush1.msra.mxu0 %v599
    %5265 = vmatprep.subr.mxu0 0.0
    %5266 = vmatpush1.msra.mxu0 %v600
    %5267 = vmatprep.subr.mxu0 0.0
    %5268 = vmatpush1.msra.mxu0 %v601
    %5269 = vmatprep.subr.mxu0 0.0
    %5270 = vmatpush1.msra.mxu0 %v602
    %5271 = vmatprep.subr.mxu0 0.0
    %5272 = vmatpush1.msra.mxu0 %v603
    %5273 = vmatprep.subr.mxu0 0.0
    %5274 = vmatpush1.msra.mxu0 %v604
    %5275 = vmatprep.subr.mxu0 0.0
    %5276 = vmatpush1.msra.mxu0 %v605
    %5277 = vmatprep.subr.mxu0 0.0
    %5278 = vmatpush1.msra.mxu0 %v606
    %5279 = vmatprep.subr.mxu0 0.0
    %5280 = vmatpush1.msra.mxu0 %v607
    %5281 = vmatprep.subr.mxu0 0.0
    %5282 = vmatpush1.msra.mxu0 %v608
    %5283 = vmatprep.subr.mxu0 0.0
    %5284 = vmatpush1.msra.mxu0 %v609
    %5285 = vmatprep.subr.mxu0 0.0
    %5286 = vmatpush1.msra.mxu0 %v610
    %5287 = vmatprep.subr.mxu0 0.0
    %5288 = vmatpush1.msra.mxu0 %v611
    %5289 = vmatprep.subr.mxu0 0.0
    %5290 = vmatpush1.msra.mxu0 %v612
    %5291 = vmatprep.mubr.f32.mxu0 %v3853
    %5292 = vmatmul.mubr.f32.gmra.mrb[0].mxu0 %v3851
    %v5293 = vpop.f32.mrb[0].mxu0
    %v5294 = vadd.f32 %v5224, %v5293
    %v5295 = vpop.f32.mrb[0].mxu0
    %5296 = vdwg.mxu0
    %5297 = vmatprep.subr.mxu0 0.0
    %5298 = vmatpush1.msra.mxu0 %v613
    %5299 = vmatprep.subr.mxu0 0.0
    %5300 = vmatpush1.msra.mxu0 %v614
    %5301 = vmatprep.subr.mxu0 0.0
    %5302 = vmatpush1.msra.mxu0 %v615
    %5303 = vmatprep.subr.mxu0 0.0
    %5304 = vmatpush1.msra.mxu0 %v616
    %5305 = vmatprep.subr.mxu0 0.0
    %5306 = vmatpush1.msra.mxu0 %v617
    %5307 = vmatprep.subr.mxu0 0.0
    %5308 = vmatpush1.msra.mxu0 %v618
    %5309 = vmatprep.subr.mxu0 0.0
    %5310 = vmatpush1.msra.mxu0 %v619
    %5311 = vmatprep.subr.mxu0 0.0
    %5312 = vmatpush1.msra.mxu0 %v620
    %5313 = vmatprep.subr.mxu0 0.0
    %5314 = vmatpush1.msra.mxu0 %v621
    %5315 = vmatprep.subr.mxu0 0.0
    %5316 = vmatpush1.msra.mxu0 %v622
    %5317 = vmatprep.subr.mxu0 0.0
    %5318 = vmatpush1.msra.mxu0 %v623
    %5319 = vmatprep.subr.mxu0 0.0
    %5320 = vmatpush1.msra.mxu0 %v624
    %5321 = vmatprep.subr.mxu0 0.0
    %5322 = vmatpush1.msra.mxu0 %v625
    %5323 = vmatprep.subr.mxu0 0.0
    %5324 = vmatpush1.msra.mxu0 %v626
    %5325 = vmatprep.subr.mxu0 0.0
    %5326 = vmatpush1.msra.mxu0 %v627
    %5327 = vmatprep.subr.mxu0 0.0
    %5328 = vmatpush1.msra.mxu0 %v628
    %5329 = vmatprep.subr.mxu0 0.0
    %5330 = vmatpush1.msra.mxu0 %v629
    %5331 = vmatprep.subr.mxu0 0.0
    %5332 = vmatpush1.msra.mxu0 %v630
    %5333 = vmatprep.subr.mxu0 0.0
    %5334 = vmatpush1.msra.mxu0 %v631
    %5335 = vmatprep.subr.mxu0 0.0
    %5336 = vmatpush1.msra.mxu0 %v632
    %5337 = vmatprep.subr.mxu0 0.0
    %5338 = vmatpush1.msra.mxu0 %v633
    %5339 = vmatprep.subr.mxu0 0.0
    %5340 = vmatpush1.msra.mxu0 %v634
    %5341 = vmatprep.subr.mxu0 0.0
    %5342 = vmatpush1.msra.mxu0 %v635
    %5343 = vmatprep.subr.mxu0 0.0
    %5344 = vmatpush1.msra.mxu0 %v636
    %5345 = vmatprep.subr.mxu0 0.0
    %5346 = vmatpush1.msra.mxu0 %v637
    %5347 = vmatprep.subr.mxu0 0.0
    %5348 = vmatpush1.msra.mxu0 %v638
    %5349 = vmatprep.subr.mxu0 0.0
    %5350 = vmatpush1.msra.mxu0 %v639
    %5351 = vmatprep.subr.mxu0 0.0
    %5352 = vmatpush1.msra.mxu0 %v640
    %5353 = vmatprep.subr.mxu0 0.0
    %5354 = vmatpush1.msra.mxu0 %v641
    %5355 = vmatprep.subr.mxu0 0.0
    %5356 = vmatpush1.msra.mxu0 %v642
    %5357 = vmatprep.subr.mxu0 0.0
    %5358 = vmatpush1.msra.mxu0 %v643
    %5359 = vmatprep.subr.mxu0 0.0
    %5360 = vmatpush1.msra.mxu0 %v644
    %5361 = vmatprep.mubr.f32.mxu0 %v3869
    %5362 = vmatmul.mubr.f32.gmra.mrb[0].mxu0 %v3861
    %v5363 = vpop.f32.mrb[0].mxu0
    %v5364 = vadd.f32 %v5294, %v5363
    %v5365 = vpop.f32.mrb[0].mxu0
    %5366 = vdwg.mxu0
    %5367 = vmatprep.subr.mxu0 0.0
    %5368 = vmatpush1.msra.mxu0 %v645
    %5369 = vmatprep.subr.mxu0 0.0
    %5370 = vmatpush1.msra.mxu0 %v646
    %5371 = vmatprep.subr.mxu0 0.0
    %5372 = vmatpush1.msra.mxu0 %v647
    %5373 = vmatprep.subr.mxu0 0.0
    %5374 = vmatpush1.msra.mxu0 %v648
    %5375 = vmatprep.subr.mxu0 0.0
    %5376 = vmatpush1.msra.mxu0 %v649
    %5377 = vmatprep.subr.mxu0 0.0
    %5378 = vmatpush1.msra.mxu0 %v650
    %5379 = vmatprep.subr.mxu0 0.0
    %5380 = vmatpush1.msra.mxu0 %v651
    %5381 = vmatprep.subr.mxu0 0.0
    %5382 = vmatpush1.msra.mxu0 %v652
    %5383 = vmatprep.subr.mxu0 0.0
    %5384 = vmatpush1.msra.mxu0 %v653
    %5385 = vmatprep.subr.mxu0 0.0
    %5386 = vmatpush1.msra.mxu0 %v654
    %5387 = vmatprep.subr.mxu0 0.0
    %5388 = vmatpush1.msra.mxu0 %v655
    %5389 = vmatprep.subr.mxu0 0.0
    %5390 = vmatpush1.msra.mxu0 %v656
    %5391 = vmatprep.subr.mxu0 0.0
    %5392 = vmatpush1.msra.mxu0 %v657
    %5393 = vmatprep.subr.mxu0 0.0
    %5394 = vmatpush1.msra.mxu0 %v658
    %5395 = vmatprep.subr.mxu0 0.0
    %5396 = vmatpush1.msra.mxu0 %v659
    %5397 = vmatprep.subr.mxu0 0.0
    %5398 = vmatpush1.msra.mxu0 %v660
    %5399 = vmatprep.subr.mxu0 0.0
    %5400 = vmatpush1.msra.mxu0 %v661
    %5401 = vmatprep.subr.mxu0 0.0
    %5402 = vmatpush1.msra.mxu0 %v662
    %5403 = vmatprep.subr.mxu0 0.0
    %5404 = vmatpush1.msra.mxu0 %v663
    %5405 = vmatprep.subr.mxu0 0.0
    %5406 = vmatpush1.msra.mxu0 %v664
    %5407 = vmatprep.subr.mxu0 0.0
    %5408 = vmatpush1.msra.mxu0 %v665
    %5409 = vmatprep.subr.mxu0 0.0
    %5410 = vmatpush1.msra.mxu0 %v666
    %5411 = vmatprep.subr.mxu0 0.0
    %5412 = vmatpush1.msra.mxu0 %v667
    %5413 = vmatprep.subr.mxu0 0.0
    %5414 = vmatpush1.msra.mxu0 %v668
    %5415 = vmatprep.subr.mxu0 0.0
    %5416 = vmatpush1.msra.mxu0 %v669
    %5417 = vmatprep.subr.mxu0 0.0
    %5418 = vmatpush1.msra.mxu0 %v670
    %5419 = vmatprep.subr.mxu0 0.0
    %5420 = vmatpush1.msra.mxu0 %v671
    %5421 = vmatprep.subr.mxu0 0.0
    %5422 = vmatpush1.msra.mxu0 %v672
    %5423 = vmatprep.subr.mxu0 0.0
    %5424 = vmatpush1.msra.mxu0 %v673
    %5425 = vmatprep.subr.mxu0 0.0
    %5426 = vmatpush1.msra.mxu0 %v674
    %5427 = vmatprep.subr.mxu0 0.0
    %5428 = vmatpush1.msra.mxu0 %v675
    %5429 = vmatprep.subr.mxu0 0.0
    %5430 = vmatpush1.msra.mxu0 %v676
    %5431 = vmatprep.mubr.f32.mxu0 %v3870
    %5432 = vmatmul.mubr.f32.gmra.mrb[0].mxu0 %v3868
    %v5433 = vpop.f32.mrb[0].mxu0
    %v5434 = vadd.f32 %v5364, %v5433
    %v5435 = vpop.f32.mrb[0].mxu0
    %5436 = vdwg.mxu0
    %5437 = vmatprep.subr.mxu0 0.0
    %5438 = vmatpush1.msra.mxu0 %v677
    %5439 = vmatprep.subr.mxu0 0.0
    %5440 = vmatpush1.msra.mxu0 %v678
    %5441 = vmatprep.subr.mxu0 0.0
    %5442 = vmatpush1.msra.mxu0 %v679
    %5443 = vmatprep.subr.mxu0 0.0
    %5444 = vmatpush1.msra.mxu0 %v680
    %5445 = vmatprep.subr.mxu0 0.0
    %5446 = vmatpush1.msra.mxu0 %v681
    %5447 = vmatprep.subr.mxu0 0.0
    %5448 = vmatpush1.msra.mxu0 %v682
    %5449 = vmatprep.subr.mxu0 0.0
    %5450 = vmatpush1.msra.mxu0 %v683
    %5451 = vmatprep.subr.mxu0 0.0
    %5452 = vmatpush1.msra.mxu0 %v684
    %5453 = vmatprep.subr.mxu0 0.0
    %5454 = vmatpush1.msra.mxu0 %v685
    %5455 = vmatprep.subr.mxu0 0.0
    %5456 = vmatpush1.msra.mxu0 %v686
    %5457 = vmatprep.subr.mxu0 0.0
    %5458 = vmatpush1.msra.mxu0 %v687
    %5459 = vmatprep.subr.mxu0 0.0
    %5460 = vmatpush1.msra.mxu0 %v688
    %5461 = vmatprep.subr.mxu0 0.0
    %5462 = vmatpush1.msra.mxu0 %v689
    %5463 = vmatprep.subr.mxu0 0.0
    %5464 = vmatpush1.msra.mxu0 %v690
    %5465 = vmatprep.subr.mxu0 0.0
    %5466 = vmatpush1.msra.mxu0 %v691
    %5467 = vmatprep.subr.mxu0 0.0
    %5468 = vmatpush1.msra.mxu0 %v692
    %5469 = vmatprep.subr.mxu0 0.0
    %5470 = vmatpush1.msra.mxu0 %v693
    %5471 = vmatprep.subr.mxu0 0.0
    %5472 = vmatpush1.msra.mxu0 %v694
    %5473 = vmatprep.subr.mxu0 0.0
    %5474 = vmatpush1.msra.mxu0 %v695
    %5475 = vmatprep.subr.mxu0 0.0
    %5476 = vmatpush1.msra.mxu0 %v696
    %5477 = vmatprep.subr.mxu0 0.0
    %5478 = vmatpush1.msra.mxu0 %v697
    %5479 = vmatprep.subr.mxu0 0.0
    %5480 = vmatpush1.msra.mxu0 %v698
    %5481 = vmatprep.subr.mxu0 0.0
    %5482 = vmatpush1.msra.mxu0 %v699
    %5483 = vmatprep.subr.mxu0 0.0
    %5484 = vmatpush1.msra.mxu0 %v700
    %5485 = vmatprep.subr.mxu0 0.0
    %5486 = vmatpush1.msra.mxu0 %v701
    %5487 = vmatprep.subr.mxu0 0.0
    %5488 = vmatpush1.msra.mxu0 %v702
    %5489 = vmatprep.subr.mxu0 0.0
    %5490 = vmatpush1.msra.mxu0 %v703
    %5491 = vmatprep.subr.mxu0 0.0
    %5492 = vmatpush1.msra.mxu0 %v704
    %5493 = vmatprep.subr.mxu0 0.0
    %5494 = vmatpush1.msra.mxu0 %v705
    %5495 = vmatprep.subr.mxu0 0.0
    %5496 = vmatpush1.msra.mxu0 %v706
    %5497 = vmatprep.subr.mxu0 0.0
    %5498 = vmatpush1.msra.mxu0 %v707
    %5499 = vmatprep.subr.mxu0 0.0
    %5500 = vmatpush1.msra.mxu0 %v708
    %5501 = vmatprep.mubr.f32.mxu0 %v3886
    %5502 = vmatmul.mubr.f32.gmra.mrb[0].mxu0 %v3878
    %v5503 = vpop.f32.mrb[0].mxu0
    %v5504 = vadd.f32 %v5434, %v5503
    %v5505 = vpop.f32.mrb[0].mxu0
    %5506 = vdwg.mxu0
    %5507 = vmatprep.subr.mxu0 0.0
    %5508 = vmatpush1.msra.mxu0 %v709
    %5509 = vmatprep.subr.mxu0 0.0
    %5510 = vmatpush1.msra.mxu0 %v710
    %5511 = vmatprep.subr.mxu0 0.0
    %5512 = vmatpush1.msra.mxu0 %v711
    %5513 = vmatprep.subr.mxu0 0.0
    %5514 = vmatpush1.msra.mxu0 %v712
    %5515 = vmatprep.subr.mxu0 0.0
    %5516 = vmatpush1.msra.mxu0 %v713
    %5517 = vmatprep.subr.mxu0 0.0
    %5518 = vmatpush1.msra.mxu0 %v714
    %5519 = vmatprep.subr.mxu0 0.0
    %5520 = vmatpush1.msra.mxu0 %v715
    %5521 = vmatprep.subr.mxu0 0.0
    %5522 = vmatpush1.msra.mxu0 %v716
    %5523 = vmatprep.subr.mxu0 0.0
    %5524 = vmatpush1.msra.mxu0 %v717
    %5525 = vmatprep.subr.mxu0 0.0
    %5526 = vmatpush1.msra.mxu0 %v718
    %5527 = vmatprep.subr.mxu0 0.0
    %5528 = vmatpush1.msra.mxu0 %v719
    %5529 = vmatprep.subr.mxu0 0.0
    %5530 = vmatpush1.msra.mxu0 %v720
    %5531 = vmatprep.subr.mxu0 0.0
    %5532 = vmatpush1.msra.mxu0 %v721
    %5533 = vmatprep.subr.mxu0 0.0
    %5534 = vmatpush1.msra.mxu0 %v722
    %5535 = vmatprep.subr.mxu0 0.0
    %5536 = vmatpush1.msra.mxu0 %v723
    %5537 = vmatprep.subr.mxu0 0.0
    %5538 = vmatpush1.msra.mxu0 %v724
    %5539 = vmatprep.subr.mxu0 0.0
    %5540 = vmatpush1.msra.mxu0 %v725
    %5541 = vmatprep.subr.mxu0 0.0
    %5542 = vmatpush1.msra.mxu0 %v726
    %5543 = vmatprep.subr.mxu0 0.0
    %5544 = vmatpush1.msra.mxu0 %v727
    %5545 = vmatprep.subr.mxu0 0.0
    %5546 = vmatpush1.msra.mxu0 %v728
    %5547 = vmatprep.subr.mxu0 0.0
    %5548 = vmatpush1.msra.mxu0 %v729
    %5549 = vmatprep.subr.mxu0 0.0
    %5550 = vmatpush1.msra.mxu0 %v730
    %5551 = vmatprep.subr.mxu0 0.0
    %5552 = vmatpush1.msra.mxu0 %v731
    %5553 = vmatprep.subr.mxu0 0.0
    %5554 = vmatpush1.msra.mxu0 %v732
    %5555 = vmatprep.subr.mxu0 0.0
    %5556 = vmatpush1.msra.mxu0 %v733
    %5557 = vmatprep.subr.mxu0 0.0
    %5558 = vmatpush1.msra.mxu0 %v734
    %5559 = vmatprep.subr.mxu0 0.0
    %5560 = vmatpush1.msra.mxu0 %v735
    %5561 = vmatprep.subr.mxu0 0.0
    %5562 = vmatpush1.msra.mxu0 %v736
    %5563 = vmatprep.subr.mxu0 0.0
    %5564 = vmatpush1.msra.mxu0 %v737
    %5565 = vmatprep.subr.mxu0 0.0
    %5566 = vmatpush1.msra.mxu0 %v738
    %5567 = vmatprep.subr.mxu0 0.0
    %5568 = vmatpush1.msra.mxu0 %v739
    %5569 = vmatprep.subr.mxu0 0.0
    %5570 = vmatpush1.msra.mxu0 %v740
    %5571 = vmatprep.mubr.f32.mxu0 %v3887
    %5572 = vmatmul.mubr.f32.gmra.mrb[0].mxu0 %v3885
    %v5573 = vpop.f32.mrb[0].mxu0
    %v5574 = vadd.f32 %v5504, %v5573
    %v5575 = vpop.f32.mrb[0].mxu0
    %5576 = vdwg.mxu0
    %5577 = vmatprep.subr.mxu0 0.0
    %5578 = vmatpush1.msra.mxu0 %v741
    %5579 = vmatprep.subr.mxu0 0.0
    %5580 = vmatpush1.msra.mxu0 %v742
    %5581 = vmatprep.subr.mxu0 0.0
    %5582 = vmatpush1.msra.mxu0 %v743
    %5583 = vmatprep.subr.mxu0 0.0
    %5584 = vmatpush1.msra.mxu0 %v744
    %5585 = vmatprep.subr.mxu0 0.0
    %5586 = vmatpush1.msra.mxu0 %v745
    %5587 = vmatprep.subr.mxu0 0.0
    %5588 = vmatpush1.msra.mxu0 %v746
    %5589 = vmatprep.subr.mxu0 0.0
    %5590 = vmatpush1.msra.mxu0 %v747
    %5591 = vmatprep.subr.mxu0 0.0
    %5592 = vmatpush1.msra.mxu0 %v748
    %5593 = vmatprep.subr.mxu0 0.0
    %5594 = vmatpush1.msra.mxu0 %v749
    %5595 = vmatprep.subr.mxu0 0.0
    %5596 = vmatpush1.msra.mxu0 %v750
    %5597 = vmatprep.subr.mxu0 0.0
    %5598 = vmatpush1.msra.mxu0 %v751
    %5599 = vmatprep.subr.mxu0 0.0
    %5600 = vmatpush1.msra.mxu0 %v752
    %5601 = vmatprep.subr.mxu0 0.0
    %5602 = vmatpush1.msra.mxu0 %v753
    %5603 = vmatprep.subr.mxu0 0.0
    %5604 = vmatpush1.msra.mxu0 %v754
    %5605 = vmatprep.subr.mxu0 0.0
    %5606 = vmatpush1.msra.mxu0 %v755
    %5607 = vmatprep.subr.mxu0 0.0
    %5608 = vmatpush1.msra.mxu0 %v756
    %5609 = vmatprep.subr.mxu0 0.0
    %5610 = vmatpush1.msra.mxu0 %v757
    %5611 = vmatprep.subr.mxu0 0.0
    %5612 = vmatpush1.msra.mxu0 %v758
    %5613 = vmatprep.subr.mxu0 0.0
    %5614 = vmatpush1.msra.mxu0 %v759
    %5615 = vmatprep.subr.mxu0 0.0
    %5616 = vmatpush1.msra.mxu0 %v760
    %5617 = vmatprep.subr.mxu0 0.0
    %5618 = vmatpush1.msra.mxu0 %v761
    %5619 = vmatprep.subr.mxu0 0.0
    %5620 = vmatpush1.msra.mxu0 %v762
    %5621 = vmatprep.subr.mxu0 0.0
    %5622 = vmatpush1.msra.mxu0 %v763
    %5623 = vmatprep.subr.mxu0 0.0
    %5624 = vmatpush1.msra.mxu0 %v764
    %5625 = vmatprep.subr.mxu0 0.0
    %5626 = vmatpush1.msra.mxu0 %v765
    %5627 = vmatprep.subr.mxu0 0.0
    %5628 = vmatpush1.msra.mxu0 %v766
    %5629 = vmatprep.subr.mxu0 0.0
    %5630 = vmatpush1.msra.mxu0 %v767
    %5631 = vmatprep.subr.mxu0 0.0
    %5632 = vmatpush1.msra.mxu0 %v768
    %5633 = vmatprep.subr.mxu0 0.0
    %5634 = vmatpush1.msra.mxu0 %v769
    %5635 = vmatprep.subr.mxu0 0.0
    %5636 = vmatpush1.msra.mxu0 %v770
    %5637 = vmatprep.subr.mxu0 0.0
    %5638 = vmatpush1.msra.mxu0 %v771
    %5639 = vmatprep.subr.mxu0 0.0
    %5640 = vmatpush1.msra.mxu0 %v772
    %5641 = vmatprep.mubr.f32.mxu0 %v3903
    %5642 = vmatmul.mubr.f32.gmra.mrb[0].mxu0 %v3895
    %v5643 = vpop.f32.mrb[0].mxu0
    %v5644 = vadd.f32 %v5574, %v5643
    %v5645 = vpop.f32.mrb[0].mxu0
    %5646 = vdwg.mxu0
    %5647 = vmatprep.subr.mxu0 0.0
    %5648 = vmatpush1.msra.mxu0 %v773
    %5649 = vmatprep.subr.mxu0 0.0
    %5650 = vmatpush1.msra.mxu0 %v774
    %5651 = vmatprep.subr.mxu0 0.0
    %5652 = vmatpush1.msra.mxu0 %v775
    %5653 = vmatprep.subr.mxu0 0.0
    %5654 = vmatpush1.msra.mxu0 %v776
    %5655 = vmatprep.subr.mxu0 0.0
    %5656 = vmatpush1.msra.mxu0 %v777
    %5657 = vmatprep.subr.mxu0 0.0
    %5658 = vmatpush1.msra.mxu0 %v778
    %5659 = vmatprep.subr.mxu0 0.0
    %5660 = vmatpush1.msra.mxu0 %v779
    %5661 = vmatprep.subr.mxu0 0.0
    %5662 = vmatpush1.msra.mxu0 %v780
    %5663 = vmatprep.subr.mxu0 0.0
    %5664 = vmatpush1.msra.mxu0 %v781
    %5665 = vmatprep.subr.mxu0 0.0
    %5666 = vmatpush1.msra.mxu0 %v782
    %5667 = vmatprep.subr.mxu0 0.0
    %5668 = vmatpush1.msra.mxu0 %v783
    %5669 = vmatprep.subr.mxu0 0.0
    %5670 = vmatpush1.msra.mxu0 %v784
    %5671 = vmatprep.subr.mxu0 0.0
    %5672 = vmatpush1.msra.mxu0 %v785
    %5673 = vmatprep.subr.mxu0 0.0
    %5674 = vmatpush1.msra.mxu0 %v786
    %5675 = vmatprep.subr.mxu0 0.0
    %5676 = vmatpush1.msra.mxu0 %v787
    %5677 = vmatprep.subr.mxu0 0.0
    %5678 = vmatpush1.msra.mxu0 %v788
    %5679 = vmatprep.subr.mxu0 0.0
    %5680 = vmatpush1.msra.mxu0 %v789
    %5681 = vmatprep.subr.mxu0 0.0
    %5682 = vmatpush1.msra.mxu0 %v790
    %5683 = vmatprep.subr.mxu0 0.0
    %5684 = vmatpush1.msra.mxu0 %v791
    %5685 = vmatprep.subr.mxu0 0.0
    %5686 = vmatpush1.msra.mxu0 %v792
    %5687 = vmatprep.subr.mxu0 0.0
    %5688 = vmatpush1.msra.mxu0 %v793
    %5689 = vmatprep.subr.mxu0 0.0
    %5690 = vmatpush1.msra.mxu0 %v794
    %5691 = vmatprep.subr.mxu0 0.0
    %5692 = vmatpush1.msra.mxu0 %v795
    %5693 = vmatprep.subr.mxu0 0.0
    %5694 = vmatpush1.msra.mxu0 %v796
    %5695 = vmatprep.subr.mxu0 0.0
    %5696 = vmatpush1.msra.mxu0 %v797
    %5697 = vmatprep.subr.mxu0 0.0
    %5698 = vmatpush1.msra.mxu0 %v798
    %5699 = vmatprep.subr.mxu0 0.0
    %5700 = vmatpush1.msra.mxu0 %v799
    %5701 = vmatprep.subr.mxu0 0.0
    %5702 = vmatpush1.msra.mxu0 %v800
    %5703 = vmatprep.subr.mxu0 0.0
    %5704 = vmatpush1.msra.mxu0 %v801
    %5705 = vmatprep.subr.mxu0 0.0
    %5706 = vmatpush1.msra.mxu0 %v802
    %5707 = vmatprep.subr.mxu0 0.0
    %5708 = vmatpush1.msra.mxu0 %v803
    %5709 = vmatprep.subr.mxu0 0.0
    %5710 = vmatpush1.msra.mxu0 %v804
    %5711 = vmatprep.mubr.f32.mxu0 %v3904
    %5712 = vmatmul.mubr.f32.gmra.mrb[0].mxu0 %v3902
    %v5713 = vpop.f32.mrb[0].mxu0
    %v5714 = vadd.f32 %v5644, %v5713
    %v5715 = vpop.f32.mrb[0].mxu0
    %5716 = vdwg.mxu0
    %5717 = vmatprep.subr.mxu0 0.0
    %5718 = vmatpush1.msra.mxu0 %v805
    %5719 = vmatprep.subr.mxu0 0.0
    %5720 = vmatpush1.msra.mxu0 %v806
    %5721 = vmatprep.subr.mxu0 0.0
    %5722 = vmatpush1.msra.mxu0 %v807
    %5723 = vmatprep.subr.mxu0 0.0
    %5724 = vmatpush1.msra.mxu0 %v808
    %5725 = vmatprep.subr.mxu0 0.0
    %5726 = vmatpush1.msra.mxu0 %v809
    %5727 = vmatprep.subr.mxu0 0.0
    %5728 = vmatpush1.msra.mxu0 %v810
    %5729 = vmatprep.subr.mxu0 0.0
    %5730 = vmatpush1.msra.mxu0 %v811
    %5731 = vmatprep.subr.mxu0 0.0
    %5732 = vmatpush1.msra.mxu0 %v812
    %5733 = vmatprep.subr.mxu0 0.0
    %5734 = vmatpush1.msra.mxu0 %v813
    %5735 = vmatprep.subr.mxu0 0.0
    %5736 = vmatpush1.msra.mxu0 %v814
    %5737 = vmatprep.subr.mxu0 0.0
    %5738 = vmatpush1.msra.mxu0 %v815
    %5739 = vmatprep.subr.mxu0 0.0
    %5740 = vmatpush1.msra.mxu0 %v816
    %5741 = vmatprep.subr.mxu0 0.0
    %5742 = vmatpush1.msra.mxu0 %v817
    %5743 = vmatprep.subr.mxu0 0.0
    %5744 = vmatpush1.msra.mxu0 %v818
    %5745 = vmatprep.subr.mxu0 0.0
    %5746 = vmatpush1.msra.mxu0 %v819
    %5747 = vmatprep.subr.mxu0 0.0
    %5748 = vmatpush1.msra.mxu0 %v820
    %5749 = vmatprep.subr.mxu0 0.0
    %5750 = vmatpush1.msra.mxu0 %v821
    %5751 = vmatprep.subr.mxu0 0.0
    %5752 = vmatpush1.msra.mxu0 %v822
    %5753 = vmatprep.subr.mxu0 0.0
    %5754 = vmatpush1.msra.mxu0 %v823
    %5755 = vmatprep.subr.mxu0 0.0
    %5756 = vmatpush1.msra.mxu0 %v824
    %5757 = vmatprep.subr.mxu0 0.0
    %5758 = vmatpush1.msra.mxu0 %v825
    %5759 = vmatprep.subr.mxu0 0.0
    %5760 = vmatpush1.msra.mxu0 %v826
    %5761 = vmatprep.subr.mxu0 0.0
    %5762 = vmatpush1.msra.mxu0 %v827
    %5763 = vmatprep.subr.mxu0 0.0
    %5764 = vmatpush1.msra.mxu0 %v828
    %5765 = vmatprep.subr.mxu0 0.0
    %5766 = vmatpush1.msra.mxu0 %v829
    %5767 = vmatprep.subr.mxu0 0.0
    %5768 = vmatpush1.msra.mxu0 %v830
    %5769 = vmatprep.subr.mxu0 0.0
    %5770 = vmatpush1.msra.mxu0 %v831
    %5771 = vmatprep.subr.mxu0 0.0
    %5772 = vmatpush1.msra.mxu0 %v832
    %5773 = vmatprep.subr.mxu0 0.0
    %5774 = vmatpush1.msra.mxu0 %v833
    %5775 = vmatprep.subr.mxu0 0.0
    %5776 = vmatpush1.msra.mxu0 %v834
    %5777 = vmatprep.subr.mxu0 0.0
    %5778 = vmatpush1.msra.mxu0 %v835
    %5779 = vmatprep.subr.mxu0 0.0
    %5780 = vmatpush1.msra.mxu0 %v836
    %5781 = vmatprep.mubr.f32.mxu0 %v3920
    %5782 = vmatmul.mubr.f32.gmra.mrb[0].mxu0 %v3912
    %v5783 = vpop.f32.mrb[0].mxu0
    %v5784 = vadd.f32 %v5714, %v5783
    %v5785 = vpop.f32.mrb[0].mxu0
    %5786 = vdwg.mxu0
    %5787 = vmatprep.subr.mxu0 0.0
    %5788 = vmatpush1.msra.mxu0 %v837
    %5789 = vmatprep.subr.mxu0 0.0
    %5790 = vmatpush1.msra.mxu0 %v838
    %5791 = vmatprep.subr.mxu0 0.0
    %5792 = vmatpush1.msra.mxu0 %v839
    %5793 = vmatprep.subr.mxu0 0.0
    %5794 = vmatpush1.msra.mxu0 %v840
    %5795 = vmatprep.subr.mxu0 0.0
    %5796 = vmatpush1.msra.mxu0 %v841
    %5797 = vmatprep.subr.mxu0 0.0
    %5798 = vmatpush1.msra.mxu0 %v842
    %5799 = vmatprep.subr.mxu0 0.0
    %5800 = vmatpush1.msra.mxu0 %v843
    %5801 = vmatprep.subr.mxu0 0.0
    %5802 = vmatpush1.msra.mxu0 %v844
    %5803 = vmatprep.subr.mxu0 0.0
    %5804 = vmatpush1.msra.mxu0 %v845
    %5805 = vmatprep.subr.mxu0 0.0
    %5806 = vmatpush1.msra.mxu0 %v846
    %5807 = vmatprep.subr.mxu0 0.0
    %5808 = vmatpush1.msra.mxu0 %v847
    %5809 = vmatprep.subr.mxu0 0.0
    %5810 = vmatpush1.msra.mxu0 %v848
    %5811 = vmatprep.subr.mxu0 0.0
    %5812 = vmatpush1.msra.mxu0 %v849
    %5813 = vmatprep.subr.mxu0 0.0
    %5814 = vmatpush1.msra.mxu0 %v850
    %5815 = vmatprep.subr.mxu0 0.0
    %5816 = vmatpush1.msra.mxu0 %v851
    %5817 = vmatprep.subr.mxu0 0.0
    %5818 = vmatpush1.msra.mxu0 %v852
    %5819 = vmatprep.subr.mxu0 0.0
    %5820 = vmatpush1.msra.mxu0 %v853
    %5821 = vmatprep.subr.mxu0 0.0
    %5822 = vmatpush1.msra.mxu0 %v854
    %5823 = vmatprep.subr.mxu0 0.0
    %5824 = vmatpush1.msra.mxu0 %v855
    %5825 = vmatprep.subr.mxu0 0.0
    %5826 = vmatpush1.msra.mxu0 %v856
    %5827 = vmatprep.subr.mxu0 0.0
    %5828 = vmatpush1.msra.mxu0 %v857
    %5829 = vmatprep.subr.mxu0 0.0
    %5830 = vmatpush1.msra.mxu0 %v858
    %5831 = vmatprep.subr.mxu0 0.0
    %5832 = vmatpush1.msra.mxu0 %v859
    %5833 = vmatprep.subr.mxu0 0.0
    %5834 = vmatpush1.msra.mxu0 %v860
    %5835 = vmatprep.subr.mxu0 0.0
    %5836 = vmatpush1.msra.mxu0 %v861
    %5837 = vmatprep.subr.mxu0 0.0
    %5838 = vmatpush1.msra.mxu0 %v862
    %5839 = vmatprep.subr.mxu0 0.0
    %5840 = vmatpush1.msra.mxu0 %v863
    %5841 = vmatprep.subr.mxu0 0.0
    %5842 = vmatpush1.msra.mxu0 %v864
    %5843 = vmatprep.subr.mxu0 0.0
    %5844 = vmatpush1.msra.mxu0 %v865
    %5845 = vmatprep.subr.mxu0 0.0
    %5846 = vmatpush1.msra.mxu0 %v866
    %5847 = vmatprep.subr.mxu0 0.0
    %5848 = vmatpush1.msra.mxu0 %v867
    %5849 = vmatprep.subr.mxu0 0.0
    %5850 = vmatpush1.msra.mxu0 %v868
    %5851 = vmatprep.mubr.f32.mxu0 %v3921
    %5852 = vmatmul.mubr.f32.gmra.mrb[0].mxu0 %v3919
    %v5853 = vpop.f32.mrb[0].mxu0
    %v5854 = vadd.f32 %v5784, %v5853
    %v5855 = vpop.f32.mrb[0].mxu0
    %5856 = vdwg.mxu0
    %5857 = vmatprep.subr.mxu0 0.0
    %5858 = vmatpush1.msra.mxu0 %v869
    %5859 = vmatprep.subr.mxu0 0.0
    %5860 = vmatpush1.msra.mxu0 %v870
    %5861 = vmatprep.subr.mxu0 0.0
    %5862 = vmatpush1.msra.mxu0 %v871
    %5863 = vmatprep.subr.mxu0 0.0
    %5864 = vmatpush1.msra.mxu0 %v872
    %5865 = vmatprep.subr.mxu0 0.0
    %5866 = vmatpush1.msra.mxu0 %v873
    %5867 = vmatprep.subr.mxu0 0.0
    %5868 = vmatpush1.msra.mxu0 %v874
    %5869 = vmatprep.subr.mxu0 0.0
    %5870 = vmatpush1.msra.mxu0 %v875
    %5871 = vmatprep.subr.mxu0 0.0
    %5872 = vmatpush1.msra.mxu0 %v876
    %5873 = vmatprep.subr.mxu0 0.0
    %5874 = vmatpush1.msra.mxu0 %v877
    %5875 = vmatprep.subr.mxu0 0.0
    %5876 = vmatpush1.msra.mxu0 %v878
    %5877 = vmatprep.subr.mxu0 0.0
    %5878 = vmatpush1.msra.mxu0 %v879
    %5879 = vmatprep.subr.mxu0 0.0
    %5880 = vmatpush1.msra.mxu0 %v880
    %5881 = vmatprep.subr.mxu0 0.0
    %5882 = vmatpush1.msra.mxu0 %v881
    %5883 = vmatprep.subr.mxu0 0.0
    %5884 = vmatpush1.msra.mxu0 %v882
    %5885 = vmatprep.subr.mxu0 0.0
    %5886 = vmatpush1.msra.mxu0 %v883
    %5887 = vmatprep.subr.mxu0 0.0
    %5888 = vmatpush1.msra.mxu0 %v884
    %5889 = vmatprep.subr.mxu0 0.0
    %5890 = vmatpush1.msra.mxu0 %v885
    %5891 = vmatprep.subr.mxu0 0.0
    %5892 = vmatpush1.msra.mxu0 %v886
    %5893 = vmatprep.subr.mxu0 0.0
    %5894 = vmatpush1.msra.mxu0 %v887
    %5895 = vmatprep.subr.mxu0 0.0
    %5896 = vmatpush1.msra.mxu0 %v888
    %5897 = vmatprep.subr.mxu0 0.0
    %5898 = vmatpush1.msra.mxu0 %v889
    %5899 = vmatprep.subr.mxu0 0.0
    %5900 = vmatpush1.msra.mxu0 %v890
    %5901 = vmatprep.subr.mxu0 0.0
    %5902 = vmatpush1.msra.mxu0 %v891
    %5903 = vmatprep.subr.mxu0 0.0
    %5904 = vmatpush1.msra.mxu0 %v892
    %5905 = vmatprep.subr.mxu0 0.0
    %5906 = vmatpush1.msra.mxu0 %v893
    %5907 = vmatprep.subr.mxu0 0.0
    %5908 = vmatpush1.msra.mxu0 %v894
    %5909 = vmatprep.subr.mxu0 0.0
    %5910 = vmatpush1.msra.mxu0 %v895
    %5911 = vmatprep.subr.mxu0 0.0
    %5912 = vmatpush1.msra.mxu0 %v896
    %5913 = vmatprep.subr.mxu0 0.0
    %5914 = vmatpush1.msra.mxu0 %v897
    %5915 = vmatprep.subr.mxu0 0.0
    %5916 = vmatpush1.msra.mxu0 %v898
    %5917 = vmatprep.subr.mxu0 0.0
    %5918 = vmatpush1.msra.mxu0 %v899
    %5919 = vmatprep.subr.mxu0 0.0
    %5920 = vmatpush1.msra.mxu0 %v900
    %5921 = vmatprep.mubr.f32.mxu0 %v3937
    %5922 = vmatmul.mubr.f32.gmra.mrb[0].mxu0 %v3929
    %v5923 = vpop.f32.mrb[0].mxu0
    %v5924 = vadd.f32 %v5854, %v5923
    %v5925 = vpop.f32.mrb[0].mxu0
    %5926 = vdwg.mxu0
    %5927 = vmatprep.subr.mxu0 0.0
    %5928 = vmatpush1.msra.mxu0 %v901
    %5929 = vmatprep.subr.mxu0 0.0
    %5930 = vmatpush1.msra.mxu0 %v902
    %5931 = vmatprep.subr.mxu0 0.0
    %5932 = vmatpush1.msra.mxu0 %v903
    %5933 = vmatprep.subr.mxu0 0.0
    %5934 = vmatpush1.msra.mxu0 %v904
    %5935 = vmatprep.subr.mxu0 0.0
    %5936 = vmatpush1.msra.mxu0 %v905
    %5937 = vmatprep.subr.mxu0 0.0
    %5938 = vmatpush1.msra.mxu0 %v906
    %5939 = vmatprep.subr.mxu0 0.0
    %5940 = vmatpush1.msra.mxu0 %v907
    %5941 = vmatprep.subr.mxu0 0.0
    %5942 = vmatpush1.msra.mxu0 %v908
    %5943 = vmatprep.subr.mxu0 0.0
    %5944 = vmatpush1.msra.mxu0 %v909
    %5945 = vmatprep.subr.mxu0 0.0
    %5946 = vmatpush1.msra.mxu0 %v910
    %5947 = vmatprep.subr.mxu0 0.0
    %5948 = vmatpush1.msra.mxu0 %v911
    %5949 = vmatprep.subr.mxu0 0.0
    %5950 = vmatpush1.msra.mxu0 %v912
    %5951 = vmatprep.subr.mxu0 0.0
    %5952 = vmatpush1.msra.mxu0 %v913
    %5953 = vmatprep.subr.mxu0 0.0
    %5954 = vmatpush1.msra.mxu0 %v914
    %5955 = vmatprep.subr.mxu0 0.0
    %5956 = vmatpush1.msra.mxu0 %v915
    %5957 = vmatprep.subr.mxu0 0.0
    %5958 = vmatpush1.msra.mxu0 %v916
    %5959 = vmatprep.subr.mxu0 0.0
    %5960 = vmatpush1.msra.mxu0 %v917
    %5961 = vmatprep.subr.mxu0 0.0
    %5962 = vmatpush1.msra.mxu0 %v918
    %5963 = vmatprep.subr.mxu0 0.0
    %5964 = vmatpush1.msra.mxu0 %v919
    %5965 = vmatprep.subr.mxu0 0.0
    %5966 = vmatpush1.msra.mxu0 %v920
    %5967 = vmatprep.subr.mxu0 0.0
    %5968 = vmatpush1.msra.mxu0 %v921
    %5969 = vmatprep.subr.mxu0 0.0
    %5970 = vmatpush1.msra.mxu0 %v922
    %5971 = vmatprep.subr.mxu0 0.0
    %5972 = vmatpush1.msra.mxu0 %v923
    %5973 = vmatprep.subr.mxu0 0.0
    %5974 = vmatpush1.msra.mxu0 %v924
    %5975 = vmatprep.subr.mxu0 0.0
    %5976 = vmatpush1.msra.mxu0 %v925
    %5977 = vmatprep.subr.mxu0 0.0
    %5978 = vmatpush1.msra.mxu0 %v926
    %5979 = vmatprep.subr.mxu0 0.0
    %5980 = vmatpush1.msra.mxu0 %v927
    %5981 = vmatprep.subr.mxu0 0.0
    %5982 = vmatpush1.msra.mxu0 %v928
    %5983 = vmatprep.subr.mxu0 0.0
    %5984 = vmatpush1.msra.mxu0 %v929
    %5985 = vmatprep.subr.mxu0 0.0
    %5986 = vmatpush1.msra.mxu0 %v930
    %5987 = vmatprep.subr.mxu0 0.0
    %5988 = vmatpush1.msra.mxu0 %v931
    %5989 = vmatprep.subr.mxu0 0.0
    %5990 = vmatpush1.msra.mxu0 %v932
    %5991 = vmatprep.mubr.f32.mxu0 %v3938
    %5992 = vmatmul.mubr.f32.gmra.mrb[0].mxu0 %v3936
    %v5993 = vpop.f32.mrb[0].mxu0
    %v5994 = vadd.f32 %v5924, %v5993
    %v5995 = vpop.f32.mrb[0].mxu0
    %5996 = vdwg.mxu0
    %5997 = vmatprep.subr.mxu0 0.0
    %5998 = vmatpush1.msra.mxu0 %v933
    %5999 = vmatprep.subr.mxu0 0.0
    %6000 = vmatpush1.msra.mxu0 %v934
    %6001 = vmatprep.subr.mxu0 0.0
    %6002 = vmatpush1.msra.mxu0 %v935
    %6003 = vmatprep.subr.mxu0 0.0
    %6004 = vmatpush1.msra.mxu0 %v936
    %6005 = vmatprep.subr.mxu0 0.0
    %6006 = vmatpush1.msra.mxu0 %v937
    %6007 = vmatprep.subr.mxu0 0.0
    %6008 = vmatpush1.msra.mxu0 %v938
    %6009 = vmatprep.subr.mxu0 0.0
    %6010 = vmatpush1.msra.mxu0 %v939
    %6011 = vmatprep.subr.mxu0 0.0
    %6012 = vmatpush1.msra.mxu0 %v940
    %6013 = vmatprep.subr.mxu0 0.0
    %6014 = vmatpush1.msra.mxu0 %v941
    %6015 = vmatprep.subr.mxu0 0.0
    %6016 = vmatpush1.msra.mxu0 %v942
    %6017 = vmatprep.subr.mxu0 0.0
    %6018 = vmatpush1.msra.mxu0 %v943
    %6019 = vmatprep.subr.mxu0 0.0
    %6020 = vmatpush1.msra.mxu0 %v944
    %6021 = vmatprep.subr.mxu0 0.0
    %6022 = vmatpush1.msra.mxu0 %v945
    %6023 = vmatprep.subr.mxu0 0.0
    %6024 = vmatpush1.msra.mxu0 %v946
    %6025 = vmatprep.subr.mxu0 0.0
    %6026 = vmatpush1.msra.mxu0 %v947
    %6027 = vmatprep.subr.mxu0 0.0
    %6028 = vmatpush1.msra.mxu0 %v948
    %6029 = vmatprep.subr.mxu0 0.0
    %6030 = vmatpush1.msra.mxu0 %v949
    %6031 = vmatprep.subr.mxu0 0.0
    %6032 = vmatpush1.msra.mxu0 %v950
    %6033 = vmatprep.subr.mxu0 0.0
    %6034 = vmatpush1.msra.mxu0 %v951
    %6035 = vmatprep.subr.mxu0 0.0
    %6036 = vmatpush1.msra.mxu0 %v952
    %6037 = vmatprep.subr.mxu0 0.0
    %6038 = vmatpush1.msra.mxu0 %v953
    %6039 = vmatprep.subr.mxu0 0.0
    %6040 = vmatpush1.msra.mxu0 %v954
    %6041 = vmatprep.subr.mxu0 0.0
    %6042 = vmatpush1.msra.mxu0 %v955
    %6043 = vmatprep.subr.mxu0 0.0
    %6044 = vmatpush1.msra.mxu0 %v956
    %6045 = vmatprep.subr.mxu0 0.0
    %6046 = vmatpush1.msra.mxu0 %v957
    %6047 = vmatprep.subr.mxu0 0.0
    %6048 = vmatpush1.msra.mxu0 %v958
    %6049 = vmatprep.subr.mxu0 0.0
    %6050 = vmatpush1.msra.mxu0 %v959
    %6051 = vmatprep.subr.mxu0 0.0
    %6052 = vmatpush1.msra.mxu0 %v960
    %6053 = vmatprep.subr.mxu0 0.0
    %6054 = vmatpush1.msra.mxu0 %v961
    %6055 = vmatprep.subr.mxu0 0.0
    %6056 = vmatpush1.msra.mxu0 %v962
    %6057 = vmatprep.subr.mxu0 0.0
    %6058 = vmatpush1.msra.mxu0 %v963
    %6059 = vmatprep.subr.mxu0 0.0
    %6060 = vmatpush1.msra.mxu0 %v964
    %6061 = vmatprep.mubr.f32.mxu0 %v3954
    %6062 = vmatmul.mubr.f32.gmra.mrb[0].mxu0 %v3946
    %v6063 = vpop.f32.mrb[0].mxu0
    %v6064 = vadd.f32 %v5994, %v6063
    %v6065 = vpop.f32.mrb[0].mxu0
    %6066 = vdwg.mxu0
    %6067 = vmatprep.subr.mxu0 0.0
    %6068 = vmatpush1.msra.mxu0 %v965
    %6069 = vmatprep.subr.mxu0 0.0
    %6070 = vmatpush1.msra.mxu0 %v966
    %6071 = vmatprep.subr.mxu0 0.0
    %6072 = vmatpush1.msra.mxu0 %v967
    %6073 = vmatprep.subr.mxu0 0.0
    %6074 = vmatpush1.msra.mxu0 %v968
    %6075 = vmatprep.subr.mxu0 0.0
    %6076 = vmatpush1.msra.mxu0 %v969
    %6077 = vmatprep.subr.mxu0 0.0
    %6078 = vmatpush1.msra.mxu0 %v970
    %6079 = vmatprep.subr.mxu0 0.0
    %6080 = vmatpush1.msra.mxu0 %v971
    %6081 = vmatprep.subr.mxu0 0.0
    %6082 = vmatpush1.msra.mxu0 %v972
    %6083 = vmatprep.subr.mxu0 0.0
    %6084 = vmatpush1.msra.mxu0 %v973
    %6085 = vmatprep.subr.mxu0 0.0
    %6086 = vmatpush1.msra.mxu0 %v974
    %6087 = vmatprep.subr.mxu0 0.0
    %6088 = vmatpush1.msra.mxu0 %v975
    %6089 = vmatprep.subr.mxu0 0.0
    %6090 = vmatpush1.msra.mxu0 %v976
    %6091 = vmatprep.subr.mxu0 0.0
    %6092 = vmatpush1.msra.mxu0 %v977
    %6093 = vmatprep.subr.mxu0 0.0
    %6094 = vmatpush1.msra.mxu0 %v978
    %6095 = vmatprep.subr.mxu0 0.0
    %6096 = vmatpush1.msra.mxu0 %v979
    %6097 = vmatprep.subr.mxu0 0.0
    %6098 = vmatpush1.msra.mxu0 %v980
    %6099 = vmatprep.subr.mxu0 0.0
    %6100 = vmatpush1.msra.mxu0 %v981
    %6101 = vmatprep.subr.mxu0 0.0
    %6102 = vmatpush1.msra.mxu0 %v982
    %6103 = vmatprep.subr.mxu0 0.0
    %6104 = vmatpush1.msra.mxu0 %v983
    %6105 = vmatprep.subr.mxu0 0.0
    %6106 = vmatpush1.msra.mxu0 %v984
    %6107 = vmatprep.subr.mxu0 0.0
    %6108 = vmatpush1.msra.mxu0 %v985
    %6109 = vmatprep.subr.mxu0 0.0
    %6110 = vmatpush1.msra.mxu0 %v986
    %6111 = vmatprep.subr.mxu0 0.0
    %6112 = vmatpush1.msra.mxu0 %v987
    %6113 = vmatprep.subr.mxu0 0.0
    %6114 = vmatpush1.msra.mxu0 %v988
    %6115 = vmatprep.subr.mxu0 0.0
    %6116 = vmatpush1.msra.mxu0 %v989
    %6117 = vmatprep.subr.mxu0 0.0
    %6118 = vmatpush1.msra.mxu0 %v990
    %6119 = vmatprep.subr.mxu0 0.0
    %6120 = vmatpush1.msra.mxu0 %v991
    %6121 = vmatprep.subr.mxu0 0.0
    %6122 = vmatpush1.msra.mxu0 %v992
    %6123 = vmatprep.subr.mxu0 0.0
    %6124 = vmatpush1.msra.mxu0 %v993
    %6125 = vmatprep.subr.mxu0 0.0
    %6126 = vmatpush1.msra.mxu0 %v994
    %6127 = vmatprep.subr.mxu0 0.0
    %6128 = vmatpush1.msra.mxu0 %v995
    %6129 = vmatprep.subr.mxu0 0.0
    %6130 = vmatpush1.msra.mxu0 %v996
    %6131 = vmatprep.mubr.f32.mxu0 %v3955
    %6132 = vmatmul.mubr.f32.gmra.mrb[0].mxu0 %v3953
    %v6133 = vpop.f32.mrb[0].mxu0
    %v6134 = vadd.f32 %v6064, %v6133
    %v6135 = vpop.f32.mrb[0].mxu0
    %6136 = vdwg.mxu0
    %6137 = vmatprep.subr.mxu0 0.0
    %6138 = vmatpush1.msra.mxu0 %v997
    %6139 = vmatprep.subr.mxu0 0.0
    %6140 = vmatpush1.msra.mxu0 %v998
    %6141 = vmatprep.subr.mxu0 0.0
    %6142 = vmatpush1.msra.mxu0 %v999
    %6143 = vmatprep.subr.mxu0 0.0
    %6144 = vmatpush1.msra.mxu0 %v1000
    %6145 = vmatprep.subr.mxu0 0.0
    %6146 = vmatpush1.msra.mxu0 %v1001
    %6147 = vmatprep.subr.mxu0 0.0
    %6148 = vmatpush1.msra.mxu0 %v1002
    %6149 = vmatprep.subr.mxu0 0.0
    %6150 = vmatpush1.msra.mxu0 %v1003
    %6151 = vmatprep.subr.mxu0 0.0
    %6152 = vmatpush1.msra.mxu0 %v1004
    %6153 = vmatprep.subr.mxu0 0.0
    %6154 = vmatpush1.msra.mxu0 %v1005
    %6155 = vmatprep.subr.mxu0 0.0
    %6156 = vmatpush1.msra.mxu0 %v1006
    %6157 = vmatprep.subr.mxu0 0.0
    %6158 = vmatpush1.msra.mxu0 %v1007
    %6159 = vmatprep.subr.mxu0 0.0
    %6160 = vmatpush1.msra.mxu0 %v1008
    %6161 = vmatprep.subr.mxu0 0.0
    %6162 = vmatpush1.msra.mxu0 %v1009
    %6163 = vmatprep.subr.mxu0 0.0
    %6164 = vmatpush1.msra.mxu0 %v1010
    %6165 = vmatprep.subr.mxu0 0.0
    %6166 = vmatpush1.msra.mxu0 %v1011
    %6167 = vmatprep.subr.mxu0 0.0
    %6168 = vmatpush1.msra.mxu0 %v1012
    %6169 = vmatprep.subr.mxu0 0.0
    %6170 = vmatpush1.msra.mxu0 %v1013
    %6171 = vmatprep.subr.mxu0 0.0
    %6172 = vmatpush1.msra.mxu0 %v1014
    %6173 = vmatprep.subr.mxu0 0.0
    %6174 = vmatpush1.msra.mxu0 %v1015
    %6175 = vmatprep.subr.mxu0 0.0
    %6176 = vmatpush1.msra.mxu0 %v1016
    %6177 = vmatprep.subr.mxu0 0.0
    %6178 = vmatpush1.msra.mxu0 %v1017
    %6179 = vmatprep.subr.mxu0 0.0
    %6180 = vmatpush1.msra.mxu0 %v1018
    %6181 = vmatprep.subr.mxu0 0.0
    %6182 = vmatpush1.msra.mxu0 %v1019
    %6183 = vmatprep.subr.mxu0 0.0
    %6184 = vmatpush1.msra.mxu0 %v1020
    %6185 = vmatprep.subr.mxu0 0.0
    %6186 = vmatpush1.msra.mxu0 %v1021
    %6187 = vmatprep.subr.mxu0 0.0
    %6188 = vmatpush1.msra.mxu0 %v1022
    %6189 = vmatprep.subr.mxu0 0.0
    %6190 = vmatpush1.msra.mxu0 %v1023
    %6191 = vmatprep.subr.mxu0 0.0
    %6192 = vmatpush1.msra.mxu0 %v1024
    %6193 = vmatprep.subr.mxu0 0.0
    %6194 = vmatpush1.msra.mxu0 %v1025
    %6195 = vmatprep.subr.mxu0 0.0
    %6196 = vmatpush1.msra.mxu0 %v1026
    %6197 = vmatprep.subr.mxu0 0.0
    %6198 = vmatpush1.msra.mxu0 %v1027
    %6199 = vmatprep.subr.mxu0 0.0
    %6200 = vmatpush1.msra.mxu0 %v1028
    %6201 = vmatprep.mubr.f32.mxu0 %v3971
    %6202 = vmatmul.mubr.f32.gmra.mrb[0].mxu0 %v3963
    %v6203 = vpop.f32.mrb[0].mxu0
    %v6204 = vadd.f32 %v6134, %v6203
    %v6205 = vpop.f32.mrb[0].mxu0
    %6206 = vdwg.mxu0
    %6207 = vmatprep.subr.mxu0 0.0
    %6208 = vmatpush1.msra.mxu0 %v1029
    %6209 = vmatprep.subr.mxu0 0.0
    %6210 = vmatpush1.msra.mxu0 %v1030
    %6211 = vmatprep.subr.mxu0 0.0
    %6212 = vmatpush1.msra.mxu0 %v1031
    %6213 = vmatprep.subr.mxu0 0.0
    %6214 = vmatpush1.msra.mxu0 %v1032
    %6215 = vmatprep.subr.mxu0 0.0
    %6216 = vmatpush1.msra.mxu0 %v1033
    %6217 = vmatprep.subr.mxu0 0.0
    %6218 = vmatpush1.msra.mxu0 %v1034
    %6219 = vmatprep.subr.mxu0 0.0
    %6220 = vmatpush1.msra.mxu0 %v1035
    %6221 = vmatprep.subr.mxu0 0.0
    %6222 = vmatpush1.msra.mxu0 %v1036
    %6223 = vmatprep.subr.mxu0 0.0
    %6224 = vmatpush1.msra.mxu0 %v1037
    %6225 = vmatprep.subr.mxu0 0.0
    %6226 = vmatpush1.msra.mxu0 %v1038
    %6227 = vmatprep.subr.mxu0 0.0
    %6228 = vmatpush1.msra.mxu0 %v1039
    %6229 = vmatprep.subr.mxu0 0.0
    %6230 = vmatpush1.msra.mxu0 %v1040
    %6231 = vmatprep.subr.mxu0 0.0
    %6232 = vmatpush1.msra.mxu0 %v1041
    %6233 = vmatprep.subr.mxu0 0.0
    %6234 = vmatpush1.msra.mxu0 %v1042
    %6235 = vmatprep.subr.mxu0 0.0
    %6236 = vmatpush1.msra.mxu0 %v1043
    %6237 = vmatprep.subr.mxu0 0.0
    %6238 = vmatpush1.msra.mxu0 %v1044
    %6239 = vmatprep.subr.mxu0 0.0
    %6240 = vmatpush1.msra.mxu0 %v1045
    %6241 = vmatprep.subr.mxu0 0.0
    %6242 = vmatpush1.msra.mxu0 %v1046
    %6243 = vmatprep.subr.mxu0 0.0
    %6244 = vmatpush1.msra.mxu0 %v1047
    %6245 = vmatprep.subr.mxu0 0.0
    %6246 = vmatpush1.msra.mxu0 %v1048
    %6247 = vmatprep.subr.mxu0 0.0
    %6248 = vmatpush1.msra.mxu0 %v1049
    %6249 = vmatprep.subr.mxu0 0.0
    %6250 = vmatpush1.msra.mxu0 %v1050
    %6251 = vmatprep.subr.mxu0 0.0
    %6252 = vmatpush1.msra.mxu0 %v1051
    %6253 = vmatprep.subr.mxu0 0.0
    %6254 = vmatpush1.msra.mxu0 %v1052
    %6255 = vmatprep.subr.mxu0 0.0
    %6256 = vmatpush1.msra.mxu0 %v1053
    %6257 = vmatprep.subr.mxu0 0.0
    %6258 = vmatpush1.msra.mxu0 %v1054
    %6259 = vmatprep.subr.mxu0 0.0
    %6260 = vmatpush1.msra.mxu0 %v1055
    %6261 = vmatprep.subr.mxu0 0.0
    %6262 = vmatpush1.msra.mxu0 %v1056
    %6263 = vmatprep.subr.mxu0 0.0
    %6264 = vmatpush1.msra.mxu0 %v1057
    %6265 = vmatprep.subr.mxu0 0.0
    %6266 = vmatpush1.msra.mxu0 %v1058
    %6267 = vmatprep.subr.mxu0 0.0
    %6268 = vmatpush1.msra.mxu0 %v1059
    %6269 = vmatprep.subr.mxu0 0.0
    %6270 = vmatpush1.msra.mxu0 %v1060
    %6271 = vmatprep.mubr.f32.mxu0 %v3972
    %6272 = vmatmul.mubr.f32.gmra.mrb[0].mxu0 %v3970
    %v6273 = vpop.f32.mrb[0].mxu0
    %v6274 = vadd.f32 %v6204, %v6273
    %v6275 = vpop.f32.mrb[0].mxu0
    %6276 = vdwg.mxu0
    %v6277 = vmax.f32 %v6274, 0.0
    %6278 = vst [vmem:[#allocation4] sm:$0x3] %v6277
    // Predicated region
    $region18: #{siamese_forward.1} parent=1 // pred_check
      _
    $region19: #{siamese_forward.1} parent=1 // pred_check_branch
      %6280 = sbr.rel (0) target = $region21
    $region20: #{siamese_forward.1} parent=1 // pred_region
      %s6282 = ssub.s32 32, 32
      %6283 = vsyncadd [#allocation3], %s6282
      %s6285 = sshll.u32 [#allocation2], 4
      %s6286 = int_to_ptr.vmem [resolvable:$true] %s6285
      %6288 = dma.vmem_to_hbm [thread:$0]  %s6286, 32, %s4, [#allocation3]
    $region21: #{siamese_forward.1} parent=1 // pred_fallthru
      _
    // Predicated region
    $region22: #{siamese_forward.1} parent=1 // pred_check
      _
    $region23: #{siamese_forward.1} parent=1 // pred_check_branch
      %6290 = sbr.rel (0) target = $region25
    $region24: #{siamese_forward.1} parent=1 // pred_region
      %s6292 = ssub.s32 32, 32
      %6293 = vsyncadd [#allocation5], %s6292
      %s6295 = sshll.u32 [#allocation4], 4
      %s6296 = int_to_ptr.vmem [resolvable:$true] %s6295
      %6298 = dma.vmem_to_hbm [thread:$0]  %s6296, 32, %s5, [#allocation5]
    $region25: #{siamese_forward.1} parent=1 // pred_fallthru
      _
    // Predicated region
    $region26: #{siamese_forward.1} parent=1 // pred_check
      _
    $region27: #{siamese_forward.1} parent=1 // pred_check_branch
      %6300 = sbr.rel (0) target = $region29
    $region28: #{siamese_forward.1} parent=1 // pred_region
      %6301 = dma.done [#allocation3], 32
    $region29: #{siamese_forward.1} parent=1 // pred_fallthru
      _
    // Predicated region
    $region30: #{siamese_forward.1} parent=1 // pred_check
      _
    $region31: #{siamese_forward.1} parent=1 // pred_check_branch
      %6303 = sbr.rel (0) target = $region33
    $region32: #{siamese_forward.1} parent=1 // pred_region
      %6304 = dma.done [#allocation5], 32
    $region33: #{siamese_forward.1} parent=1 // pred_fallthru
      _
    %6305 = vsyncpa [#allocation3], 1
    %6306 = vsyncpa [#allocation5], 1

</llo_original>
